<compile_context>
chip_gen: v5e
topology: v5e:2x2
jax: 0.10.0
libtpu: 0.0.40
codegen_flags: <defaults>
</compile_context>

<pallas_src>
import functools

import jax
import jax.numpy as jnp
from jax import lax
from jax.experimental import pallas as pl
from jax.experimental.pallas import tpu as pltpu


# --------------------- fused conv + bias + ReLU + pool ---------------------

def _conv_pool_kernel(xe_ref, xo_ref, we_ref, wo_ref, b_ref, o_ref, *,
                      H, Cin, Cout, Wh):
    """One batch sample: o = maxpool_w2(relu(conv3x5(x) + b)).

    xe_ref/xo_ref : (H+2, Cin, Wh+2) even/odd W phases of the padded input.
    we_ref/wo_ref : (9, 2*Cout, Cin) per-tap weights; rows [:Cout] produce the
                    even member of each pooling pair, rows [Cout:] the odd one
                    (tap t = 3*kh + s, s = shift along the half-res W axis).
    b_ref         : (Cout, 1) f32 bias.
    o_ref         : (H, Cout, Wh) pooled output (bf16).
    """
    we = we_ref[...]            # (9, 2*Cout, Cin) bf16
    wo = wo_ref[...]
    bias = b_ref[...]           # (Cout, 1) f32

    def h_body(h, carry):
        acc = jnp.zeros((2 * Cout, Wh), jnp.float32)
        for kh in range(3):
            xe_row = xe_ref[h + kh]          # (Cin, Wh + 2)
            xo_row = xo_ref[h + kh]
            for s in range(3):
                t = 3 * kh + s
                xe_s = xe_row[:, s:s + Wh]   # (Cin, Wh)
                xo_s = xo_row[:, s:s + Wh]
                if Cin == 1:
                    # K=1 contraction: VPU broadcast multiply-add beats the MXU.
                    acc = acc + we[t].astype(jnp.float32) * xe_s.astype(jnp.float32)
                    acc = acc + wo[t].astype(jnp.float32) * xo_s.astype(jnp.float32)
                else:
                    acc = acc + jnp.dot(we[t], xe_s,
                                        preferred_element_type=jnp.float32)
                    acc = acc + jnp.dot(wo[t], xo_s,
                                        preferred_element_type=jnp.float32)
        # max(relu(y_even + b), relu(y_odd + b)) == relu(max(y_even, y_odd) + b)
        pooled = jnp.maximum(acc[:Cout], acc[Cout:]) + bias
        o_ref[h] = jnp.maximum(pooled, 0.0).astype(o_ref.dtype)
        return carry

    lax.fori_loop(0, H, h_body, 0)


def conv_pool(x, we, wo, bias):
    """Fused Conv2d((3,5), pad=(1,2), stride 1) + ReLU + MaxPool2d((1,2)).

    x: (N, H, Cin, W) bf16  ->  (N, H, Cout, W//2) bf16.
    """
    N, H, Cin, W = x.shape
    assert W % 2 == 0
    n_taps, Cout2, Cin2 = we.shape
    assert n_taps == 9 and Cin2 == Cin
    Cout = Cout2 // 2
    Wh = W // 2

    # Zero-pad (H by 1, W by 2) and split W into even/odd phases so that both
    # members of every pooling pair read dense shifted slices inside the kernel.
    xp = jnp.pad(x, ((0, 0), (1, 1), (0, 0), (2, 2)))
    xr = xp.reshape(N, H + 2, Cin, Wh + 2, 2)
    xe = xr[..., 0]                         # positions ..., -2, 0, 2, ...
    xo = xr[..., 1]                         # positions ..., -1, 1, 3, ...

    kernel = functools.partial(_conv_pool_kernel, H=H, Cin=Cin, Cout=Cout, Wh=Wh)
    return pl.pallas_call(
        kernel,
        out_shape=jax.ShapeDtypeStruct((N, H, Cout, Wh), x.dtype),
        grid_spec=pltpu.PrefetchScalarGridSpec(
            num_scalar_prefetch=0,
            grid=(N,),
            in_specs=[
                pl.BlockSpec((None, H + 2, Cin, Wh + 2), lambda n: (n, 0, 0, 0)),
                pl.BlockSpec((None, H + 2, Cin, Wh + 2), lambda n: (n, 0, 0, 0)),
                pl.BlockSpec((9, 2 * Cout, Cin), lambda n: (0, 0, 0)),
                pl.BlockSpec((9, 2 * Cout, Cin), lambda n: (0, 0, 0)),
                pl.BlockSpec((Cout, 1), lambda n: (0, 0)),
            ],
            out_specs=pl.BlockSpec((None, H, Cout, Wh), lambda n: (n, 0, 0, 0)),
        ),
        compiler_params=pltpu.CompilerParams(
            dimension_semantics=("parallel",)),
    )(xe, xo, we, wo, bias)


# -------------------- fused FC1 + ReLU + FC2 (K-tiled) ---------------------

def _fc_head_kernel(x_ref, w1_ref, b1_ref, w2_ref, b2_ref, o_ref, acc_ref):
    k = pl.program_id(0)

    @pl.when(k == 0)
    def _init():
        acc_ref[...] = jnp.zeros_like(acc_ref)

    acc_ref[...] += jnp.dot(x_ref[...], w1_ref[...],
                            preferred_element_type=jnp.float32)

    @pl.when(k == pl.num_programs(0) - 1)
    def _finish():
        hid = jnp.maximum(acc_ref[...] + b1_ref[...], 0.0)       # (M, 64) f32
        out = jnp.dot(hid, w2_ref[...],
                      preferred_element_type=jnp.float32) + b2_ref[...]
        o_ref[...] = out.astype(o_ref.dtype)


def fc_head(feat, w1t, b1, w2t, b2):
    """out = relu(feat @ w1t + b1) @ w2t + b2, tiled over the K axis."""
    M, K = feat.shape
    K2, Hdim = w1t.shape
    assert K == K2
    n_out = w2t.shape[1]
    # VMEM-budget-driven contraction tile: (tk, 64) bf16 block <= 1 MB.
    tk = next((c for c in (8192, 4096, 2048, 1024, 512, 256, 128) if K % c == 0), K)

    return pl.pallas_call(
        _fc_head_kernel,
        out_shape=jax.ShapeDtypeStruct((M, n_out), jnp.float32),
        grid_spec=pltpu.PrefetchScalarGridSpec(
            num_scalar_prefetch=0,
            grid=(K // tk,),
            in_specs=[
                pl.BlockSpec((M, tk), lambda k: (0, k)),
                pl.BlockSpec((tk, Hdim), lambda k: (k, 0)),
                pl.BlockSpec((1, Hdim), lambda k: (0, 0)),
                pl.BlockSpec((Hdim, n_out), lambda k: (0, 0)),
                pl.BlockSpec((1, n_out), lambda k: (0, 0)),
            ],
            out_specs=pl.BlockSpec((M, n_out), lambda k: (0, 0)),
            scratch_shapes=[pltpu.VMEM((M, Hdim), jnp.float32)],
        ),
        compiler_params=pltpu.CompilerParams(
            dimension_semantics=("arbitrary",)),
    )(feat, w1t, b1, w2t, b2)


# --------------------------------- forward ---------------------------------

def eeg_cnn_forward(x_nchw, p):
    """Forward pass of EEG_CNN. Input is NCHW (PyTorch convention)."""
    N, C, H, W = x_nchw.shape
    assert C == 1 and W % 4 == 0
    x = jnp.transpose(x_nchw, (0, 2, 1, 3)).astype(jnp.bfloat16)   # (N, H, 1, W)
    a1 = conv_pool(x, p["we1"], p["wo1"], p["cb1"])                # (N, H, 16, W/2)
    a2 = conv_pool(a1, p["we2"], p["wo2"], p["cb2"])               # (N, H, 32, W/4)
    feat = a2.reshape(N, -1)       # flatten in (h, c, w) order; fc1 weights
    #                                were pre-permuted to match (no transpose).
    return fc_head(feat, p["fc1_wt"], p["fc1_b"], p["fc2_wt"], p["fc2_b"])


# ------------------------------- parameters --------------------------------

def init_torch_params(key, H, W):
    """Deterministic synthetic parameters, PyTorch-shaped, f32."""
    fc_in = 32 * H * (W // 4)
    ks = jax.random.split(key, 8)
    s = 0.05
    return dict(
        w1=s * jax.random.normal(ks[0], (16, 1, 3, 5), jnp.float32),
        b1=s * jax.random.normal(ks[1], (16,), jnp.float32),
        w2=s * jax.random.normal(ks[2], (32, 16, 3, 5), jnp.float32),
        b2=s * jax.random.normal(ks[3], (32,), jnp.float32),
        fc1_w=s * jax.random.normal(ks[4], (64, fc_in), jnp.float32),
        fc1_b=s * jax.random.normal(ks[5], (64,), jnp.float32),
        fc2_w=s * jax.random.normal(ks[6], (2, 64), jnp.float32),
        fc2_b=s * jax.random.normal(ks[7], (2,), jnp.float32),
    )


def _prep_conv_weight(w):
    """torch (Cout, Cin, 3, 5) -> parity-split tap matrices WE, WO (9, 2*Cout, Cin).

    Tap t = 3*kh + s multiplies the even/odd input phase shifted by s; rows
    [:Cout] build the even conv output of each pooling pair, rows [Cout:] the
    odd one (missing kw taps are zero-filled).
    """
    w = jnp.asarray(w, jnp.float32)
    Cout, Cin, KH, _ = w.shape
    zeros = jnp.zeros((Cout, Cin), jnp.float32)
    we_taps, wo_taps = [], []
    for kh in range(KH):
        for s in range(3):
            w_even_from_E = w[:, :, kh, 2 * s]                       # kw = 0,2,4
            w_odd_from_E = w[:, :, kh, 2 * s - 1] if s >= 1 else zeros   # kw = 1,3
            w_even_from_O = w[:, :, kh, 2 * s + 1] if s <= 1 else zeros  # kw = 1,3
            w_odd_from_O = w[:, :, kh, 2 * s]                        # kw = 0,2,4
            we_taps.append(jnp.concatenate([w_even_from_E, w_odd_from_E], axis=0))
            wo_taps.append(jnp.concatenate([w_even_from_O, w_odd_from_O], axis=0))
    return (jnp.stack(we_taps).astype(jnp.bfloat16),
            jnp.stack(wo_taps).astype(jnp.bfloat16))


def prepare_params(tp, H, Wq):
    """One-time (outside jit) weight rearrangement + bf16 casts."""
    we1, wo1 = _prep_conv_weight(tp["w1"])
    we2, wo2 = _prep_conv_weight(tp["w2"])
    C2 = tp["w2"].shape[0]
    nh = tp["fc1_w"].shape[0]
    assert tp["fc1_w"].shape[1] == C2 * H * Wq
    # fc1 consumes features flattened as (c, h, w) in PyTorch; our kernels emit
    # (h, c, w). Permute the weight columns once and pre-transpose to (K, 64).
    w1p = tp["fc1_w"].reshape(nh, C2, H, Wq).transpose(0, 2, 1, 3).reshape(nh, -1)
    return dict(
        we1=we1, wo1=wo1, cb1=tp["b1"].reshape(-1, 1).astype(jnp.float32),
        we2=we2, wo2=wo2, cb2=tp["b2"].reshape(-1, 1).astype(jnp.float32),
        fc1_wt=jnp.asarray(w1p.T, jnp.bfloat16),
        fc1_b=tp["fc1_b"].reshape(1, -1).astype(jnp.float32),
        fc2_wt=tp["fc2_w"].T.astype(jnp.float32),
        fc2_b=tp["fc2_b"].reshape(1, -1).astype(jnp.float32),
    )


# ----------------------------- pure-JAX reference ---------------------------

def reference_forward(x_nchw, tp):
    x = x_nchw.astype(jnp.float32)

    def conv_relu(z, w, b):
        y = lax.conv_general_dilated(
            z, w, window_strides=(1, 1), padding=((1, 1), (2, 2)),
            dimension_numbers=("NCHW", "OIHW", "NCHW"))
        return jax.nn.relu(y + b[None, :, None, None])

    def pool_w2(y):
        n, c, h, w = y.shape
        return jnp.max(y.reshape(n, c, h, w // 2, 2), axis=-1)

    y = pool_w2(conv_relu(x, tp["w1"], tp["b1"]))
    y = pool_w2(conv_relu(y, tp["w2"], tp["b2"]))
    feat = y.reshape(y.shape[0], -1)
    h1 = jax.nn.relu(feat @ tp["fc1_w"].T + tp["fc1_b"])
    return h1 @ tp["fc2_w"].T + tp["fc2_b"]


# ----------------------------------- main -----------------------------------

if __name__ == "__main__":
    # Full-scale module expects (N, 1, 23, 2560); this test uses a small but
    # structurally consistent W=64, so fc1 in_features = 32 * 23 * (64 // 4).
    N, H, W = 2, 23, 64
    key = jax.random.PRNGKey(0)
    kx, kp = jax.random.split(key)
    x = jax.random.normal(kx, (N, 1, H, W), jnp.float32)

    tparams = init_torch_params(kp, H=H, W=W)
    kparams = prepare_params(tparams, H=H, Wq=W // 4)

    fwd = jax.jit(eeg_cnn_forward)
    out = jax.block_until_ready(fwd(x, kparams))
    assert out.shape == (N, 2) and out.dtype == jnp.float32

    ref = jax.block_until_ready(reference_forward(x, tparams))
    err = float(jnp.max(jnp.abs(out - ref)))
    tol = 2e-2 + 5e-2 * float(jnp.max(jnp.abs(ref)))   # loose: bf16 operands
    assert err <= tol, f"mismatch vs reference: max abs err {err} > tol {tol}"
    print("KERNEL_OK")
</pallas_src>

<mosaic_0001>
module attributes {stable_mosaic.version = 11 : i64} {
  func.func @_conv_pool_kernel(%arg0: i32, %arg1: memref<1x25x1x34xbf16, #tpu.memory_space<vmem>>, %arg2: memref<1x25x1x34xbf16, #tpu.memory_space<vmem>>, %arg3: memref<9x32x1xbf16, #tpu.memory_space<vmem>>, %arg4: memref<9x32x1xbf16, #tpu.memory_space<vmem>>, %arg5: memref<16x1xf32, #tpu.memory_space<vmem>>, %arg6: memref<1x23x16x32xbf16, #tpu.memory_space<vmem>>) attributes {dimension_semantics = [#tpu.dimension_semantics<parallel>], iteration_bounds = array<i64: 2>, scalar_prefetch = 0 : i64, scratch_operands = 0 : i64, tpu.core_type = #tpu.core_type<tc>, window_params = [{transform_indices = @transform_0, window_bounds = array<i64: 1, 25, 1, 34>}, {transform_indices = @transform_1, window_bounds = array<i64: 1, 25, 1, 34>}, {pipeline_mode = #tpu.pipeline_mode<synchronous>, transform_indices = @transform_2, window_bounds = array<i64: 9, 32, 1>}, {pipeline_mode = #tpu.pipeline_mode<synchronous>, transform_indices = @transform_3, window_bounds = array<i64: 9, 32, 1>}, {pipeline_mode = #tpu.pipeline_mode<synchronous>, transform_indices = @transform_4, window_bounds = array<i64: 16, 1>}, {transform_indices = @transform_5, window_bounds = array<i64: 1, 23, 16, 32>}]} {
    %c0 = arith.constant 0 : index
    %c0_0 = arith.constant 0 : index
    %c0_1 = arith.constant 0 : index
    %0 = vector.load %arg3[%c0, %c0_0, %c0_1] : memref<9x32x1xbf16, #tpu.memory_space<vmem>>, vector<9x32x1xbf16>
    %c0_2 = arith.constant 0 : index
    %c0_3 = arith.constant 0 : index
    %c0_4 = arith.constant 0 : index
    %1 = vector.load %arg4[%c0_2, %c0_3, %c0_4] : memref<9x32x1xbf16, #tpu.memory_space<vmem>>, vector<9x32x1xbf16>
    %c0_5 = arith.constant 0 : index
    %c0_6 = arith.constant 0 : index
    %2 = vector.load %arg5[%c0_5, %c0_6] : memref<16x1xf32, #tpu.memory_space<vmem>>, vector<16x1xf32>
    %c0_i32 = arith.constant 0 : i32
    %c23_i32 = arith.constant 23 : i32
    %3 = arith.addi %c0_i32, %c23_i32 : i32
    %c1_i32 = arith.constant 1 : i32
    scf.for %arg7 = %c0_i32 to %3 step %c1_i32  : i32 {
      %cst = arith.constant 0.000000e+00 : f32
      %4 = vector.broadcast %cst : f32 to vector<32x32xf32>
      %c0_i32_8 = arith.constant 0 : i32
      %5 = arith.addi %arg7, %c0_i32_8 : i32
      %c0_9 = arith.constant 0 : index
      %6 = arith.index_cast %5 : i32 to index
      %c0_10 = arith.constant 0 : index
      %c0_11 = arith.constant 0 : index
      %7 = vector.load %arg1[%c0_9, %6, %c0_10, %c0_11] : memref<1x25x1x34xbf16, #tpu.memory_space<vmem>>, vector<1x1x1x34xbf16>
      %8 = vector.shape_cast %7 : vector<1x1x1x34xbf16> to vector<1x34xbf16>
      %c0_i32_12 = arith.constant 0 : i32
      %9 = arith.addi %arg7, %c0_i32_12 : i32
      %c0_13 = arith.constant 0 : index
      %10 = arith.index_cast %9 : i32 to index
      %c0_14 = arith.constant 0 : index
      %c0_15 = arith.constant 0 : index
      %11 = vector.load %arg2[%c0_13, %10, %c0_14, %c0_15] : memref<1x25x1x34xbf16, #tpu.memory_space<vmem>>, vector<1x1x1x34xbf16>
      %12 = vector.shape_cast %11 : vector<1x1x1x34xbf16> to vector<1x34xbf16>
      %13 = vector.extract_strided_slice %8 {offsets = [0, 0], sizes = [1, 32], strides = [1, 1]} : vector<1x34xbf16> to vector<1x32xbf16>
      %14 = vector.extract_strided_slice %12 {offsets = [0, 0], sizes = [1, 32], strides = [1, 1]} : vector<1x34xbf16> to vector<1x32xbf16>
      %15 = vector.extract_strided_slice %0 {offsets = [0, 0, 0], sizes = [1, 32, 1], strides = [1, 1, 1]} : vector<9x32x1xbf16> to vector<1x32x1xbf16>
      %16 = vector.shape_cast %15 : vector<1x32x1xbf16> to vector<32x1xbf16>
      %17 = arith.extf %16 : vector<32x1xbf16> to vector<32x1xf32>
      %18 = arith.extf %13 : vector<1x32xbf16> to vector<1x32xf32>
      %19 = vector.broadcast %17 : vector<32x1xf32> to vector<32x32xf32>
      %20 = vector.broadcast %18 : vector<1x32xf32> to vector<32x32xf32>
      %21 = arith.mulf %19, %20 : vector<32x32xf32>
      %22 = arith.addf %4, %21 : vector<32x32xf32>
      %23 = vector.extract_strided_slice %1 {offsets = [0, 0, 0], sizes = [1, 32, 1], strides = [1, 1, 1]} : vector<9x32x1xbf16> to vector<1x32x1xbf16>
      %24 = vector.shape_cast %23 : vector<1x32x1xbf16> to vector<32x1xbf16>
      %25 = arith.extf %24 : vector<32x1xbf16> to vector<32x1xf32>
      %26 = arith.extf %14 : vector<1x32xbf16> to vector<1x32xf32>
      %27 = vector.broadcast %25 : vector<32x1xf32> to vector<32x32xf32>
      %28 = vector.broadcast %26 : vector<1x32xf32> to vector<32x32xf32>
      %29 = arith.mulf %27, %28 : vector<32x32xf32>
      %30 = arith.addf %22, %29 : vector<32x32xf32>
      %31 = vector.extract_strided_slice %8 {offsets = [0, 1], sizes = [1, 32], strides = [1, 1]} : vector<1x34xbf16> to vector<1x32xbf16>
      %32 = vector.extract_strided_slice %12 {offsets = [0, 1], sizes = [1, 32], strides = [1, 1]} : vector<1x34xbf16> to vector<1x32xbf16>
      %33 = vector.extract_strided_slice %0 {offsets = [1, 0, 0], sizes = [1, 32, 1], strides = [1, 1, 1]} : vector<9x32x1xbf16> to vector<1x32x1xbf16>
      %34 = vector.shape_cast %33 : vector<1x32x1xbf16> to vector<32x1xbf16>
      %35 = arith.extf %34 : vector<32x1xbf16> to vector<32x1xf32>
      %36 = arith.extf %31 : vector<1x32xbf16> to vector<1x32xf32>
      %37 = vector.broadcast %35 : vector<32x1xf32> to vector<32x32xf32>
      %38 = vector.broadcast %36 : vector<1x32xf32> to vector<32x32xf32>
      %39 = arith.mulf %37, %38 : vector<32x32xf32>
      %40 = arith.addf %30, %39 : vector<32x32xf32>
      %41 = vector.extract_strided_slice %1 {offsets = [1, 0, 0], sizes = [1, 32, 1], strides = [1, 1, 1]} : vector<9x32x1xbf16> to vector<1x32x1xbf16>
      %42 = vector.shape_cast %41 : vector<1x32x1xbf16> to vector<32x1xbf16>
      %43 = arith.extf %42 : vector<32x1xbf16> to vector<32x1xf32>
      %44 = arith.extf %32 : vector<1x32xbf16> to vector<1x32xf32>
      %45 = vector.broadcast %43 : vector<32x1xf32> to vector<32x32xf32>
      %46 = vector.broadcast %44 : vector<1x32xf32> to vector<32x32xf32>
      %47 = arith.mulf %45, %46 : vector<32x32xf32>
      %48 = arith.addf %40, %47 : vector<32x32xf32>
      %49 = vector.extract_strided_slice %8 {offsets = [0, 2], sizes = [1, 32], strides = [1, 1]} : vector<1x34xbf16> to vector<1x32xbf16>
      %50 = vector.extract_strided_slice %12 {offsets = [0, 2], sizes = [1, 32], strides = [1, 1]} : vector<1x34xbf16> to vector<1x32xbf16>
      %51 = vector.extract_strided_slice %0 {offsets = [2, 0, 0], sizes = [1, 32, 1], strides = [1, 1, 1]} : vector<9x32x1xbf16> to vector<1x32x1xbf16>
      %52 = vector.shape_cast %51 : vector<1x32x1xbf16> to vector<32x1xbf16>
      %53 = arith.extf %52 : vector<32x1xbf16> to vector<32x1xf32>
      %54 = arith.extf %49 : vector<1x32xbf16> to vector<1x32xf32>
      %55 = vector.broadcast %53 : vector<32x1xf32> to vector<32x32xf32>
      %56 = vector.broadcast %54 : vector<1x32xf32> to vector<32x32xf32>
      %57 = arith.mulf %55, %56 : vector<32x32xf32>
      %58 = arith.addf %48, %57 : vector<32x32xf32>
      %59 = vector.extract_strided_slice %1 {offsets = [2, 0, 0], sizes = [1, 32, 1], strides = [1, 1, 1]} : vector<9x32x1xbf16> to vector<1x32x1xbf16>
      %60 = vector.shape_cast %59 : vector<1x32x1xbf16> to vector<32x1xbf16>
      %61 = arith.extf %60 : vector<32x1xbf16> to vector<32x1xf32>
      %62 = arith.extf %50 : vector<1x32xbf16> to vector<1x32xf32>
      %63 = vector.broadcast %61 : vector<32x1xf32> to vector<32x32xf32>
      %64 = vector.broadcast %62 : vector<1x32xf32> to vector<32x32xf32>
      %65 = arith.mulf %63, %64 : vector<32x32xf32>
      %66 = arith.addf %58, %65 : vector<32x32xf32>
      %c1_i32_16 = arith.constant 1 : i32
      %67 = arith.addi %arg7, %c1_i32_16 : i32
      %c0_17 = arith.constant 0 : index
      %68 = arith.index_cast %67 : i32 to index
      %c0_18 = arith.constant 0 : index
      %c0_19 = arith.constant 0 : index
      %69 = vector.load %arg1[%c0_17, %68, %c0_18, %c0_19] : memref<1x25x1x34xbf16, #tpu.memory_space<vmem>>, vector<1x1x1x34xbf16>
      %70 = vector.shape_cast %69 : vector<1x1x1x34xbf16> to vector<1x34xbf16>
      %c1_i32_20 = arith.constant 1 : i32
      %71 = arith.addi %arg7, %c1_i32_20 : i32
      %c0_21 = arith.constant 0 : index
      %72 = arith.index_cast %71 : i32 to index
      %c0_22 = arith.constant 0 : index
      %c0_23 = arith.constant 0 : index
      %73 = vector.load %arg2[%c0_21, %72, %c0_22, %c0_23] : memref<1x25x1x34xbf16, #tpu.memory_space<vmem>>, vector<1x1x1x34xbf16>
      %74 = vector.shape_cast %73 : vector<1x1x1x34xbf16> to vector<1x34xbf16>
      %75 = vector.extract_strided_slice %70 {offsets = [0, 0], sizes = [1, 32], strides = [1, 1]} : vector<1x34xbf16> to vector<1x32xbf16>
      %76 = vector.extract_strided_slice %74 {offsets = [0, 0], sizes = [1, 32], strides = [1, 1]} : vector<1x34xbf16> to vector<1x32xbf16>
      %77 = vector.extract_strided_slice %0 {offsets = [3, 0, 0], sizes = [1, 32, 1], strides = [1, 1, 1]} : vector<9x32x1xbf16> to vector<1x32x1xbf16>
      %78 = vector.shape_cast %77 : vector<1x32x1xbf16> to vector<32x1xbf16>
      %79 = arith.extf %78 : vector<32x1xbf16> to vector<32x1xf32>
      %80 = arith.extf %75 : vector<1x32xbf16> to vector<1x32xf32>
      %81 = vector.broadcast %79 : vector<32x1xf32> to vector<32x32xf32>
      %82 = vector.broadcast %80 : vector<1x32xf32> to vector<32x32xf32>
      %83 = arith.mulf %81, %82 : vector<32x32xf32>
      %84 = arith.addf %66, %83 : vector<32x32xf32>
      %85 = vector.extract_strided_slice %1 {offsets = [3, 0, 0], sizes = [1, 32, 1], strides = [1, 1, 1]} : vector<9x32x1xbf16> to vector<1x32x1xbf16>
      %86 = vector.shape_cast %85 : vector<1x32x1xbf16> to vector<32x1xbf16>
      %87 = arith.extf %86 : vector<32x1xbf16> to vector<32x1xf32>
      %88 = arith.extf %76 : vector<1x32xbf16> to vector<1x32xf32>
      %89 = vector.broadcast %87 : vector<32x1xf32> to vector<32x32xf32>
      %90 = vector.broadcast %88 : vector<1x32xf32> to vector<32x32xf32>
      %91 = arith.mulf %89, %90 : vector<32x32xf32>
      %92 = arith.addf %84, %91 : vector<32x32xf32>
      %93 = vector.extract_strided_slice %70 {offsets = [0, 1], sizes = [1, 32], strides = [1, 1]} : vector<1x34xbf16> to vector<1x32xbf16>
      %94 = vector.extract_strided_slice %74 {offsets = [0, 1], sizes = [1, 32], strides = [1, 1]} : vector<1x34xbf16> to vector<1x32xbf16>
      %95 = vector.extract_strided_slice %0 {offsets = [4, 0, 0], sizes = [1, 32, 1], strides = [1, 1, 1]} : vector<9x32x1xbf16> to vector<1x32x1xbf16>
      %96 = vector.shape_cast %95 : vector<1x32x1xbf16> to vector<32x1xbf16>
      %97 = arith.extf %96 : vector<32x1xbf16> to vector<32x1xf32>
      %98 = arith.extf %93 : vector<1x32xbf16> to vector<1x32xf32>
      %99 = vector.broadcast %97 : vector<32x1xf32> to vector<32x32xf32>
      %100 = vector.broadcast %98 : vector<1x32xf32> to vector<32x32xf32>
      %101 = arith.mulf %99, %100 : vector<32x32xf32>
      %102 = arith.addf %92, %101 : vector<32x32xf32>
      %103 = vector.extract_strided_slice %1 {offsets = [4, 0, 0], sizes = [1, 32, 1], strides = [1, 1, 1]} : vector<9x32x1xbf16> to vector<1x32x1xbf16>
      %104 = vector.shape_cast %103 : vector<1x32x1xbf16> to vector<32x1xbf16>
      %105 = arith.extf %104 : vector<32x1xbf16> to vector<32x1xf32>
      %106 = arith.extf %94 : vector<1x32xbf16> to vector<1x32xf32>
      %107 = vector.broadcast %105 : vector<32x1xf32> to vector<32x32xf32>
      %108 = vector.broadcast %106 : vector<1x32xf32> to vector<32x32xf32>
      %109 = arith.mulf %107, %108 : vector<32x32xf32>
      %110 = arith.addf %102, %109 : vector<32x32xf32>
      %111 = vector.extract_strided_slice %70 {offsets = [0, 2], sizes = [1, 32], strides = [1, 1]} : vector<1x34xbf16> to vector<1x32xbf16>
      %112 = vector.extract_strided_slice %74 {offsets = [0, 2], sizes = [1, 32], strides = [1, 1]} : vector<1x34xbf16> to vector<1x32xbf16>
      %113 = vector.extract_strided_slice %0 {offsets = [5, 0, 0], sizes = [1, 32, 1], strides = [1, 1, 1]} : vector<9x32x1xbf16> to vector<1x32x1xbf16>
      %114 = vector.shape_cast %113 : vector<1x32x1xbf16> to vector<32x1xbf16>
      %115 = arith.extf %114 : vector<32x1xbf16> to vector<32x1xf32>
      %116 = arith.extf %111 : vector<1x32xbf16> to vector<1x32xf32>
      %117 = vector.broadcast %115 : vector<32x1xf32> to vector<32x32xf32>
      %118 = vector.broadcast %116 : vector<1x32xf32> to vector<32x32xf32>
      %119 = arith.mulf %117, %118 : vector<32x32xf32>
      %120 = arith.addf %110, %119 : vector<32x32xf32>
      %121 = vector.extract_strided_slice %1 {offsets = [5, 0, 0], sizes = [1, 32, 1], strides = [1, 1, 1]} : vector<9x32x1xbf16> to vector<1x32x1xbf16>
      %122 = vector.shape_cast %121 : vector<1x32x1xbf16> to vector<32x1xbf16>
      %123 = arith.extf %122 : vector<32x1xbf16> to vector<32x1xf32>
      %124 = arith.extf %112 : vector<1x32xbf16> to vector<1x32xf32>
      %125 = vector.broadcast %123 : vector<32x1xf32> to vector<32x32xf32>
      %126 = vector.broadcast %124 : vector<1x32xf32> to vector<32x32xf32>
      %127 = arith.mulf %125, %126 : vector<32x32xf32>
      %128 = arith.addf %120, %127 : vector<32x32xf32>
      %c2_i32 = arith.constant 2 : i32
      %129 = arith.addi %arg7, %c2_i32 : i32
      %c0_24 = arith.constant 0 : index
      %130 = arith.index_cast %129 : i32 to index
      %c0_25 = arith.constant 0 : index
      %c0_26 = arith.constant 0 : index
      %131 = vector.load %arg1[%c0_24, %130, %c0_25, %c0_26] : memref<1x25x1x34xbf16, #tpu.memory_space<vmem>>, vector<1x1x1x34xbf16>
      %132 = vector.shape_cast %131 : vector<1x1x1x34xbf16> to vector<1x34xbf16>
      %c2_i32_27 = arith.constant 2 : i32
      %133 = arith.addi %arg7, %c2_i32_27 : i32
      %c0_28 = arith.constant 0 : index
      %134 = arith.index_cast %133 : i32 to index
      %c0_29 = arith.constant 0 : index
      %c0_30 = arith.constant 0 : index
      %135 = vector.load %arg2[%c0_28, %134, %c0_29, %c0_30] : memref<1x25x1x34xbf16, #tpu.memory_space<vmem>>, vector<1x1x1x34xbf16>
      %136 = vector.shape_cast %135 : vector<1x1x1x34xbf16> to vector<1x34xbf16>
      %137 = vector.extract_strided_slice %132 {offsets = [0, 0], sizes = [1, 32], strides = [1, 1]} : vector<1x34xbf16> to vector<1x32xbf16>
      %138 = vector.extract_strided_slice %136 {offsets = [0, 0], sizes = [1, 32], strides = [1, 1]} : vector<1x34xbf16> to vector<1x32xbf16>
      %139 = vector.extract_strided_slice %0 {offsets = [6, 0, 0], sizes = [1, 32, 1], strides = [1, 1, 1]} : vector<9x32x1xbf16> to vector<1x32x1xbf16>
      %140 = vector.shape_cast %139 : vector<1x32x1xbf16> to vector<32x1xbf16>
      %141 = arith.extf %140 : vector<32x1xbf16> to vector<32x1xf32>
      %142 = arith.extf %137 : vector<1x32xbf16> to vector<1x32xf32>
      %143 = vector.broadcast %141 : vector<32x1xf32> to vector<32x32xf32>
      %144 = vector.broadcast %142 : vector<1x32xf32> to vector<32x32xf32>
      %145 = arith.mulf %143, %144 : vector<32x32xf32>
      %146 = arith.addf %128, %145 : vector<32x32xf32>
      %147 = vector.extract_strided_slice %1 {offsets = [6, 0, 0], sizes = [1, 32, 1], strides = [1, 1, 1]} : vector<9x32x1xbf16> to vector<1x32x1xbf16>
      %148 = vector.shape_cast %147 : vector<1x32x1xbf16> to vector<32x1xbf16>
      %149 = arith.extf %148 : vector<32x1xbf16> to vector<32x1xf32>
      %150 = arith.extf %138 : vector<1x32xbf16> to vector<1x32xf32>
      %151 = vector.broadcast %149 : vector<32x1xf32> to vector<32x32xf32>
      %152 = vector.broadcast %150 : vector<1x32xf32> to vector<32x32xf32>
      %153 = arith.mulf %151, %152 : vector<32x32xf32>
      %154 = arith.addf %146, %153 : vector<32x32xf32>
      %155 = vector.extract_strided_slice %132 {offsets = [0, 1], sizes = [1, 32], strides = [1, 1]} : vector<1x34xbf16> to vector<1x32xbf16>
      %156 = vector.extract_strided_slice %136 {offsets = [0, 1], sizes = [1, 32], strides = [1, 1]} : vector<1x34xbf16> to vector<1x32xbf16>
      %157 = vector.extract_strided_slice %0 {offsets = [7, 0, 0], sizes = [1, 32, 1], strides = [1, 1, 1]} : vector<9x32x1xbf16> to vector<1x32x1xbf16>
      %158 = vector.shape_cast %157 : vector<1x32x1xbf16> to vector<32x1xbf16>
      %159 = arith.extf %158 : vector<32x1xbf16> to vector<32x1xf32>
      %160 = arith.extf %155 : vector<1x32xbf16> to vector<1x32xf32>
      %161 = vector.broadcast %159 : vector<32x1xf32> to vector<32x32xf32>
      %162 = vector.broadcast %160 : vector<1x32xf32> to vector<32x32xf32>
      %163 = arith.mulf %161, %162 : vector<32x32xf32>
      %164 = arith.addf %154, %163 : vector<32x32xf32>
      %165 = vector.extract_strided_slice %1 {offsets = [7, 0, 0], sizes = [1, 32, 1], strides = [1, 1, 1]} : vector<9x32x1xbf16> to vector<1x32x1xbf16>
      %166 = vector.shape_cast %165 : vector<1x32x1xbf16> to vector<32x1xbf16>
      %167 = arith.extf %166 : vector<32x1xbf16> to vector<32x1xf32>
      %168 = arith.extf %156 : vector<1x32xbf16> to vector<1x32xf32>
      %169 = vector.broadcast %167 : vector<32x1xf32> to vector<32x32xf32>
      %170 = vector.broadcast %168 : vector<1x32xf32> to vector<32x32xf32>
      %171 = arith.mulf %169, %170 : vector<32x32xf32>
      %172 = arith.addf %164, %171 : vector<32x32xf32>
      %173 = vector.extract_strided_slice %132 {offsets = [0, 2], sizes = [1, 32], strides = [1, 1]} : vector<1x34xbf16> to vector<1x32xbf16>
      %174 = vector.extract_strided_slice %136 {offsets = [0, 2], sizes = [1, 32], strides = [1, 1]} : vector<1x34xbf16> to vector<1x32xbf16>
      %175 = vector.extract_strided_slice %0 {offsets = [8, 0, 0], sizes = [1, 32, 1], strides = [1, 1, 1]} : vector<9x32x1xbf16> to vector<1x32x1xbf16>
      %176 = vector.shape_cast %175 : vector<1x32x1xbf16> to vector<32x1xbf16>
      %177 = arith.extf %176 : vector<32x1xbf16> to vector<32x1xf32>
      %178 = arith.extf %173 : vector<1x32xbf16> to vector<1x32xf32>
      %179 = vector.broadcast %177 : vector<32x1xf32> to vector<32x32xf32>
      %180 = vector.broadcast %178 : vector<1x32xf32> to vector<32x32xf32>
      %181 = arith.mulf %179, %180 : vector<32x32xf32>
      %182 = arith.addf %172, %181 : vector<32x32xf32>
      %183 = vector.extract_strided_slice %1 {offsets = [8, 0, 0], sizes = [1, 32, 1], strides = [1, 1, 1]} : vector<9x32x1xbf16> to vector<1x32x1xbf16>
      %184 = vector.shape_cast %183 : vector<1x32x1xbf16> to vector<32x1xbf16>
      %185 = arith.extf %184 : vector<32x1xbf16> to vector<32x1xf32>
      %186 = arith.extf %174 : vector<1x32xbf16> to vector<1x32xf32>
      %187 = vector.broadcast %185 : vector<32x1xf32> to vector<32x32xf32>
      %188 = vector.broadcast %186 : vector<1x32xf32> to vector<32x32xf32>
      %189 = arith.mulf %187, %188 : vector<32x32xf32>
      %190 = arith.addf %182, %189 : vector<32x32xf32>
      %191 = vector.extract_strided_slice %190 {offsets = [0, 0], sizes = [16, 32], strides = [1, 1]} : vector<32x32xf32> to vector<16x32xf32>
      %192 = vector.extract_strided_slice %190 {offsets = [16, 0], sizes = [16, 32], strides = [1, 1]} : vector<32x32xf32> to vector<16x32xf32>
      %193 = arith.maximumf %191, %192 : vector<16x32xf32>
      %194 = vector.broadcast %2 : vector<16x1xf32> to vector<16x32xf32>
      %195 = arith.addf %193, %194 : vector<16x32xf32>
      %cst_31 = arith.constant 0.000000e+00 : f32
      %196 = vector.broadcast %cst_31 : f32 to vector<16x32xf32>
      %197 = arith.maximumf %195, %196 : vector<16x32xf32>
      %198 = arith.truncf %197 : vector<16x32xf32> to vector<16x32xbf16>
      %c0_32 = arith.constant 0 : index
      %199 = arith.index_cast %arg7 : i32 to index
      %c0_33 = arith.constant 0 : index
      %c0_34 = arith.constant 0 : index
      %200 = vector.load %arg6[%c0_32, %199, %c0_33, %c0_34] : memref<1x23x16x32xbf16, #tpu.memory_space<vmem>>, vector<1x1x16x32xbf16>
      %201 = vector.shape_cast %200 : vector<1x1x16x32xbf16> to vector<16x32xbf16>
      %202 = vector.shape_cast %198 : vector<16x32xbf16> to vector<1x1x16x32xbf16>
      tpu.vector_store %arg6[%c0_32, %199, %c0_33, %c0_34], %202 {strides = array<i32>} : memref<1x23x16x32xbf16, #tpu.memory_space<vmem>>, vector<1x1x16x32xbf16>,
    }
    %c23_i32_7 = arith.constant 23 : i32
    return
  }
  func.func @transform_0(%arg0: i32) -> (i32, i32, i32, i32) {
    %c0_i32 = arith.constant 0 : i32
    %c0_i32_0 = arith.constant 0 : i32
    %c0_i32_1 = arith.constant 0 : i32
    %c0_i32_2 = arith.constant 0 : i32
    return %arg0, %c0_i32, %c0_i32_0, %c0_i32_1 : i32, i32, i32, i32
  }
  func.func @transform_1(%arg0: i32) -> (i32, i32, i32, i32) {
    %c0_i32 = arith.constant 0 : i32
    %c0_i32_0 = arith.constant 0 : i32
    %c0_i32_1 = arith.constant 0 : i32
    %c0_i32_2 = arith.constant 0 : i32
    return %arg0, %c0_i32, %c0_i32_0, %c0_i32_1 : i32, i32, i32, i32
  }
  func.func @transform_2(%arg0: i32) -> (i32, i32, i32) {
    %c0_i32 = arith.constant 0 : i32
    %c0_i32_0 = arith.constant 0 : i32
    %c0_i32_1 = arith.constant 0 : i32
    %c0_i32_2 = arith.constant 0 : i32
    return %c0_i32, %c0_i32_0, %c0_i32_1 : i32, i32, i32
  }
  func.func @transform_3(%arg0: i32) -> (i32, i32, i32) {
    %c0_i32 = arith.constant 0 : i32
    %c0_i32_0 = arith.constant 0 : i32
    %c0_i32_1 = arith.constant 0 : i32
    %c0_i32_2 = arith.constant 0 : i32
    return %c0_i32, %c0_i32_0, %c0_i32_1 : i32, i32, i32
  }
  func.func @transform_4(%arg0: i32) -> (i32, i32) {
    %c0_i32 = arith.constant 0 : i32
    %c0_i32_0 = arith.constant 0 : i32
    %c0_i32_1 = arith.constant 0 : i32
    return %c0_i32, %c0_i32_0 : i32, i32
  }
  func.func @transform_5(%arg0: i32) -> (i32, i32, i32, i32) {
    %c0_i32 = arith.constant 0 : i32
    %c0_i32_0 = arith.constant 0 : i32
    %c0_i32_1 = arith.constant 0 : i32
    %c0_i32_2 = arith.constant 0 : i32
    return %arg0, %c0_i32, %c0_i32_0, %c0_i32_1 : i32, i32, i32, i32
  }
}

module attributes {stable_mosaic.version = 11 : i64} {
  func.func @_conv_pool_kernel(%arg0: i32, %arg1: memref<1x25x16x18xbf16, #tpu.memory_space<vmem>>, %arg2: memref<1x25x16x18xbf16, #tpu.memory_space<vmem>>, %arg3: memref<9x64x16xbf16, #tpu.memory_space<vmem>>, %arg4: memref<9x64x16xbf16, #tpu.memory_space<vmem>>, %arg5: memref<32x1xf32, #tpu.memory_space<vmem>>, %arg6: memref<1x23x32x16xbf16, #tpu.memory_space<vmem>>) attributes {dimension_semantics = [#tpu.dimension_semantics<parallel>], iteration_bounds = array<i64: 2>, scalar_prefetch = 0 : i64, scratch_operands = 0 : i64, tpu.core_type = #tpu.core_type<tc>, window_params = [{transform_indices = @transform_0, window_bounds = array<i64: 1, 25, 16, 18>}, {transform_indices = @transform_1, window_bounds = array<i64: 1, 25, 16, 18>}, {pipeline_mode = #tpu.pipeline_mode<synchronous>, transform_indices = @transform_2, window_bounds = array<i64: 9, 64, 16>}, {pipeline_mode = #tpu.pipeline_mode<synchronous>, transform_indices = @transform_3, window_bounds = array<i64: 9, 64, 16>}, {pipeline_mode = #tpu.pipeline_mode<synchronous>, transform_indices = @transform_4, window_bounds = array<i64: 32, 1>}, {transform_indices = @transform_5, window_bounds = array<i64: 1, 23, 32, 16>}]} {
    %c0 = arith.constant 0 : index
    %c0_0 = arith.constant 0 : index
    %c0_1 = arith.constant 0 : index
    %0 = vector.load %arg3[%c0, %c0_0, %c0_1] : memref<9x64x16xbf16, #tpu.memory_space<vmem>>, vector<9x64x16xbf16>
    %c0_2 = arith.constant 0 : index
    %c0_3 = arith.constant 0 : index
    %c0_4 = arith.constant 0 : index
    %1 = vector.load %arg4[%c0_2, %c0_3, %c0_4] : memref<9x64x16xbf16, #tpu.memory_space<vmem>>, vector<9x64x16xbf16>
    %c0_5 = arith.constant 0 : index
    %c0_6 = arith.constant 0 : index
    %2 = vector.load %arg5[%c0_5, %c0_6] : memref<32x1xf32, #tpu.memory_space<vmem>>, vector<32x1xf32>
    %c0_i32 = arith.constant 0 : i32
    %c23_i32 = arith.constant 23 : i32
    %3 = arith.addi %c0_i32, %c23_i32 : i32
    %c1_i32 = arith.constant 1 : i32
    scf.for %arg7 = %c0_i32 to %3 step %c1_i32  : i32 {
      %cst = arith.constant 0.000000e+00 : f32
      %4 = vector.broadcast %cst : f32 to vector<64x16xf32>
      %c0_i32_8 = arith.constant 0 : i32
      %5 = arith.addi %arg7, %c0_i32_8 : i32
      %c0_9 = arith.constant 0 : index
      %6 = arith.index_cast %5 : i32 to index
      %c0_10 = arith.constant 0 : index
      %c0_11 = arith.constant 0 : index
      %7 = vector.load %arg1[%c0_9, %6, %c0_10, %c0_11] : memref<1x25x16x18xbf16, #tpu.memory_space<vmem>>, vector<1x1x16x18xbf16>
      %8 = vector.shape_cast %7 : vector<1x1x16x18xbf16> to vector<16x18xbf16>
      %c0_i32_12 = arith.constant 0 : i32
      %9 = arith.addi %arg7, %c0_i32_12 : i32
      %c0_13 = arith.constant 0 : index
      %10 = arith.index_cast %9 : i32 to index
      %c0_14 = arith.constant 0 : index
      %c0_15 = arith.constant 0 : index
      %11 = vector.load %arg2[%c0_13, %10, %c0_14, %c0_15] : memref<1x25x16x18xbf16, #tpu.memory_space<vmem>>, vector<1x1x16x18xbf16>
      %12 = vector.shape_cast %11 : vector<1x1x16x18xbf16> to vector<16x18xbf16>
      %13 = vector.extract_strided_slice %8 {offsets = [0, 0], sizes = [16, 16], strides = [1, 1]} : vector<16x18xbf16> to vector<16x16xbf16>
      %14 = vector.extract_strided_slice %12 {offsets = [0, 0], sizes = [16, 16], strides = [1, 1]} : vector<16x18xbf16> to vector<16x16xbf16>
      %15 = vector.extract_strided_slice %0 {offsets = [0, 0, 0], sizes = [1, 64, 16], strides = [1, 1, 1]} : vector<9x64x16xbf16> to vector<1x64x16xbf16>
      %16 = vector.shape_cast %15 : vector<1x64x16xbf16> to vector<64x16xbf16>
      %cst_16 = arith.constant dense<0.000000e+00> : vector<64x16xf32>
      %17 = tpu.matmul %16, %13, %cst_16 {dimension_numbers = #tpu.dot_dimension_numbers<[1], [0], [0], [1], [0, 0, 1, 1], [], []>} : vector<64x16xbf16>, vector<16x16xbf16>, vector<64x16xf32> -> vector<64x16xf32>
      %18 = arith.addf %4, %17 : vector<64x16xf32>
      %19 = vector.extract_strided_slice %1 {offsets = [0, 0, 0], sizes = [1, 64, 16], strides = [1, 1, 1]} : vector<9x64x16xbf16> to vector<1x64x16xbf16>
      %20 = vector.shape_cast %19 : vector<1x64x16xbf16> to vector<64x16xbf16>
      %cst_17 = arith.constant dense<0.000000e+00> : vector<64x16xf32>
      %21 = tpu.matmul %20, %14, %cst_17 {dimension_numbers = #tpu.dot_dimension_numbers<[1], [0], [0], [1], [0, 0, 1, 1], [], []>} : vector<64x16xbf16>, vector<16x16xbf16>, vector<64x16xf32> -> vector<64x16xf32>
      %22 = arith.addf %18, %21 : vector<64x16xf32>
      %23 = vector.extract_strided_slice %8 {offsets = [0, 1], sizes = [16, 16], strides = [1, 1]} : vector<16x18xbf16> to vector<16x16xbf16>
      %24 = vector.extract_strided_slice %12 {offsets = [0, 1], sizes = [16, 16], strides = [1, 1]} : vector<16x18xbf16> to vector<16x16xbf16>
      %25 = vector.extract_strided_slice %0 {offsets = [1, 0, 0], sizes = [1, 64, 16], strides = [1, 1, 1]} : vector<9x64x16xbf16> to vector<1x64x16xbf16>
      %26 = vector.shape_cast %25 : vector<1x64x16xbf16> to vector<64x16xbf16>
      %cst_18 = arith.constant dense<0.000000e+00> : vector<64x16xf32>
      %27 = tpu.matmul %26, %23, %cst_18 {dimension_numbers = #tpu.dot_dimension_numbers<[1], [0], [0], [1], [0, 0, 1, 1], [], []>} : vector<64x16xbf16>, vector<16x16xbf16>, vector<64x16xf32> -> vector<64x16xf32>
      %28 = arith.addf %22, %27 : vector<64x16xf32>
      %29 = vector.extract_strided_slice %1 {offsets = [1, 0, 0], sizes = [1, 64, 16], strides = [1, 1, 1]} : vector<9x64x16xbf16> to vector<1x64x16xbf16>
      %30 = vector.shape_cast %29 : vector<1x64x16xbf16> to vector<64x16xbf16>
      %cst_19 = arith.constant dense<0.000000e+00> : vector<64x16xf32>
      %31 = tpu.matmul %30, %24, %cst_19 {dimension_numbers = #tpu.dot_dimension_numbers<[1], [0], [0], [1], [0, 0, 1, 1], [], []>} : vector<64x16xbf16>, vector<16x16xbf16>, vector<64x16xf32> -> vector<64x16xf32>
      %32 = arith.addf %28, %31 : vector<64x16xf32>
      %33 = vector.extract_strided_slice %8 {offsets = [0, 2], sizes = [16, 16], strides = [1, 1]} : vector<16x18xbf16> to vector<16x16xbf16>
      %34 = vector.extract_strided_slice %12 {offsets = [0, 2], sizes = [16, 16], strides = [1, 1]} : vector<16x18xbf16> to vector<16x16xbf16>
      %35 = vector.extract_strided_slice %0 {offsets = [2, 0, 0], sizes = [1, 64, 16], strides = [1, 1, 1]} : vector<9x64x16xbf16> to vector<1x64x16xbf16>
      %36 = vector.shape_cast %35 : vector<1x64x16xbf16> to vector<64x16xbf16>
      %cst_20 = arith.constant dense<0.000000e+00> : vector<64x16xf32>
      %37 = tpu.matmul %36, %33, %cst_20 {dimension_numbers = #tpu.dot_dimension_numbers<[1], [0], [0], [1], [0, 0, 1, 1], [], []>} : vector<64x16xbf16>, vector<16x16xbf16>, vector<64x16xf32> -> vector<64x16xf32>
      %38 = arith.addf %32, %37 : vector<64x16xf32>
      %39 = vector.extract_strided_slice %1 {offsets = [2, 0, 0], sizes = [1, 64, 16], strides = [1, 1, 1]} : vector<9x64x16xbf16> to vector<1x64x16xbf16>
      %40 = vector.shape_cast %39 : vector<1x64x16xbf16> to vector<64x16xbf16>
      %cst_21 = arith.constant dense<0.000000e+00> : vector<64x16xf32>
      %41 = tpu.matmul %40, %34, %cst_21 {dimension_numbers = #tpu.dot_dimension_numbers<[1], [0], [0], [1], [0, 0, 1, 1], [], []>} : vector<64x16xbf16>, vector<16x16xbf16>, vector<64x16xf32> -> vector<64x16xf32>
      %42 = arith.addf %38, %41 : vector<64x16xf32>
      %c1_i32_22 = arith.constant 1 : i32
      %43 = arith.addi %arg7, %c1_i32_22 : i32
      %c0_23 = arith.constant 0 : index
      %44 = arith.index_cast %43 : i32 to index
      %c0_24 = arith.constant 0 : index
      %c0_25 = arith.constant 0 : index
      %45 = vector.load %arg1[%c0_23, %44, %c0_24, %c0_25] : memref<1x25x16x18xbf16, #tpu.memory_space<vmem>>, vector<1x1x16x18xbf16>
      %46 = vector.shape_cast %45 : vector<1x1x16x18xbf16> to vector<16x18xbf16>
      %c1_i32_26 = arith.constant 1 : i32
      %47 = arith.addi %arg7, %c1_i32_26 : i32
      %c0_27 = arith.constant 0 : index
      %48 = arith.index_cast %47 : i32 to index
      %c0_28 = arith.constant 0 : index
      %c0_29 = arith.constant 0 : index
      %49 = vector.load %arg2[%c0_27, %48, %c0_28, %c0_29] : memref<1x25x16x18xbf16, #tpu.memory_space<vmem>>, vector<1x1x16x18xbf16>
      %50 = vector.shape_cast %49 : vector<1x1x16x18xbf16> to vector<16x18xbf16>
      %51 = vector.extract_strided_slice %46 {offsets = [0, 0], sizes = [16, 16], strides = [1, 1]} : vector<16x18xbf16> to vector<16x16xbf16>
      %52 = vector.extract_strided_slice %50 {offsets = [0, 0], sizes = [16, 16], strides = [1, 1]} : vector<16x18xbf16> to vector<16x16xbf16>
      %53 = vector.extract_strided_slice %0 {offsets = [3, 0, 0], sizes = [1, 64, 16], strides = [1, 1, 1]} : vector<9x64x16xbf16> to vector<1x64x16xbf16>
      %54 = vector.shape_cast %53 : vector<1x64x16xbf16> to vector<64x16xbf16>
      %cst_30 = arith.constant dense<0.000000e+00> : vector<64x16xf32>
      %55 = tpu.matmul %54, %51, %cst_30 {dimension_numbers = #tpu.dot_dimension_numbers<[1], [0], [0], [1], [0, 0, 1, 1], [], []>} : vector<64x16xbf16>, vector<16x16xbf16>, vector<64x16xf32> -> vector<64x16xf32>
      %56 = arith.addf %42, %55 : vector<64x16xf32>
      %57 = vector.extract_strided_slice %1 {offsets = [3, 0, 0], sizes = [1, 64, 16], strides = [1, 1, 1]} : vector<9x64x16xbf16> to vector<1x64x16xbf16>
      %58 = vector.shape_cast %57 : vector<1x64x16xbf16> to vector<64x16xbf16>
      %cst_31 = arith.constant dense<0.000000e+00> : vector<64x16xf32>
      %59 = tpu.matmul %58, %52, %cst_31 {dimension_numbers = #tpu.dot_dimension_numbers<[1], [0], [0], [1], [0, 0, 1, 1], [], []>} : vector<64x16xbf16>, vector<16x16xbf16>, vector<64x16xf32> -> vector<64x16xf32>
      %60 = arith.addf %56, %59 : vector<64x16xf32>
      %61 = vector.extract_strided_slice %46 {offsets = [0, 1], sizes = [16, 16], strides = [1, 1]} : vector<16x18xbf16> to vector<16x16xbf16>
      %62 = vector.extract_strided_slice %50 {offsets = [0, 1], sizes = [16, 16], strides = [1, 1]} : vector<16x18xbf16> to vector<16x16xbf16>
      %63 = vector.extract_strided_slice %0 {offsets = [4, 0, 0], sizes = [1, 64, 16], strides = [1, 1, 1]} : vector<9x64x16xbf16> to vector<1x64x16xbf16>
      %64 = vector.shape_cast %63 : vector<1x64x16xbf16> to vector<64x16xbf16>
      %cst_32 = arith.constant dense<0.000000e+00> : vector<64x16xf32>
      %65 = tpu.matmul %64, %61, %cst_32 {dimension_numbers = #tpu.dot_dimension_numbers<[1], [0], [0], [1], [0, 0, 1, 1], [], []>} : vector<64x16xbf16>, vector<16x16xbf16>, vector<64x16xf32> -> vector<64x16xf32>
      %66 = arith.addf %60, %65 : vector<64x16xf32>
      %67 = vector.extract_strided_slice %1 {offsets = [4, 0, 0], sizes = [1, 64, 16], strides = [1, 1, 1]} : vector<9x64x16xbf16> to vector<1x64x16xbf16>
      %68 = vector.shape_cast %67 : vector<1x64x16xbf16> to vector<64x16xbf16>
      %cst_33 = arith.constant dense<0.000000e+00> : vector<64x16xf32>
      %69 = tpu.matmul %68, %62, %cst_33 {dimension_numbers = #tpu.dot_dimension_numbers<[1], [0], [0], [1], [0, 0, 1, 1], [], []>} : vector<64x16xbf16>, vector<16x16xbf16>, vector<64x16xf32> -> vector<64x16xf32>
      %70 = arith.addf %66, %69 : vector<64x16xf32>
      %71 = vector.extract_strided_slice %46 {offsets = [0, 2], sizes = [16, 16], strides = [1, 1]} : vector<16x18xbf16> to vector<16x16xbf16>
      %72 = vector.extract_strided_slice %50 {offsets = [0, 2], sizes = [16, 16], strides = [1, 1]} : vector<16x18xbf16> to vector<16x16xbf16>
      %73 = vector.extract_strided_slice %0 {offsets = [5, 0, 0], sizes = [1, 64, 16], strides = [1, 1, 1]} : vector<9x64x16xbf16> to vector<1x64x16xbf16>
      %74 = vector.shape_cast %73 : vector<1x64x16xbf16> to vector<64x16xbf16>
      %cst_34 = arith.constant dense<0.000000e+00> : vector<64x16xf32>
      %75 = tpu.matmul %74, %71, %cst_34 {dimension_numbers = #tpu.dot_dimension_numbers<[1], [0], [0], [1], [0, 0, 1, 1], [], []>} : vector<64x16xbf16>, vector<16x16xbf16>, vector<64x16xf32> -> vector<64x16xf32>
      %76 = arith.addf %70, %75 : vector<64x16xf32>
      %77 = vector.extract_strided_slice %1 {offsets = [5, 0, 0], sizes = [1, 64, 16], strides = [1, 1, 1]} : vector<9x64x16xbf16> to vector<1x64x16xbf16>
      %78 = vector.shape_cast %77 : vector<1x64x16xbf16> to vector<64x16xbf16>
      %cst_35 = arith.constant dense<0.000000e+00> : vector<64x16xf32>
      %79 = tpu.matmul %78, %72, %cst_35 {dimension_numbers = #tpu.dot_dimension_numbers<[1], [0], [0], [1], [0, 0, 1, 1], [], []>} : vector<64x16xbf16>, vector<16x16xbf16>, vector<64x16xf32> -> vector<64x16xf32>
      %80 = arith.addf %76, %79 : vector<64x16xf32>
      %c2_i32 = arith.constant 2 : i32
      %81 = arith.addi %arg7, %c2_i32 : i32
      %c0_36 = arith.constant 0 : index
      %82 = arith.index_cast %81 : i32 to index
      %c0_37 = arith.constant 0 : index
      %c0_38 = arith.constant 0 : index
      %83 = vector.load %arg1[%c0_36, %82, %c0_37, %c0_38] : memref<1x25x16x18xbf16, #tpu.memory_space<vmem>>, vector<1x1x16x18xbf16>
      %84 = vector.shape_cast %83 : vector<1x1x16x18xbf16> to vector<16x18xbf16>
      %c2_i32_39 = arith.constant 2 : i32
      %85 = arith.addi %arg7, %c2_i32_39 : i32
      %c0_40 = arith.constant 0 : index
      %86 = arith.index_cast %85 : i32 to index
      %c0_41 = arith.constant 0 : index
      %c0_42 = arith.constant 0 : index
      %87 = vector.load %arg2[%c0_40, %86, %c0_41, %c0_42] : memref<1x25x16x18xbf16, #tpu.memory_space<vmem>>, vector<1x1x16x18xbf16>
      %88 = vector.shape_cast %87 : vector<1x1x16x18xbf16> to vector<16x18xbf16>
      %89 = vector.extract_strided_slice %84 {offsets = [0, 0], sizes = [16, 16], strides = [1, 1]} : vector<16x18xbf16> to vector<16x16xbf16>
      %90 = vector.extract_strided_slice %88 {offsets = [0, 0], sizes = [16, 16], strides = [1, 1]} : vector<16x18xbf16> to vector<16x16xbf16>
      %91 = vector.extract_strided_slice %0 {offsets = [6, 0, 0], sizes = [1, 64, 16], strides = [1, 1, 1]} : vector<9x64x16xbf16> to vector<1x64x16xbf16>
      %92 = vector.shape_cast %91 : vector<1x64x16xbf16> to vector<64x16xbf16>
      %cst_43 = arith.constant dense<0.000000e+00> : vector<64x16xf32>
      %93 = tpu.matmul %92, %89, %cst_43 {dimension_numbers = #tpu.dot_dimension_numbers<[1], [0], [0], [1], [0, 0, 1, 1], [], []>} : vector<64x16xbf16>, vector<16x16xbf16>, vector<64x16xf32> -> vector<64x16xf32>
      %94 = arith.addf %80, %93 : vector<64x16xf32>
      %95 = vector.extract_strided_slice %1 {offsets = [6, 0, 0], sizes = [1, 64, 16], strides = [1, 1, 1]} : vector<9x64x16xbf16> to vector<1x64x16xbf16>
      %96 = vector.shape_cast %95 : vector<1x64x16xbf16> to vector<64x16xbf16>
      %cst_44 = arith.constant dense<0.000000e+00> : vector<64x16xf32>
      %97 = tpu.matmul %96, %90, %cst_44 {dimension_numbers = #tpu.dot_dimension_numbers<[1], [0], [0], [1], [0, 0, 1, 1], [], []>} : vector<64x16xbf16>, vector<16x16xbf16>, vector<64x16xf32> -> vector<64x16xf32>
      %98 = arith.addf %94, %97 : vector<64x16xf32>
      %99 = vector.extract_strided_slice %84 {offsets = [0, 1], sizes = [16, 16], strides = [1, 1]} : vector<16x18xbf16> to vector<16x16xbf16>
      %100 = vector.extract_strided_slice %88 {offsets = [0, 1], sizes = [16, 16], strides = [1, 1]} : vector<16x18xbf16> to vector<16x16xbf16>
      %101 = vector.extract_strided_slice %0 {offsets = [7, 0, 0], sizes = [1, 64, 16], strides = [1, 1, 1]} : vector<9x64x16xbf16> to vector<1x64x16xbf16>
      %102 = vector.shape_cast %101 : vector<1x64x16xbf16> to vector<64x16xbf16>
      %cst_45 = arith.constant dense<0.000000e+00> : vector<64x16xf32>
      %103 = tpu.matmul %102, %99, %cst_45 {dimension_numbers = #tpu.dot_dimension_numbers<[1], [0], [0], [1], [0, 0, 1, 1], [], []>} : vector<64x16xbf16>, vector<16x16xbf16>, vector<64x16xf32> -> vector<64x16xf32>
      %104 = arith.addf %98, %103 : vector<64x16xf32>
      %105 = vector.extract_strided_slice %1 {offsets = [7, 0, 0], sizes = [1, 64, 16], strides = [1, 1, 1]} : vector<9x64x16xbf16> to vector<1x64x16xbf16>
      %106 = vector.shape_cast %105 : vector<1x64x16xbf16> to vector<64x16xbf16>
      %cst_46 = arith.constant dense<0.000000e+00> : vector<64x16xf32>
      %107 = tpu.matmul %106, %100, %cst_46 {dimension_numbers = #tpu.dot_dimension_numbers<[1], [0], [0], [1], [0, 0, 1, 1], [], []>} : vector<64x16xbf16>, vector<16x16xbf16>, vector<64x16xf32> -> vector<64x16xf32>
      %108 = arith.addf %104, %107 : vector<64x16xf32>
      %109 = vector.extract_strided_slice %84 {offsets = [0, 2], sizes = [16, 16], strides = [1, 1]} : vector<16x18xbf16> to vector<16x16xbf16>
      %110 = vector.extract_strided_slice %88 {offsets = [0, 2], sizes = [16, 16], strides = [1, 1]} : vector<16x18xbf16> to vector<16x16xbf16>
      %111 = vector.extract_strided_slice %0 {offsets = [8, 0, 0], sizes = [1, 64, 16], strides = [1, 1, 1]} : vector<9x64x16xbf16> to vector<1x64x16xbf16>
      %112 = vector.shape_cast %111 : vector<1x64x16xbf16> to vector<64x16xbf16>
      %cst_47 = arith.constant dense<0.000000e+00> : vector<64x16xf32>
      %113 = tpu.matmul %112, %109, %cst_47 {dimension_numbers = #tpu.dot_dimension_numbers<[1], [0], [0], [1], [0, 0, 1, 1], [], []>} : vector<64x16xbf16>, vector<16x16xbf16>, vector<64x16xf32> -> vector<64x16xf32>
      %114 = arith.addf %108, %113 : vector<64x16xf32>
      %115 = vector.extract_strided_slice %1 {offsets = [8, 0, 0], sizes = [1, 64, 16], strides = [1, 1, 1]} : vector<9x64x16xbf16> to vector<1x64x16xbf16>
      %116 = vector.shape_cast %115 : vector<1x64x16xbf16> to vector<64x16xbf16>
      %cst_48 = arith.constant dense<0.000000e+00> : vector<64x16xf32>
      %117 = tpu.matmul %116, %110, %cst_48 {dimension_numbers = #tpu.dot_dimension_numbers<[1], [0], [0], [1], [0, 0, 1, 1], [], []>} : vector<64x16xbf16>, vector<16x16xbf16>, vector<64x16xf32> -> vector<64x16xf32>
      %118 = arith.addf %114, %117 : vector<64x16xf32>
      %119 = vector.extract_strided_slice %118 {offsets = [0, 0], sizes = [32, 16], strides = [1, 1]} : vector<64x16xf32> to vector<32x16xf32>
      %120 = vector.extract_strided_slice %118 {offsets = [32, 0], sizes = [32, 16], strides = [1, 1]} : vector<64x16xf32> to vector<32x16xf32>
      %121 = arith.maximumf %119, %120 : vector<32x16xf32>
      %122 = vector.broadcast %2 : vector<32x1xf32> to vector<32x16xf32>
      %123 = arith.addf %121, %122 : vector<32x16xf32>
      %cst_49 = arith.constant 0.000000e+00 : f32
      %124 = vector.broadcast %cst_49 : f32 to vector<32x16xf32>
      %125 = arith.maximumf %123, %124 : vector<32x16xf32>
      %126 = arith.truncf %125 : vector<32x16xf32> to vector<32x16xbf16>
      %c0_50 = arith.constant 0 : index
      %127 = arith.index_cast %arg7 : i32 to index
      %c0_51 = arith.constant 0 : index
      %c0_52 = arith.constant 0 : index
      %128 = vector.load %arg6[%c0_50, %127, %c0_51, %c0_52] : memref<1x23x32x16xbf16, #tpu.memory_space<vmem>>, vector<1x1x32x16xbf16>
      %129 = vector.shape_cast %128 : vector<1x1x32x16xbf16> to vector<32x16xbf16>
      %130 = vector.shape_cast %126 : vector<32x16xbf16> to vector<1x1x32x16xbf16>
      tpu.vector_store %arg6[%c0_50, %127, %c0_51, %c0_52], %130 {strides = array<i32>} : memref<1x23x32x16xbf16, #tpu.memory_space<vmem>>, vector<1x1x32x16xbf16>,
    }
    %c23_i32_7 = arith.constant 23 : i32
    return
  }
  func.func @transform_0(%arg0: i32) -> (i32, i32, i32, i32) {
    %c0_i32 = arith.constant 0 : i32
    %c0_i32_0 = arith.constant 0 : i32
    %c0_i32_1 = arith.constant 0 : i32
    %c0_i32_2 = arith.constant 0 : i32
    return %arg0, %c0_i32, %c0_i32_0, %c0_i32_1 : i32, i32, i32, i32
  }
  func.func @transform_1(%arg0: i32) -> (i32, i32, i32, i32) {
    %c0_i32 = arith.constant 0 : i32
    %c0_i32_0 = arith.constant 0 : i32
    %c0_i32_1 = arith.constant 0 : i32
    %c0_i32_2 = arith.constant 0 : i32
    return %arg0, %c0_i32, %c0_i32_0, %c0_i32_1 : i32, i32, i32, i32
  }
  func.func @transform_2(%arg0: i32) -> (i32, i32, i32) {
    %c0_i32 = arith.constant 0 : i32
    %c0_i32_0 = arith.constant 0 : i32
    %c0_i32_1 = arith.constant 0 : i32
    %c0_i32_2 = arith.constant 0 : i32
    return %c0_i32, %c0_i32_0, %c0_i32_1 : i32, i32, i32
  }
  func.func @transform_3(%arg0: i32) -> (i32, i32, i32) {
    %c0_i32 = arith.constant 0 : i32
    %c0_i32_0 = arith.constant 0 : i32
    %c0_i32_1 = arith.constant 0 : i32
    %c0_i32_2 = arith.constant 0 : i32
    return %c0_i32, %c0_i32_0, %c0_i32_1 : i32, i32, i32
  }
  func.func @transform_4(%arg0: i32) -> (i32, i32) {
    %c0_i32 = arith.constant 0 : i32
    %c0_i32_0 = arith.constant 0 : i32
    %c0_i32_1 = arith.constant 0 : i32
    return %c0_i32, %c0_i32_0 : i32, i32
  }
  func.func @transform_5(%arg0: i32) -> (i32, i32, i32, i32) {
    %c0_i32 = arith.constant 0 : i32
    %c0_i32_0 = arith.constant 0 : i32
    %c0_i32_1 = arith.constant 0 : i32
    %c0_i32_2 = arith.constant 0 : i32
    return %arg0, %c0_i32, %c0_i32_0, %c0_i32_1 : i32, i32, i32, i32
  }
}

module attributes {stable_mosaic.version = 11 : i64} {
  func.func @_fc_head_kernel(%arg0: i32, %arg1: memref<2x512xbf16, #tpu.memory_space<vmem>>, %arg2: memref<512x64xbf16, #tpu.memory_space<vmem>>, %arg3: memref<1x64xf32, #tpu.memory_space<vmem>>, %arg4: memref<64x2xf32, #tpu.memory_space<vmem>>, %arg5: memref<1x2xf32, #tpu.memory_space<vmem>>, %arg6: memref<2x2xf32, #tpu.memory_space<vmem>>, %arg7: memref<2x64xf32, #tpu.memory_space<vmem>>) attributes {dimension_semantics = [#tpu.dimension_semantics<arbitrary>], iteration_bounds = array<i64: 23>, scalar_prefetch = 0 : i64, scratch_operands = 1 : i64, tpu.core_type = #tpu.core_type<tc>, window_params = [{transform_indices = @transform_0, window_bounds = array<i64: 2, 512>}, {transform_indices = @transform_1, window_bounds = array<i64: 512, 64>}, {pipeline_mode = #tpu.pipeline_mode<synchronous>, transform_indices = @transform_2, window_bounds = array<i64: 1, 64>}, {pipeline_mode = #tpu.pipeline_mode<synchronous>, transform_indices = @transform_3, window_bounds = array<i64: 64, 2>}, {pipeline_mode = #tpu.pipeline_mode<synchronous>, transform_indices = @transform_4, window_bounds = array<i64: 1, 2>}, {pipeline_mode = #tpu.pipeline_mode<synchronous>, transform_indices = @transform_5, window_bounds = array<i64: 2, 2>}]} {
    %c0_i32 = arith.constant 0 : i32
    %0 = arith.cmpi eq, %arg0, %c0_i32 : i32
    %1 = arith.extui %0 : i1 to i32
    %c0_i32_0 = arith.constant 0 : i32
    %2 = arith.cmpi ne, %1, %c0_i32_0 : i32
    scf.if %2 {
      %cst_9 = arith.constant 0.000000e+00 : f32
      %12 = vector.broadcast %cst_9 : f32 to vector<2x64xf32>
      %c0_10 = arith.constant 0 : index
      %c0_11 = arith.constant 0 : index
      %13 = vector.load %arg7[%c0_10, %c0_11] : memref<2x64xf32, #tpu.memory_space<vmem>>, vector<2x64xf32>
      tpu.vector_store %arg7[%c0_10, %c0_11], %12 {strides = array<i32>} : memref<2x64xf32, #tpu.memory_space<vmem>>, vector<2x64xf32>,
    } else {
    }
    %c0 = arith.constant 0 : index
    %c0_1 = arith.constant 0 : index
    %3 = vector.load %arg7[%c0, %c0_1] : memref<2x64xf32, #tpu.memory_space<vmem>>, vector<2x64xf32>
    %c0_2 = arith.constant 0 : index
    %c0_3 = arith.constant 0 : index
    %4 = vector.load %arg1[%c0_2, %c0_3] : memref<2x512xbf16, #tpu.memory_space<vmem>>, vector<2x512xbf16>
    %c0_4 = arith.constant 0 : index
    %c0_5 = arith.constant 0 : index
    %5 = vector.load %arg2[%c0_4, %c0_5] : memref<512x64xbf16, #tpu.memory_space<vmem>>, vector<512x64xbf16>
    %cst = arith.constant dense<0.000000e+00> : vector<2x64xf32>
    %6 = tpu.matmul %4, %5, %cst {dimension_numbers = #tpu.dot_dimension_numbers<[1], [0], [0], [1], [0, 0, 1, 1], [], []>} : vector<2x512xbf16>, vector<512x64xbf16>, vector<2x64xf32> -> vector<2x64xf32>
    %7 = arith.addf %3, %6 : vector<2x64xf32>
    %c0_6 = arith.constant 0 : index
    %c0_7 = arith.constant 0 : index
    %8 = vector.load %arg7[%c0_6, %c0_7] : memref<2x64xf32, #tpu.memory_space<vmem>>, vector<2x64xf32>
    tpu.vector_store %arg7[%c0_6, %c0_7], %7 {strides = array<i32>} : memref<2x64xf32, #tpu.memory_space<vmem>>, vector<2x64xf32>,
    %c22_i32 = arith.constant 22 : i32
    %9 = arith.cmpi eq, %arg0, %c22_i32 : i32
    %10 = arith.extui %9 : i1 to i32
    %c0_i32_8 = arith.constant 0 : i32
    %11 = arith.cmpi ne, %10, %c0_i32_8 : i32
    scf.if %11 {
      %c0_9 = arith.constant 0 : index
      %c0_10 = arith.constant 0 : index
      %12 = vector.load %arg7[%c0_9, %c0_10] : memref<2x64xf32, #tpu.memory_space<vmem>>, vector<2x64xf32>
      %c0_11 = arith.constant 0 : index
      %c0_12 = arith.constant 0 : index
      %13 = vector.load %arg3[%c0_11, %c0_12] : memref<1x64xf32, #tpu.memory_space<vmem>>, vector<1x64xf32>
      %14 = vector.broadcast %13 : vector<1x64xf32> to vector<2x64xf32>
      %15 = arith.addf %12, %14 : vector<2x64xf32>
      %cst_13 = arith.constant 0.000000e+00 : f32
      %16 = vector.broadcast %cst_13 : f32 to vector<2x64xf32>
      %17 = arith.maximumf %15, %16 : vector<2x64xf32>
      %c0_14 = arith.constant 0 : index
      %c0_15 = arith.constant 0 : index
      %18 = vector.load %arg4[%c0_14, %c0_15] : memref<64x2xf32, #tpu.memory_space<vmem>>, vector<64x2xf32>
      %cst_16 = arith.constant dense<0.000000e+00> : vector<2x2xf32>
      %19 = tpu.matmul %17, %18, %cst_16 {dimension_numbers = #tpu.dot_dimension_numbers<[1], [0], [0], [1], [0, 0, 1, 1], [], []>} : vector<2x64xf32>, vector<64x2xf32>, vector<2x2xf32> -> vector<2x2xf32>
      %c0_17 = arith.constant 0 : index
      %c0_18 = arith.constant 0 : index
      %20 = vector.load %arg5[%c0_17, %c0_18] : memref<1x2xf32, #tpu.memory_space<vmem>>, vector<1x2xf32>
      %21 = vector.broadcast %20 : vector<1x2xf32> to vector<2x2xf32>
      %22 = arith.addf %19, %21 : vector<2x2xf32>
      %c0_19 = arith.constant 0 : index
      %c0_20 = arith.constant 0 : index
      %23 = vector.load %arg6[%c0_19, %c0_20] : memref<2x2xf32, #tpu.memory_space<vmem>>, vector<2x2xf32>
      tpu.vector_store %arg6[%c0_19, %c0_20], %22 {strides = array<i32>} : memref<2x2xf32, #tpu.memory_space<vmem>>, vector<2x2xf32>,
    } else {
    }
    return
  }
  func.func @transform_0(%arg0: i32) -> (i32, i32) {
    %c0_i32 = arith.constant 0 : i32
    %c0_i32_0 = arith.constant 0 : i32
    return %c0_i32, %arg0 : i32, i32
  }
  func.func @transform_1(%arg0: i32) -> (i32, i32) {
    %c0_i32 = arith.constant 0 : i32
    %c0_i32_0 = arith.constant 0 : i32
    return %arg0, %c0_i32 : i32, i32
  }
  func.func @transform_2(%arg0: i32) -> (i32, i32) {
    %c0_i32 = arith.constant 0 : i32
    %c0_i32_0 = arith.constant 0 : i32
    %c0_i32_1 = arith.constant 0 : i32
    return %c0_i32, %c0_i32_0 : i32, i32
  }
  func.func @transform_3(%arg0: i32) -> (i32, i32) {
    %c0_i32 = arith.constant 0 : i32
    %c0_i32_0 = arith.constant 0 : i32
    %c0_i32_1 = arith.constant 0 : i32
    return %c0_i32, %c0_i32_0 : i32, i32
  }
  func.func @transform_4(%arg0: i32) -> (i32, i32) {
    %c0_i32 = arith.constant 0 : i32
    %c0_i32_0 = arith.constant 0 : i32
    %c0_i32_1 = arith.constant 0 : i32
    return %c0_i32, %c0_i32_0 : i32, i32
  }
  func.func @transform_5(%arg0: i32) -> (i32, i32) {
    %c0_i32 = arith.constant 0 : i32
    %c0_i32_0 = arith.constant 0 : i32
    %c0_i32_1 = arith.constant 0 : i32
    return %c0_i32, %c0_i32_0 : i32, i32
  }
}

</mosaic_0001>

<llo_original>
// kernel: eeg_cnn_forward.3
$region0: #{eeg_cnn_forward.3}
  #allocation0 [shape = 'u32[]', space=smem, size = 0x4, offset = 0x4, fixed_abs, tag = 'smem constant byte address 0x4 - core index']
  #allocation1 [shape = 'u32[72,128]{1,0:T(1,128)}', space=vmem, size = 0x9000, scoped, tag = 'internal scratch']
  %s0 = inlined_call_operand.vmem [shape: bf16[2,25,1,34], index: 0, kind: input, shape index: {}]
  %s1 = inlined_call_operand.vmem [shape: bf16[2,25,1,34], index: 1, kind: input, shape index: {}]
  %s2 = inlined_call_operand.vmem [shape: bf16[9,32,1], index: 2, kind: input, shape index: {}]
  %s3 = inlined_call_operand.vmem [shape: bf16[9,32,1], index: 3, kind: input, shape index: {}]
  %s4 = inlined_call_operand.vmem [shape: f32[16,1], index: 4, kind: input, shape index: {}]
  %s5 = inlined_call_operand.vmem [shape: bf16[2,23,16,32], index: 5, kind: output, shape index: {}]
  %s6 = sld [smem:[#allocation0]]
  $region60: #{eeg_cnn_forward.3} parent=0
    _
  %s8 = ssub.s32 1, %s6
  %s9 = scalar_select 0, %s8, %s6
  loop: start=0, step=1, limit=4
  $region2: #{eeg_cnn_forward.3} parent=0 // loop_pre_header
    _
  $region3: #{eeg_cnn_forward.3} parent=0 // loop_header
    %s11 = sphi 0, %s15
    %p12 = scmp.ge.s32.totalorder %s11, 4
    %s21 = sphi 0, %s23
    %s24 = sphi 0, %s21
    %s25 = sphi 0, %s24
    %s41 = sphi 0, %s25
    %s47 = sphi 0, %s49
    %s50 = sphi 0, %s47
    %s51 = sphi 0, %s50
    %s67 = sphi 0, %s51
    %s71 = sphi 0, %s71
    %s73 = sphi 0, %s71
    %s74 = sphi 0, %s73
    %s88 = sphi 0, %s74
    %s92 = sphi 0, %s92
    %s94 = sphi 0, %s92
    %s95 = sphi 0, %s94
    %s109 = sphi 0, %s95
    %s113 = sphi 0, %s113
    %s115 = sphi 0, %s113
    %s116 = sphi 0, %s115
    %s130 = sphi 0, %s116
    %s136 = sphi 0, %s138
    %s139 = sphi 0, %s136
    %s140 = sphi 0, %s139
    %s156 = sphi 0, %s140
  $region4: #{eeg_cnn_forward.3} parent=0 // loop_header_branch
    %14 = sbr.rel (%p12) target = $region8
  $region5: #{eeg_cnn_forward.3} parent=0 // loop_body
    %s16 = ssub.s32 %s11, 1
    %s17 = ssub.s32 %s11, 2
    %s18 = sadd.s32 %s11, 1
    %s19 = ssub.s32 %s11, %s18
    %p20 = scmp.eq.s32.totalorder %s19, 0
    %s22 = sadd.s32 %s21, 1
    %s23 = scalar_select %p20, %s21, %s22
    %p26 = pneg %p20
    %p27 = scmp.eq.s32.totalorder %s11, 1
    %p28 = por %p26, %p27
    %p29 = scmp.ne.s32.totalorder %s21, %s24
    %p30 = scmp.eq.s32.totalorder %s11, 0
    %p31 = por %p29, %p30
    %p32 = scmp.ne.s32.totalorder %s21, %s24
    %p33 = scmp.eq.s32.totalorder %s16, 1
    %p34 = por %p32, %p33
    %p35 = scmp.ne.s32.totalorder %s24, %s25
    %p36 = scmp.eq.s32.totalorder %s16, 0
    %p37 = por %p35, %p36
    %p38 = scmp.ne.s32.totalorder %s24, %s25
    %p39 = scmp.eq.s32.totalorder %s17, 1
    %p40 = por %p38, %p39
    %p42 = scmp.ne.s32.totalorder %s25, %s41
    %p43 = scmp.eq.s32.totalorder %s17, 0
    %p44 = por %p42, %p43
    %s45 = ssub.s32 %s11, %s18
    %p46 = scmp.eq.s32.totalorder %s45, 0
    %s48 = sadd.s32 %s47, 1
    %s49 = scalar_select %p46, %s47, %s48
    %p52 = pneg %p46
    %p53 = scmp.eq.s32.totalorder %s11, 1
    %p54 = por %p52, %p53
    %p55 = scmp.ne.s32.totalorder %s47, %s50
    %p56 = scmp.eq.s32.totalorder %s11, 0
    %p57 = por %p55, %p56
    %p58 = scmp.ne.s32.totalorder %s47, %s50
    %p59 = scmp.eq.s32.totalorder %s16, 1
    %p60 = por %p58, %p59
    %p61 = scmp.ne.s32.totalorder %s50, %s51
    %p62 = scmp.eq.s32.totalorder %s16, 0
    %p63 = por %p61, %p62
    %p64 = scmp.ne.s32.totalorder %s50, %s51
    %p65 = scmp.eq.s32.totalorder %s17, 1
    %p66 = por %p64, %p65
    %p68 = scmp.ne.s32.totalorder %s51, %s67
    %p69 = scmp.eq.s32.totalorder %s17, 0
    %p70 = por %p68, %p69
    %s72 = sadd.s32 %s71, 1
    %p75 = scmp.eq.s32.totalorder %s11, 1
    %p76 = scmp.ne.s32.totalorder %s71, %s73
    %p77 = scmp.eq.s32.totalorder %s11, 0
    %p78 = por %p76, %p77
    %p79 = scmp.ne.s32.totalorder %s71, %s73
    %p80 = scmp.eq.s32.totalorder %s16, 1
    %p81 = por %p79, %p80
    %p82 = scmp.ne.s32.totalorder %s73, %s74
    %p83 = scmp.eq.s32.totalorder %s16, 0
    %p84 = por %p82, %p83
    %p85 = scmp.ne.s32.totalorder %s73, %s74
    %p86 = scmp.eq.s32.totalorder %s17, 1
    %p87 = por %p85, %p86
    %p89 = scmp.ne.s32.totalorder %s74, %s88
    %p90 = scmp.eq.s32.totalorder %s17, 0
    %p91 = por %p89, %p90
    %s93 = sadd.s32 %s92, 1
    %p96 = scmp.eq.s32.totalorder %s11, 1
    %p97 = scmp.ne.s32.totalorder %s92, %s94
    %p98 = scmp.eq.s32.totalorder %s11, 0
    %p99 = por %p97, %p98
    %p100 = scmp.ne.s32.totalorder %s92, %s94
    %p101 = scmp.eq.s32.totalorder %s16, 1
    %p102 = por %p100, %p101
    %p103 = scmp.ne.s32.totalorder %s94, %s95
    %p104 = scmp.eq.s32.totalorder %s16, 0
    %p105 = por %p103, %p104
    %p106 = scmp.ne.s32.totalorder %s94, %s95
    %p107 = scmp.eq.s32.totalorder %s17, 1
    %p108 = por %p106, %p107
    %p110 = scmp.ne.s32.totalorder %s95, %s109
    %p111 = scmp.eq.s32.totalorder %s17, 0
    %p112 = por %p110, %p111
    %s114 = sadd.s32 %s113, 1
    %p117 = scmp.eq.s32.totalorder %s11, 1
    %p118 = scmp.ne.s32.totalorder %s113, %s115
    %p119 = scmp.eq.s32.totalorder %s11, 0
    %p120 = por %p118, %p119
    %p121 = scmp.ne.s32.totalorder %s113, %s115
    %p122 = scmp.eq.s32.totalorder %s16, 1
    %p123 = por %p121, %p122
    %p124 = scmp.ne.s32.totalorder %s115, %s116
    %p125 = scmp.eq.s32.totalorder %s16, 0
    %p126 = por %p124, %p125
    %p127 = scmp.ne.s32.totalorder %s115, %s116
    %p128 = scmp.eq.s32.totalorder %s17, 1
    %p129 = por %p127, %p128
    %p131 = scmp.ne.s32.totalorder %s116, %s130
    %p132 = scmp.eq.s32.totalorder %s17, 0
    %p133 = por %p131, %p132
    %s134 = ssub.s32 %s11, %s18
    %p135 = scmp.eq.s32.totalorder %s134, 0
    %s137 = sadd.s32 %s136, 1
    %s138 = scalar_select %p135, %s136, %s137
    %p141 = pneg %p135
    %p142 = scmp.eq.s32.totalorder %s11, 1
    %p143 = por %p141, %p142
    %p144 = scmp.ne.s32.totalorder %s136, %s139
    %p145 = scmp.eq.s32.totalorder %s11, 0
    %p146 = por %p144, %p145
    %p147 = scmp.ne.s32.totalorder %s136, %s139
    %p148 = scmp.eq.s32.totalorder %s16, 1
    %p149 = por %p147, %p148
    %p150 = scmp.ne.s32.totalorder %s139, %s140
    %p151 = scmp.eq.s32.totalorder %s16, 0
    %p152 = por %p150, %p151
    %p153 = scmp.ne.s32.totalorder %s139, %s140
    %p154 = scmp.eq.s32.totalorder %s17, 1
    %p155 = por %p153, %p154
    %p157 = scmp.ne.s32.totalorder %s140, %s156
    %p158 = scmp.eq.s32.totalorder %s17, 0
    %p159 = por %p157, %p158
    %p160 = scmp.le.s32.totalorder 1, %s11
    %p161 = scmp.lt.s32.totalorder %s11, 3
    %p162 = pnand %p160, %p161
    %p163 = pneg %p162
    // Predicated region
    $region9: #{eeg_cnn_forward.3} parent=5 // pred_check
      _
    $region10: #{eeg_cnn_forward.3} parent=5 // pred_check_branch
      %165 = sbr.rel (%p162) target = $region12
    $region11: #{eeg_cnn_forward.3} parent=5 // pred_region
      %s166 = ssub.s32 %s11, 1
      // Predicated region
      $region13: #{eeg_cnn_forward.3} parent=11 // pred_check
        %p167 = pneg %p84
      $region14: #{eeg_cnn_forward.3} parent=11 // pred_check_branch
        %169 = sbr.rel (%p167) target = $region16
      $region15: #{eeg_cnn_forward.3} parent=11 // pred_region
        _
      $region16: #{eeg_cnn_forward.3} parent=11 // pred_fallthru
        _
      // Predicated region
      $region17: #{eeg_cnn_forward.3} parent=11 // pred_check
        %p170 = pneg %p105
      $region18: #{eeg_cnn_forward.3} parent=11 // pred_check_branch
        %172 = sbr.rel (%p170) target = $region20
      $region19: #{eeg_cnn_forward.3} parent=11 // pred_region
        _
      $region20: #{eeg_cnn_forward.3} parent=11 // pred_fallthru
        _
      // Predicated region
      $region21: #{eeg_cnn_forward.3} parent=11 // pred_check
        %p173 = pneg %p126
      $region22: #{eeg_cnn_forward.3} parent=11 // pred_check_branch
        %175 = sbr.rel (%p173) target = $region24
      $region23: #{eeg_cnn_forward.3} parent=11 // pred_region
        _
      $region24: #{eeg_cnn_forward.3} parent=11 // pred_fallthru
        _
    $region12: #{eeg_cnn_forward.3} parent=5 // pred_fallthru
      _
    %p176 = scmp.lt.s32.totalorder %s11, 2
    // Predicated region
    $region25: #{eeg_cnn_forward.3} parent=5 // pred_check
      %p177 = pneg %p176
    $region26: #{eeg_cnn_forward.3} parent=5 // pred_check_branch
      %179 = sbr.rel (%p177) target = $region28
    $region27: #{eeg_cnn_forward.3} parent=5 // pred_region
      // Predicated region
      $region29: #{eeg_cnn_forward.3} parent=27 // pred_check
        %p180 = pneg %p31
      $region30: #{eeg_cnn_forward.3} parent=27 // pred_check_branch
        %182 = sbr.rel (%p180) target = $region32
      $region31: #{eeg_cnn_forward.3} parent=27 // pred_region
        %p183 = scmp.lt.s32.totalorder %s11, 1
        %s184 = scalar_select %p183, %s11, 1
        %s185 = smul.addr %s184, 25
        %s186 = scalar_lea.vmem %s0, %s185
      $region32: #{eeg_cnn_forward.3} parent=27 // pred_fallthru
        _
      // Predicated region
      $region33: #{eeg_cnn_forward.3} parent=27 // pred_check
        %p187 = pneg %p57
      $region34: #{eeg_cnn_forward.3} parent=27 // pred_check_branch
        %189 = sbr.rel (%p187) target = $region36
      $region35: #{eeg_cnn_forward.3} parent=27 // pred_region
        %p190 = scmp.lt.s32.totalorder %s11, 1
        %s191 = scalar_select %p190, %s11, 1
        %s192 = smul.addr %s191, 25
        %s193 = scalar_lea.vmem %s1, %s192
      $region36: #{eeg_cnn_forward.3} parent=27 // pred_fallthru
        _
    $region28: #{eeg_cnn_forward.3} parent=5 // pred_fallthru
      _
    %p194 = scmp.le.s32.totalorder 1, %s11
    %p195 = scmp.lt.s32.totalorder %s11, 3
    %p196 = pnand %p194, %p195
    %p197 = pneg %p196
    // Predicated region
    $region37: #{eeg_cnn_forward.3} parent=5 // pred_check
      _
    $region38: #{eeg_cnn_forward.3} parent=5 // pred_check_branch
      %199 = sbr.rel (%p196) target = $region40
    $region39: #{eeg_cnn_forward.3} parent=5 // pred_region
      %s200 = ssub.s32 %s11, 1
      %p201 = scmp.lt.s32.totalorder %s16, 1
      %s202 = scalar_select %p201, %s16, 1
      %s203 = smul.addr %s202, 25
      %s204 = scalar_lea.vmem %s0, %s203
      %p205 = pneg %p37
      %p206 = pneg %p34
      %p207 = scmp.lt.s32.totalorder %s16, 1
      %s208 = scalar_select %p207, %s16, 1
      %s209 = smul.addr %s208, 25
      %s210 = scalar_lea.vmem %s1, %s209
      %p211 = pneg %p63
      %p212 = pneg %p60
      %p213 = pneg %p84
      %p214 = pneg %p81
      %p215 = pneg %p105
      %p216 = pneg %p102
      %p217 = pneg %p126
      %p218 = pneg %p123
      %p219 = pneg %p152
      %p220 = pneg %p149
      %p221 = scmp.lt.s32.totalorder %s16, 1
      %s222 = scalar_select %p221, %s16, 1
      %s223 = smul.addr %s222, 46
      %s224 = smul.addr %s223, 4
      %s225 = scalar_lea.vmem %s5, %s224
      %p226 = scmp.lt.s32.totalorder %s16, 1
      %s227 = scalar_select %p226, %s16, 1
      %s228 = smul.addr %s227, 25
      %s229 = scalar_lea.vmem %s0, %s228
      %p230 = scmp.lt.s32.totalorder %s16, 1
      %s231 = scalar_select %p230, %s16, 1
      %s232 = smul.addr %s231, 25
      %s233 = scalar_lea.vmem %s1, %s232
      %p234 = scmp.lt.s32.totalorder %s16, 1
      %s235 = scalar_select %p234, %s16, 1
      %s236 = smul.addr %s235, 46
      %s237 = smul.addr %s236, 4
      %s238 = scalar_lea.vmem %s5, %s237
      %v239 = vld [vmem:[%s2] sm:$0xf]
      %v240 = vld [vmem:[%s2 + $0x4] sm:$0xf]
      %v241 = vld [vmem:[%s2 + $0x8] sm:$0xf]
      %v242 = vld [vmem:[%s2 + $0xc] sm:$0xf]
      %v243 = vld [vmem:[%s2 + $0x10] sm:$0xf]
      %v244 = vld [vmem:[%s2 + $0x14] sm:$0xf]
      %v245 = vld [vmem:[%s2 + $0x18] sm:$0xf]
      %v246 = vld [vmem:[%s2 + $0x1c] sm:$0xf]
      %v247 = vld [vmem:[%s2 + $0x20] sm:$0xf]
      %v248 = vld [vmem:[%s2 + $0x24] sm:$0xf]
      %v249 = vld [vmem:[%s2 + $0x28] sm:$0xf]
      %v250 = vld [vmem:[%s2 + $0x2c] sm:$0xf]
      %v251 = vld [vmem:[%s2 + $0x30] sm:$0xf]
      %v252 = vld [vmem:[%s2 + $0x34] sm:$0xf]
      %v253 = vld [vmem:[%s2 + $0x38] sm:$0xf]
      %v254 = vld [vmem:[%s2 + $0x3c] sm:$0xf]
      %v255 = vld [vmem:[%s2 + $0x40] sm:$0xf]
      %v256 = vld [vmem:[%s2 + $0x44] sm:$0xf]
      %v257 = vld [vmem:[%s2 + $0x48] sm:$0xf]
      %v258 = vld [vmem:[%s2 + $0x4c] sm:$0xf]
      %v259 = vld [vmem:[%s2 + $0x50] sm:$0xf]
      %v260 = vld [vmem:[%s2 + $0x54] sm:$0xf]
      %v261 = vld [vmem:[%s2 + $0x58] sm:$0xf]
      %v262 = vld [vmem:[%s2 + $0x5c] sm:$0xf]
      %v263 = vld [vmem:[%s2 + $0x60] sm:$0xf]
      %v264 = vld [vmem:[%s2 + $0x64] sm:$0xf]
      %v265 = vld [vmem:[%s2 + $0x68] sm:$0xf]
      %v266 = vld [vmem:[%s2 + $0x6c] sm:$0xf]
      %v267 = vld [vmem:[%s2 + $0x70] sm:$0xf]
      %v268 = vld [vmem:[%s2 + $0x74] sm:$0xf]
      %v269 = vld [vmem:[%s2 + $0x78] sm:$0xf]
      %v270 = vld [vmem:[%s2 + $0x7c] sm:$0xf]
      %v271 = vld [vmem:[%s2 + $0x80] sm:$0xf]
      %v272 = vld [vmem:[%s2 + $0x84] sm:$0xf]
      %v273 = vld [vmem:[%s2 + $0x88] sm:$0xf]
      %v274 = vld [vmem:[%s2 + $0x8c] sm:$0xf]
      %v275 = vld [vmem:[%s3] sm:$0xf]
      %v276 = vld [vmem:[%s3 + $0x4] sm:$0xf]
      %v277 = vld [vmem:[%s3 + $0x8] sm:$0xf]
      %v278 = vld [vmem:[%s3 + $0xc] sm:$0xf]
      %v279 = vld [vmem:[%s3 + $0x10] sm:$0xf]
      %v280 = vld [vmem:[%s3 + $0x14] sm:$0xf]
      %v281 = vld [vmem:[%s3 + $0x18] sm:$0xf]
      %v282 = vld [vmem:[%s3 + $0x1c] sm:$0xf]
      %v283 = vld [vmem:[%s3 + $0x20] sm:$0xf]
      %v284 = vld [vmem:[%s3 + $0x24] sm:$0xf]
      %v285 = vld [vmem:[%s3 + $0x28] sm:$0xf]
      %v286 = vld [vmem:[%s3 + $0x2c] sm:$0xf]
      %v287 = vld [vmem:[%s3 + $0x30] sm:$0xf]
      %v288 = vld [vmem:[%s3 + $0x34] sm:$0xf]
      %v289 = vld [vmem:[%s3 + $0x38] sm:$0xf]
      %v290 = vld [vmem:[%s3 + $0x3c] sm:$0xf]
      %v291 = vld [vmem:[%s3 + $0x40] sm:$0xf]
      %v292 = vld [vmem:[%s3 + $0x44] sm:$0xf]
      %v293 = vld [vmem:[%s3 + $0x48] sm:$0xf]
      %v294 = vld [vmem:[%s3 + $0x4c] sm:$0xf]
      %v295 = vld [vmem:[%s3 + $0x50] sm:$0xf]
      %v296 = vld [vmem:[%s3 + $0x54] sm:$0xf]
      %v297 = vld [vmem:[%s3 + $0x58] sm:$0xf]
      %v298 = vld [vmem:[%s3 + $0x5c] sm:$0xf]
      %v299 = vld [vmem:[%s3 + $0x60] sm:$0xf]
      %v300 = vld [vmem:[%s3 + $0x64] sm:$0xf]
      %v301 = vld [vmem:[%s3 + $0x68] sm:$0xf]
      %v302 = vld [vmem:[%s3 + $0x6c] sm:$0xf]
      %v303 = vld [vmem:[%s3 + $0x70] sm:$0xf]
      %v304 = vld [vmem:[%s3 + $0x74] sm:$0xf]
      %v305 = vld [vmem:[%s3 + $0x78] sm:$0xf]
      %v306 = vld [vmem:[%s3 + $0x7c] sm:$0xf]
      %v307 = vld [vmem:[%s3 + $0x80] sm:$0xf]
      %v308 = vld [vmem:[%s3 + $0x84] sm:$0xf]
      %v309 = vld [vmem:[%s3 + $0x88] sm:$0xf]
      %v310 = vld [vmem:[%s3 + $0x8c] sm:$0xf]
      %v311 = vld [vmem:[%s4] sm:$0xff]
      %v312 = vld [vmem:[%s4 + $0x8] sm:$0xff]
      loop: start=0, step=1, limit=23
      $region41: #{eeg_cnn_forward.3} parent=39 // loop_pre_header
        _
      $region42: #{eeg_cnn_forward.3} parent=39 // loop_header
        %s314 = sphi 0, %s318
        %p315 = scmp.ge.s32.totalorder %s314, 23
      $region43: #{eeg_cnn_forward.3} parent=39 // loop_header_branch
        %317 = sbr.rel (%p315) target = $region47
      $region44: #{eeg_cnn_forward.3} parent=39 // loop_body
        %s319 = scalar_lea.vmem %s229, %s314
        %v320 = vld [vmem:[%s319] sm:$0x1]
        %s321 = scalar_lea.vmem %s233, %s314
        %v322 = vld [vmem:[%s321] sm:$0x1]
        %v323 = vunpack.c.l.bf16 %v239
        %v324 = vunpack.c.l.bf16 %v240
        %v325 = vunpack.c.l.bf16 %v241
        %v326 = vunpack.c.l.bf16 %v242
        %v327 = vunpack.c.l.bf16 %v320
        %329 = vset.pattern.permute.xlu0 0
        %330 = vperm.xlu0 %329, %v323
        %v331 = vpop.permute.xlu0 %330
        %334 = vset.pattern.permute.xlu0 0
        %335 = vperm.xlu0 %334, %v324
        %v336 = vpop.permute.xlu0 %335
        %339 = vset.pattern.permute.xlu0 0
        %340 = vperm.xlu0 %339, %v325
        %v341 = vpop.permute.xlu0 %340
        %344 = vset.pattern.permute.xlu0 0
        %345 = vperm.xlu0 %344, %v326
        %v346 = vpop.permute.xlu0 %345
        %v348 = vperm.slane %v327, 0
        %v349 = vmul.f32 %v331, %v348
        %v350 = vmul.f32 %v336, %v348
        %v351 = vmul.f32 %v341, %v348
        %v352 = vmul.f32 %v346, %v348
        %v353 = vadd.f32 %v349, 0.0
        %v354 = vadd.f32 %v350, 0.0
        %v355 = vadd.f32 %v351, 0.0
        %v356 = vadd.f32 %v352, 0.0
        %v357 = vunpack.c.l.bf16 %v275
        %v358 = vunpack.c.l.bf16 %v276
        %v359 = vunpack.c.l.bf16 %v277
        %v360 = vunpack.c.l.bf16 %v278
        %v361 = vunpack.c.l.bf16 %v322
        %363 = vset.pattern.permute.xlu0 0
        %364 = vperm.xlu0 %363, %v357
        %v365 = vpop.permute.xlu0 %364
        %368 = vset.pattern.permute.xlu0 0
        %369 = vperm.xlu0 %368, %v358
        %v370 = vpop.permute.xlu0 %369
        %373 = vset.pattern.permute.xlu0 0
        %374 = vperm.xlu0 %373, %v359
        %v375 = vpop.permute.xlu0 %374
        %378 = vset.pattern.permute.xlu0 0
        %379 = vperm.xlu0 %378, %v360
        %v380 = vpop.permute.xlu0 %379
        %v382 = vperm.slane %v361, 0
        %v383 = vmul.f32 %v365, %v382
        %v384 = vmul.f32 %v370, %v382
        %v385 = vmul.f32 %v375, %v382
        %v386 = vmul.f32 %v380, %v382
        %v387 = vadd.f32 %v353, %v383
        %v388 = vadd.f32 %v354, %v384
        %v389 = vadd.f32 %v355, %v385
        %v390 = vadd.f32 %v356, %v386
        %v391 = vunpack.c.l.bf16 %v243
        %v392 = vunpack.c.l.bf16 %v244
        %v393 = vunpack.c.l.bf16 %v245
        %v394 = vunpack.c.l.bf16 %v246
        %396 = vset.pattern.permute.xlu0 0
        %397 = vperm.xlu0 %396, %v391
        %v398 = vpop.permute.xlu0 %397
        %401 = vset.pattern.permute.xlu0 0
        %402 = vperm.xlu0 %401, %v392
        %v403 = vpop.permute.xlu0 %402
        %406 = vset.pattern.permute.xlu0 0
        %407 = vperm.xlu0 %406, %v393
        %v408 = vpop.permute.xlu0 %407
        %411 = vset.pattern.permute.xlu0 0
        %412 = vperm.xlu0 %411, %v394
        %v413 = vpop.permute.xlu0 %412
        %v415 = vmul.f32 %v398, %v348
        %v416 = vmul.f32 %v403, %v348
        %v417 = vmul.f32 %v408, %v348
        %v418 = vmul.f32 %v413, %v348
        %423 = vrot.lane.b32.xlu0 %v415, 127
        %v424 = vpop.permute.xlu0 %423
        %425 = vrot.lane.b32.xlu0 %v416, 127
        %v426 = vpop.permute.xlu0 %425
        %427 = vrot.lane.b32.xlu0 %v417, 127
        %v428 = vpop.permute.xlu0 %427
        %429 = vrot.lane.b32.xlu0 %v418, 127
        %v430 = vpop.permute.xlu0 %429
        %v435 = vadd.f32 %v387, %v424
        %v436 = vadd.f32 %v388, %v426
        %v437 = vadd.f32 %v389, %v428
        %v438 = vadd.f32 %v390, %v430
        %v439 = vunpack.c.l.bf16 %v279
        %v440 = vunpack.c.l.bf16 %v280
        %v441 = vunpack.c.l.bf16 %v281
        %v442 = vunpack.c.l.bf16 %v282
        %444 = vset.pattern.permute.xlu0 0
        %445 = vperm.xlu0 %444, %v439
        %v446 = vpop.permute.xlu0 %445
        %449 = vset.pattern.permute.xlu0 0
        %450 = vperm.xlu0 %449, %v440
        %v451 = vpop.permute.xlu0 %450
        %454 = vset.pattern.permute.xlu0 0
        %455 = vperm.xlu0 %454, %v441
        %v456 = vpop.permute.xlu0 %455
        %459 = vset.pattern.permute.xlu0 0
        %460 = vperm.xlu0 %459, %v442
        %v461 = vpop.permute.xlu0 %460
        %v463 = vmul.f32 %v446, %v382
        %v464 = vmul.f32 %v451, %v382
        %v465 = vmul.f32 %v456, %v382
        %v466 = vmul.f32 %v461, %v382
        %471 = vrot.lane.b32.xlu0 %v463, 127
        %v472 = vpop.permute.xlu0 %471
        %473 = vrot.lane.b32.xlu0 %v464, 127
        %v474 = vpop.permute.xlu0 %473
        %475 = vrot.lane.b32.xlu0 %v465, 127
        %v476 = vpop.permute.xlu0 %475
        %477 = vrot.lane.b32.xlu0 %v466, 127
        %v478 = vpop.permute.xlu0 %477
        %v483 = vadd.f32 %v435, %v472
        %v484 = vadd.f32 %v436, %v474
        %v485 = vadd.f32 %v437, %v476
        %v486 = vadd.f32 %v438, %v478
        %v487 = vunpack.c.l.bf16 %v247
        %v488 = vunpack.c.l.bf16 %v248
        %v489 = vunpack.c.l.bf16 %v249
        %v490 = vunpack.c.l.bf16 %v250
        %492 = vset.pattern.permute.xlu0 0
        %493 = vperm.xlu0 %492, %v487
        %v494 = vpop.permute.xlu0 %493
        %497 = vset.pattern.permute.xlu0 0
        %498 = vperm.xlu0 %497, %v488
        %v499 = vpop.permute.xlu0 %498
        %502 = vset.pattern.permute.xlu0 0
        %503 = vperm.xlu0 %502, %v489
        %v504 = vpop.permute.xlu0 %503
        %507 = vset.pattern.permute.xlu0 0
        %508 = vperm.xlu0 %507, %v490
        %v509 = vpop.permute.xlu0 %508
        %v511 = vmul.f32 %v494, %v348
        %v512 = vmul.f32 %v499, %v348
        %v513 = vmul.f32 %v504, %v348
        %v514 = vmul.f32 %v509, %v348
        %519 = vrot.lane.b32.xlu0 %v511, 126
        %v520 = vpop.permute.xlu0 %519
        %521 = vrot.lane.b32.xlu0 %v512, 126
        %v522 = vpop.permute.xlu0 %521
        %523 = vrot.lane.b32.xlu0 %v513, 126
        %v524 = vpop.permute.xlu0 %523
        %525 = vrot.lane.b32.xlu0 %v514, 126
        %v526 = vpop.permute.xlu0 %525
        %v531 = vadd.f32 %v483, %v520
        %v532 = vadd.f32 %v484, %v522
        %v533 = vadd.f32 %v485, %v524
        %v534 = vadd.f32 %v486, %v526
        %v535 = vunpack.c.l.bf16 %v283
        %v536 = vunpack.c.l.bf16 %v284
        %v537 = vunpack.c.l.bf16 %v285
        %v538 = vunpack.c.l.bf16 %v286
        %540 = vset.pattern.permute.xlu0 0
        %541 = vperm.xlu0 %540, %v535
        %v542 = vpop.permute.xlu0 %541
        %545 = vset.pattern.permute.xlu0 0
        %546 = vperm.xlu0 %545, %v536
        %v547 = vpop.permute.xlu0 %546
        %550 = vset.pattern.permute.xlu0 0
        %551 = vperm.xlu0 %550, %v537
        %v552 = vpop.permute.xlu0 %551
        %555 = vset.pattern.permute.xlu0 0
        %556 = vperm.xlu0 %555, %v538
        %v557 = vpop.permute.xlu0 %556
        %v559 = vmul.f32 %v542, %v382
        %v560 = vmul.f32 %v547, %v382
        %v561 = vmul.f32 %v552, %v382
        %v562 = vmul.f32 %v557, %v382
        %567 = vrot.lane.b32.xlu0 %v559, 126
        %v568 = vpop.permute.xlu0 %567
        %569 = vrot.lane.b32.xlu0 %v560, 126
        %v570 = vpop.permute.xlu0 %569
        %571 = vrot.lane.b32.xlu0 %v561, 126
        %v572 = vpop.permute.xlu0 %571
        %573 = vrot.lane.b32.xlu0 %v562, 126
        %v574 = vpop.permute.xlu0 %573
        %v579 = vadd.f32 %v531, %v568
        %v580 = vadd.f32 %v532, %v570
        %v581 = vadd.f32 %v533, %v572
        %v582 = vadd.f32 %v534, %v574
        %s583 = sadd.s32 %s314, 1
        %s584 = scalar_lea.vmem %s229, %s583
        %v585 = vld [vmem:[%s584] sm:$0x1]
        %s586 = scalar_lea.vmem %s233, %s583
        %v587 = vld [vmem:[%s586] sm:$0x1]
        %v588 = vunpack.c.l.bf16 %v251
        %v589 = vunpack.c.l.bf16 %v252
        %v590 = vunpack.c.l.bf16 %v253
        %v591 = vunpack.c.l.bf16 %v254
        %v592 = vunpack.c.l.bf16 %v585
        %594 = vset.pattern.permute.xlu0 0
        %595 = vperm.xlu0 %594, %v588
        %v596 = vpop.permute.xlu0 %595
        %599 = vset.pattern.permute.xlu0 0
        %600 = vperm.xlu0 %599, %v589
        %v601 = vpop.permute.xlu0 %600
        %604 = vset.pattern.permute.xlu0 0
        %605 = vperm.xlu0 %604, %v590
        %v606 = vpop.permute.xlu0 %605
        %609 = vset.pattern.permute.xlu0 0
        %610 = vperm.xlu0 %609, %v591
        %v611 = vpop.permute.xlu0 %610
        %v613 = vperm.slane %v592, 0
        %v614 = vmul.f32 %v596, %v613
        %v615 = vmul.f32 %v601, %v613
        %v616 = vmul.f32 %v606, %v613
        %v617 = vmul.f32 %v611, %v613
        %v618 = vadd.f32 %v579, %v614
        %v619 = vadd.f32 %v580, %v615
        %v620 = vadd.f32 %v581, %v616
        %v621 = vadd.f32 %v582, %v617
        %v622 = vunpack.c.l.bf16 %v287
        %v623 = vunpack.c.l.bf16 %v288
        %v624 = vunpack.c.l.bf16 %v289
        %v625 = vunpack.c.l.bf16 %v290
        %v626 = vunpack.c.l.bf16 %v587
        %628 = vset.pattern.permute.xlu0 0
        %629 = vperm.xlu0 %628, %v622
        %v630 = vpop.permute.xlu0 %629
        %633 = vset.pattern.permute.xlu0 0
        %634 = vperm.xlu0 %633, %v623
        %v635 = vpop.permute.xlu0 %634
        %638 = vset.pattern.permute.xlu0 0
        %639 = vperm.xlu0 %638, %v624
        %v640 = vpop.permute.xlu0 %639
        %643 = vset.pattern.permute.xlu0 0
        %644 = vperm.xlu0 %643, %v625
        %v645 = vpop.permute.xlu0 %644
        %v647 = vperm.slane %v626, 0
        %v648 = vmul.f32 %v630, %v647
        %v649 = vmul.f32 %v635, %v647
        %v650 = vmul.f32 %v640, %v647
        %v651 = vmul.f32 %v645, %v647
        %v652 = vadd.f32 %v618, %v648
        %v653 = vadd.f32 %v619, %v649
        %v654 = vadd.f32 %v620, %v650
        %v655 = vadd.f32 %v621, %v651
        %v656 = vunpack.c.l.bf16 %v255
        %v657 = vunpack.c.l.bf16 %v256
        %v658 = vunpack.c.l.bf16 %v257
        %v659 = vunpack.c.l.bf16 %v258
        %661 = vset.pattern.permute.xlu0 0
        %662 = vperm.xlu0 %661, %v656
        %v663 = vpop.permute.xlu0 %662
        %666 = vset.pattern.permute.xlu0 0
        %667 = vperm.xlu0 %666, %v657
        %v668 = vpop.permute.xlu0 %667
        %671 = vset.pattern.permute.xlu0 0
        %672 = vperm.xlu0 %671, %v658
        %v673 = vpop.permute.xlu0 %672
        %676 = vset.pattern.permute.xlu0 0
        %677 = vperm.xlu0 %676, %v659
        %v678 = vpop.permute.xlu0 %677
        %v680 = vmul.f32 %v663, %v613
        %v681 = vmul.f32 %v668, %v613
        %v682 = vmul.f32 %v673, %v613
        %v683 = vmul.f32 %v678, %v613
        %688 = vrot.lane.b32.xlu0 %v680, 127
        %v689 = vpop.permute.xlu0 %688
        %690 = vrot.lane.b32.xlu0 %v681, 127
        %v691 = vpop.permute.xlu0 %690
        %692 = vrot.lane.b32.xlu0 %v682, 127
        %v693 = vpop.permute.xlu0 %692
        %694 = vrot.lane.b32.xlu0 %v683, 127
        %v695 = vpop.permute.xlu0 %694
        %v700 = vadd.f32 %v652, %v689
        %v701 = vadd.f32 %v653, %v691
        %v702 = vadd.f32 %v654, %v693
        %v703 = vadd.f32 %v655, %v695
        %v704 = vunpack.c.l.bf16 %v291
        %v705 = vunpack.c.l.bf16 %v292
        %v706 = vunpack.c.l.bf16 %v293
        %v707 = vunpack.c.l.bf16 %v294
        %709 = vset.pattern.permute.xlu0 0
        %710 = vperm.xlu0 %709, %v704
        %v711 = vpop.permute.xlu0 %710
        %714 = vset.pattern.permute.xlu0 0
        %715 = vperm.xlu0 %714, %v705
        %v716 = vpop.permute.xlu0 %715
        %719 = vset.pattern.permute.xlu0 0
        %720 = vperm.xlu0 %719, %v706
        %v721 = vpop.permute.xlu0 %720
        %724 = vset.pattern.permute.xlu0 0
        %725 = vperm.xlu0 %724, %v707
        %v726 = vpop.permute.xlu0 %725
        %v728 = vmul.f32 %v711, %v647
        %v729 = vmul.f32 %v716, %v647
        %v730 = vmul.f32 %v721, %v647
        %v731 = vmul.f32 %v726, %v647
        %736 = vrot.lane.b32.xlu0 %v728, 127
        %v737 = vpop.permute.xlu0 %736
        %738 = vrot.lane.b32.xlu0 %v729, 127
        %v739 = vpop.permute.xlu0 %738
        %740 = vrot.lane.b32.xlu0 %v730, 127
        %v741 = vpop.permute.xlu0 %740
        %742 = vrot.lane.b32.xlu0 %v731, 127
        %v743 = vpop.permute.xlu0 %742
        %v748 = vadd.f32 %v700, %v737
        %v749 = vadd.f32 %v701, %v739
        %v750 = vadd.f32 %v702, %v741
        %v751 = vadd.f32 %v703, %v743
        %v752 = vunpack.c.l.bf16 %v259
        %v753 = vunpack.c.l.bf16 %v260
        %v754 = vunpack.c.l.bf16 %v261
        %v755 = vunpack.c.l.bf16 %v262
        %757 = vset.pattern.permute.xlu0 0
        %758 = vperm.xlu0 %757, %v752
        %v759 = vpop.permute.xlu0 %758
        %762 = vset.pattern.permute.xlu0 0
        %763 = vperm.xlu0 %762, %v753
        %v764 = vpop.permute.xlu0 %763
        %767 = vset.pattern.permute.xlu0 0
        %768 = vperm.xlu0 %767, %v754
        %v769 = vpop.permute.xlu0 %768
        %772 = vset.pattern.permute.xlu0 0
        %773 = vperm.xlu0 %772, %v755
        %v774 = vpop.permute.xlu0 %773
        %v776 = vmul.f32 %v759, %v613
        %v777 = vmul.f32 %v764, %v613
        %v778 = vmul.f32 %v769, %v613
        %v779 = vmul.f32 %v774, %v613
        %784 = vrot.lane.b32.xlu0 %v776, 126
        %v785 = vpop.permute.xlu0 %784
        %786 = vrot.lane.b32.xlu0 %v777, 126
        %v787 = vpop.permute.xlu0 %786
        %788 = vrot.lane.b32.xlu0 %v778, 126
        %v789 = vpop.permute.xlu0 %788
        %790 = vrot.lane.b32.xlu0 %v779, 126
        %v791 = vpop.permute.xlu0 %790
        %v796 = vadd.f32 %v748, %v785
        %v797 = vadd.f32 %v749, %v787
        %v798 = vadd.f32 %v750, %v789
        %v799 = vadd.f32 %v751, %v791
        %v800 = vunpack.c.l.bf16 %v295
        %v801 = vunpack.c.l.bf16 %v296
        %v802 = vunpack.c.l.bf16 %v297
        %v803 = vunpack.c.l.bf16 %v298
        %805 = vset.pattern.permute.xlu0 0
        %806 = vperm.xlu0 %805, %v800
        %v807 = vpop.permute.xlu0 %806
        %810 = vset.pattern.permute.xlu0 0
        %811 = vperm.xlu0 %810, %v801
        %v812 = vpop.permute.xlu0 %811
        %815 = vset.pattern.permute.xlu0 0
        %816 = vperm.xlu0 %815, %v802
        %v817 = vpop.permute.xlu0 %816
        %820 = vset.pattern.permute.xlu0 0
        %821 = vperm.xlu0 %820, %v803
        %v822 = vpop.permute.xlu0 %821
        %v824 = vmul.f32 %v807, %v647
        %v825 = vmul.f32 %v812, %v647
        %v826 = vmul.f32 %v817, %v647
        %v827 = vmul.f32 %v822, %v647
        %832 = vrot.lane.b32.xlu0 %v824, 126
        %v833 = vpop.permute.xlu0 %832
        %834 = vrot.lane.b32.xlu0 %v825, 126
        %v835 = vpop.permute.xlu0 %834
        %836 = vrot.lane.b32.xlu0 %v826, 126
        %v837 = vpop.permute.xlu0 %836
        %838 = vrot.lane.b32.xlu0 %v827, 126
        %v839 = vpop.permute.xlu0 %838
        %v844 = vadd.f32 %v796, %v833
        %v845 = vadd.f32 %v797, %v835
        %v846 = vadd.f32 %v798, %v837
        %v847 = vadd.f32 %v799, %v839
        %s848 = sadd.s32 %s314, 2
        %s849 = scalar_lea.vmem %s229, %s848
        %v850 = vld [vmem:[%s849] sm:$0x1]
        %s851 = scalar_lea.vmem %s233, %s848
        %v852 = vld [vmem:[%s851] sm:$0x1]
        %v853 = vunpack.c.l.bf16 %v263
        %v854 = vunpack.c.l.bf16 %v264
        %v855 = vunpack.c.l.bf16 %v265
        %v856 = vunpack.c.l.bf16 %v266
        %v857 = vunpack.c.l.bf16 %v850
        %859 = vset.pattern.permute.xlu0 0
        %860 = vperm.xlu0 %859, %v853
        %v861 = vpop.permute.xlu0 %860
        %864 = vset.pattern.permute.xlu0 0
        %865 = vperm.xlu0 %864, %v854
        %v866 = vpop.permute.xlu0 %865
        %869 = vset.pattern.permute.xlu0 0
        %870 = vperm.xlu0 %869, %v855
        %v871 = vpop.permute.xlu0 %870
        %874 = vset.pattern.permute.xlu0 0
        %875 = vperm.xlu0 %874, %v856
        %v876 = vpop.permute.xlu0 %875
        %v878 = vperm.slane %v857, 0
        %v879 = vmul.f32 %v861, %v878
        %v880 = vmul.f32 %v866, %v878
        %v881 = vmul.f32 %v871, %v878
        %v882 = vmul.f32 %v876, %v878
        %v883 = vadd.f32 %v844, %v879
        %v884 = vadd.f32 %v845, %v880
        %v885 = vadd.f32 %v846, %v881
        %v886 = vadd.f32 %v847, %v882
        %v887 = vunpack.c.l.bf16 %v299
        %v888 = vunpack.c.l.bf16 %v300
        %v889 = vunpack.c.l.bf16 %v301
        %v890 = vunpack.c.l.bf16 %v302
        %v891 = vunpack.c.l.bf16 %v852
        %893 = vset.pattern.permute.xlu0 0
        %894 = vperm.xlu0 %893, %v887
        %v895 = vpop.permute.xlu0 %894
        %898 = vset.pattern.permute.xlu0 0
        %899 = vperm.xlu0 %898, %v888
        %v900 = vpop.permute.xlu0 %899
        %903 = vset.pattern.permute.xlu0 0
        %904 = vperm.xlu0 %903, %v889
        %v905 = vpop.permute.xlu0 %904
        %908 = vset.pattern.permute.xlu0 0
        %909 = vperm.xlu0 %908, %v890
        %v910 = vpop.permute.xlu0 %909
        %v912 = vperm.slane %v891, 0
        %v913 = vmul.f32 %v895, %v912
        %v914 = vmul.f32 %v900, %v912
        %v915 = vmul.f32 %v905, %v912
        %v916 = vmul.f32 %v910, %v912
        %v917 = vadd.f32 %v883, %v913
        %v918 = vadd.f32 %v884, %v914
        %v919 = vadd.f32 %v885, %v915
        %v920 = vadd.f32 %v886, %v916
        %v921 = vunpack.c.l.bf16 %v267
        %v922 = vunpack.c.l.bf16 %v268
        %v923 = vunpack.c.l.bf16 %v269
        %v924 = vunpack.c.l.bf16 %v270
        %926 = vset.pattern.permute.xlu0 0
        %927 = vperm.xlu0 %926, %v921
        %v928 = vpop.permute.xlu0 %927
        %931 = vset.pattern.permute.xlu0 0
        %932 = vperm.xlu0 %931, %v922
        %v933 = vpop.permute.xlu0 %932
        %936 = vset.pattern.permute.xlu0 0
        %937 = vperm.xlu0 %936, %v923
        %v938 = vpop.permute.xlu0 %937
        %941 = vset.pattern.permute.xlu0 0
        %942 = vperm.xlu0 %941, %v924
        %v943 = vpop.permute.xlu0 %942
        %v945 = vmul.f32 %v928, %v878
        %v946 = vmul.f32 %v933, %v878
        %v947 = vmul.f32 %v938, %v878
        %v948 = vmul.f32 %v943, %v878
        %953 = vrot.lane.b32.xlu0 %v945, 127
        %v954 = vpop.permute.xlu0 %953
        %955 = vrot.lane.b32.xlu0 %v946, 127
        %v956 = vpop.permute.xlu0 %955
        %957 = vrot.lane.b32.xlu0 %v947, 127
        %v958 = vpop.permute.xlu0 %957
        %959 = vrot.lane.b32.xlu0 %v948, 127
        %v960 = vpop.permute.xlu0 %959
        %v965 = vadd.f32 %v917, %v954
        %v966 = vadd.f32 %v918, %v956
        %v967 = vadd.f32 %v919, %v958
        %v968 = vadd.f32 %v920, %v960
        %v969 = vunpack.c.l.bf16 %v303
        %v970 = vunpack.c.l.bf16 %v304
        %v971 = vunpack.c.l.bf16 %v305
        %v972 = vunpack.c.l.bf16 %v306
        %974 = vset.pattern.permute.xlu0 0
        %975 = vperm.xlu0 %974, %v969
        %v976 = vpop.permute.xlu0 %975
        %979 = vset.pattern.permute.xlu0 0
        %980 = vperm.xlu0 %979, %v970
        %v981 = vpop.permute.xlu0 %980
        %984 = vset.pattern.permute.xlu0 0
        %985 = vperm.xlu0 %984, %v971
        %v986 = vpop.permute.xlu0 %985
        %989 = vset.pattern.permute.xlu0 0
        %990 = vperm.xlu0 %989, %v972
        %v991 = vpop.permute.xlu0 %990
        %v993 = vmul.f32 %v976, %v912
        %v994 = vmul.f32 %v981, %v912
        %v995 = vmul.f32 %v986, %v912
        %v996 = vmul.f32 %v991, %v912
        %1001 = vrot.lane.b32.xlu0 %v993, 127
        %v1002 = vpop.permute.xlu0 %1001
        %1003 = vrot.lane.b32.xlu0 %v994, 127
        %v1004 = vpop.permute.xlu0 %1003
        %1005 = vrot.lane.b32.xlu0 %v995, 127
        %v1006 = vpop.permute.xlu0 %1005
        %1007 = vrot.lane.b32.xlu0 %v996, 127
        %v1008 = vpop.permute.xlu0 %1007
        %v1013 = vadd.f32 %v965, %v1002
        %v1014 = vadd.f32 %v966, %v1004
        %v1015 = vadd.f32 %v967, %v1006
        %v1016 = vadd.f32 %v968, %v1008
        %v1017 = vunpack.c.l.bf16 %v271
        %v1018 = vunpack.c.l.bf16 %v272
        %v1019 = vunpack.c.l.bf16 %v273
        %v1020 = vunpack.c.l.bf16 %v274
        %1022 = vset.pattern.permute.xlu0 0
        %1023 = vperm.xlu0 %1022, %v1017
        %v1024 = vpop.permute.xlu0 %1023
        %1027 = vset.pattern.permute.xlu0 0
        %1028 = vperm.xlu0 %1027, %v1018
        %v1029 = vpop.permute.xlu0 %1028
        %1032 = vset.pattern.permute.xlu0 0
        %1033 = vperm.xlu0 %1032, %v1019
        %v1034 = vpop.permute.xlu0 %1033
        %1037 = vset.pattern.permute.xlu0 0
        %1038 = vperm.xlu0 %1037, %v1020
        %v1039 = vpop.permute.xlu0 %1038
        %v1041 = vmul.f32 %v1024, %v878
        %v1042 = vmul.f32 %v1029, %v878
        %v1043 = vmul.f32 %v1034, %v878
        %v1044 = vmul.f32 %v1039, %v878
        %1049 = vrot.lane.b32.xlu0 %v1041, 126
        %v1050 = vpop.permute.xlu0 %1049
        %1051 = vrot.lane.b32.xlu0 %v1042, 126
        %v1052 = vpop.permute.xlu0 %1051
        %1053 = vrot.lane.b32.xlu0 %v1043, 126
        %v1054 = vpop.permute.xlu0 %1053
        %1055 = vrot.lane.b32.xlu0 %v1044, 126
        %v1056 = vpop.permute.xlu0 %1055
        %v1061 = vadd.f32 %v1013, %v1050
        %v1062 = vadd.f32 %v1014, %v1052
        %v1063 = vadd.f32 %v1015, %v1054
        %v1064 = vadd.f32 %v1016, %v1056
        %v1065 = vunpack.c.l.bf16 %v307
        %v1066 = vunpack.c.l.bf16 %v308
        %v1067 = vunpack.c.l.bf16 %v309
        %v1068 = vunpack.c.l.bf16 %v310
        %1070 = vset.pattern.permute.xlu0 0
        %1071 = vperm.xlu0 %1070, %v1065
        %v1072 = vpop.permute.xlu0 %1071
        %1075 = vset.pattern.permute.xlu0 0
        %1076 = vperm.xlu0 %1075, %v1066
        %v1077 = vpop.permute.xlu0 %1076
        %1080 = vset.pattern.permute.xlu0 0
        %1081 = vperm.xlu0 %1080, %v1067
        %v1082 = vpop.permute.xlu0 %1081
        %1085 = vset.pattern.permute.xlu0 0
        %1086 = vperm.xlu0 %1085, %v1068
        %v1087 = vpop.permute.xlu0 %1086
        %v1089 = vmul.f32 %v1072, %v912
        %v1090 = vmul.f32 %v1077, %v912
        %v1091 = vmul.f32 %v1082, %v912
        %v1092 = vmul.f32 %v1087, %v912
        %1097 = vrot.lane.b32.xlu0 %v1089, 126
        %v1098 = vpop.permute.xlu0 %1097
        %1099 = vrot.lane.b32.xlu0 %v1090, 126
        %v1100 = vpop.permute.xlu0 %1099
        %1101 = vrot.lane.b32.xlu0 %v1091, 126
        %v1102 = vpop.permute.xlu0 %1101
        %1103 = vrot.lane.b32.xlu0 %v1092, 126
        %v1104 = vpop.permute.xlu0 %1103
        %v1109 = vadd.f32 %v1061, %v1098
        %v1110 = vadd.f32 %v1062, %v1100
        %v1111 = vadd.f32 %v1063, %v1102
        %v1112 = vadd.f32 %v1064, %v1104
        %v1113 = vmax.f32 %v1109, %v1111
        %v1114 = vmax.f32 %v1110, %v1112
        %1116 = vset.pattern.permute.xlu0 0
        %1117 = vperm.xlu0 %1116, %v311
        %v1118 = vpop.permute.xlu0 %1117
        %1121 = vset.pattern.permute.xlu0 0
        %1122 = vperm.xlu0 %1121, %v312
        %v1123 = vpop.permute.xlu0 %1122
        %v1125 = vadd.f32 %v1113, %v1118
        %v1126 = vadd.f32 %v1114, %v1123
        %v1127 = vmax.f32 %v1125, 0.0
        %v1128 = vmax.f32 %v1126, 0.0
        %v1129 = vpack.c.bf16 %v1127, %v1127
        %v1130 = vpack.c.bf16 %v1128, %v1128
        %s1131 = smul.u32 %s314, 2
        %s1132 = smul.addr %s1131, 4
        %s1133 = scalar_lea.vmem %s238, %s1132
        %vm1134 = vcmask 257024
        %1135 = vst.msk [vmem:[%s1133] sm:$0xf] %vm1134, %v1129
        %1136 = vst.msk [vmem:[%s1133 + $0x4] sm:$0xf] %vm1134, %v1130
      $region45: #{eeg_cnn_forward.3} parent=39 // loop_footer
        %s318 = sadd.s32 1, %s314
      $region46: #{eeg_cnn_forward.3} parent=39 // loop_footer_branch
        %313 = sbr.rel target = $region42
      $region47: #{eeg_cnn_forward.3} parent=39 // loop_exit
        _
      %p1137 = scmp.lt.s32.totalorder %s16, 1
      %s1138 = scalar_select %p1137, %s16, 1
      %s1139 = smul.addr %s1138, 46
      %s1140 = smul.addr %s1139, 4
      %s1141 = scalar_lea.vmem %s5, %s1140
      // Predicated region
      $region48: #{eeg_cnn_forward.3} parent=39 // pred_check
        %p1142 = pneg %p149
      $region49: #{eeg_cnn_forward.3} parent=39 // pred_check_branch
        %1144 = sbr.rel (%p1142) target = $region51
      $region50: #{eeg_cnn_forward.3} parent=39 // pred_region
        _
      $region51: #{eeg_cnn_forward.3} parent=39 // pred_fallthru
        _
    $region40: #{eeg_cnn_forward.3} parent=5 // pred_fallthru
      _
    %p1145 = scmp.le.s32.totalorder 2, %s11
    // Predicated region
    $region52: #{eeg_cnn_forward.3} parent=5 // pred_check
      %p1146 = pneg %p1145
    $region53: #{eeg_cnn_forward.3} parent=5 // pred_check_branch
      %1148 = sbr.rel (%p1146) target = $region55
    $region54: #{eeg_cnn_forward.3} parent=5 // pred_region
      %s1149 = ssub.s32 %s11, 2
      // Predicated region
      $region56: #{eeg_cnn_forward.3} parent=54 // pred_check
        %p1150 = pneg %p155
      $region57: #{eeg_cnn_forward.3} parent=54 // pred_check_branch
        %1152 = sbr.rel (%p1150) target = $region59
      $region58: #{eeg_cnn_forward.3} parent=54 // pred_region
        %p1153 = scmp.lt.s32.totalorder %s17, 1
        %s1154 = scalar_select %p1153, %s17, 1
        %s1155 = smul.addr %s1154, 46
        %s1156 = smul.addr %s1155, 4
        %s1157 = scalar_lea.vmem %s5, %s1156
      $region59: #{eeg_cnn_forward.3} parent=54 // pred_fallthru
        _
    $region55: #{eeg_cnn_forward.3} parent=5 // pred_fallthru
      _
  $region6: #{eeg_cnn_forward.3} parent=0 // loop_footer
    %s15 = sadd.s32 1, %s11
  $region7: #{eeg_cnn_forward.3} parent=0 // loop_footer_branch
    %10 = sbr.rel target = $region3
  $region8: #{eeg_cnn_forward.3} parent=0 // loop_exit
    _

// kernel: eeg_cnn_forward.4
$region0: #{eeg_cnn_forward.4}
  #allocation0 [shape = 'u32[]', space=smem, size = 0x4, offset = 0x4, fixed_abs, tag = 'smem constant byte address 0x4 - core index']
  #allocation1 [shape = 'u32[72,128]{1,0:T(1,128)}', space=vmem, size = 0x9000, scoped, tag = 'internal scratch']
  %s0 = inlined_call_operand.vmem [shape: bf16[2,25,16,18], index: 0, kind: input, shape index: {}]
  %s1 = inlined_call_operand.vmem [shape: bf16[2,25,16,18], index: 1, kind: input, shape index: {}]
  %s2 = inlined_call_operand.vmem [shape: bf16[9,64,16], index: 2, kind: input, shape index: {}]
  %s3 = inlined_call_operand.vmem [shape: bf16[9,64,16], index: 3, kind: input, shape index: {}]
  %s4 = inlined_call_operand.vmem [shape: f32[32,1], index: 4, kind: input, shape index: {}]
  %s5 = inlined_call_operand.vmem [shape: bf16[2,23,32,16], index: 5, kind: output, shape index: {}]
  %s6 = sld [smem:[#allocation0]]
  $region60: #{eeg_cnn_forward.4} parent=0
    _
  %s8 = ssub.s32 1, %s6
  %s9 = scalar_select 0, %s8, %s6
  loop: start=0, step=1, limit=4
  $region2: #{eeg_cnn_forward.4} parent=0 // loop_pre_header
    _
  $region3: #{eeg_cnn_forward.4} parent=0 // loop_header
    %s11 = sphi 0, %s15
    %p12 = scmp.ge.s32.totalorder %s11, 4
    %s21 = sphi 0, %s23
    %s24 = sphi 0, %s21
    %s25 = sphi 0, %s24
    %s41 = sphi 0, %s25
    %s47 = sphi 0, %s49
    %s50 = sphi 0, %s47
    %s51 = sphi 0, %s50
    %s67 = sphi 0, %s51
    %s71 = sphi 0, %s71
    %s73 = sphi 0, %s71
    %s74 = sphi 0, %s73
    %s88 = sphi 0, %s74
    %s92 = sphi 0, %s92
    %s94 = sphi 0, %s92
    %s95 = sphi 0, %s94
    %s109 = sphi 0, %s95
    %s113 = sphi 0, %s113
    %s115 = sphi 0, %s113
    %s116 = sphi 0, %s115
    %s130 = sphi 0, %s116
    %s136 = sphi 0, %s138
    %s139 = sphi 0, %s136
    %s140 = sphi 0, %s139
    %s156 = sphi 0, %s140
  $region4: #{eeg_cnn_forward.4} parent=0 // loop_header_branch
    %14 = sbr.rel (%p12) target = $region8
  $region5: #{eeg_cnn_forward.4} parent=0 // loop_body
    %s16 = ssub.s32 %s11, 1
    %s17 = ssub.s32 %s11, 2
    %s18 = sadd.s32 %s11, 1
    %s19 = ssub.s32 %s11, %s18
    %p20 = scmp.eq.s32.totalorder %s19, 0
    %s22 = sadd.s32 %s21, 1
    %s23 = scalar_select %p20, %s21, %s22
    %p26 = pneg %p20
    %p27 = scmp.eq.s32.totalorder %s11, 1
    %p28 = por %p26, %p27
    %p29 = scmp.ne.s32.totalorder %s21, %s24
    %p30 = scmp.eq.s32.totalorder %s11, 0
    %p31 = por %p29, %p30
    %p32 = scmp.ne.s32.totalorder %s21, %s24
    %p33 = scmp.eq.s32.totalorder %s16, 1
    %p34 = por %p32, %p33
    %p35 = scmp.ne.s32.totalorder %s24, %s25
    %p36 = scmp.eq.s32.totalorder %s16, 0
    %p37 = por %p35, %p36
    %p38 = scmp.ne.s32.totalorder %s24, %s25
    %p39 = scmp.eq.s32.totalorder %s17, 1
    %p40 = por %p38, %p39
    %p42 = scmp.ne.s32.totalorder %s25, %s41
    %p43 = scmp.eq.s32.totalorder %s17, 0
    %p44 = por %p42, %p43
    %s45 = ssub.s32 %s11, %s18
    %p46 = scmp.eq.s32.totalorder %s45, 0
    %s48 = sadd.s32 %s47, 1
    %s49 = scalar_select %p46, %s47, %s48
    %p52 = pneg %p46
    %p53 = scmp.eq.s32.totalorder %s11, 1
    %p54 = por %p52, %p53
    %p55 = scmp.ne.s32.totalorder %s47, %s50
    %p56 = scmp.eq.s32.totalorder %s11, 0
    %p57 = por %p55, %p56
    %p58 = scmp.ne.s32.totalorder %s47, %s50
    %p59 = scmp.eq.s32.totalorder %s16, 1
    %p60 = por %p58, %p59
    %p61 = scmp.ne.s32.totalorder %s50, %s51
    %p62 = scmp.eq.s32.totalorder %s16, 0
    %p63 = por %p61, %p62
    %p64 = scmp.ne.s32.totalorder %s50, %s51
    %p65 = scmp.eq.s32.totalorder %s17, 1
    %p66 = por %p64, %p65
    %p68 = scmp.ne.s32.totalorder %s51, %s67
    %p69 = scmp.eq.s32.totalorder %s17, 0
    %p70 = por %p68, %p69
    %s72 = sadd.s32 %s71, 1
    %p75 = scmp.eq.s32.totalorder %s11, 1
    %p76 = scmp.ne.s32.totalorder %s71, %s73
    %p77 = scmp.eq.s32.totalorder %s11, 0
    %p78 = por %p76, %p77
    %p79 = scmp.ne.s32.totalorder %s71, %s73
    %p80 = scmp.eq.s32.totalorder %s16, 1
    %p81 = por %p79, %p80
    %p82 = scmp.ne.s32.totalorder %s73, %s74
    %p83 = scmp.eq.s32.totalorder %s16, 0
    %p84 = por %p82, %p83
    %p85 = scmp.ne.s32.totalorder %s73, %s74
    %p86 = scmp.eq.s32.totalorder %s17, 1
    %p87 = por %p85, %p86
    %p89 = scmp.ne.s32.totalorder %s74, %s88
    %p90 = scmp.eq.s32.totalorder %s17, 0
    %p91 = por %p89, %p90
    %s93 = sadd.s32 %s92, 1
    %p96 = scmp.eq.s32.totalorder %s11, 1
    %p97 = scmp.ne.s32.totalorder %s92, %s94
    %p98 = scmp.eq.s32.totalorder %s11, 0
    %p99 = por %p97, %p98
    %p100 = scmp.ne.s32.totalorder %s92, %s94
    %p101 = scmp.eq.s32.totalorder %s16, 1
    %p102 = por %p100, %p101
    %p103 = scmp.ne.s32.totalorder %s94, %s95
    %p104 = scmp.eq.s32.totalorder %s16, 0
    %p105 = por %p103, %p104
    %p106 = scmp.ne.s32.totalorder %s94, %s95
    %p107 = scmp.eq.s32.totalorder %s17, 1
    %p108 = por %p106, %p107
    %p110 = scmp.ne.s32.totalorder %s95, %s109
    %p111 = scmp.eq.s32.totalorder %s17, 0
    %p112 = por %p110, %p111
    %s114 = sadd.s32 %s113, 1
    %p117 = scmp.eq.s32.totalorder %s11, 1
    %p118 = scmp.ne.s32.totalorder %s113, %s115
    %p119 = scmp.eq.s32.totalorder %s11, 0
    %p120 = por %p118, %p119
    %p121 = scmp.ne.s32.totalorder %s113, %s115
    %p122 = scmp.eq.s32.totalorder %s16, 1
    %p123 = por %p121, %p122
    %p124 = scmp.ne.s32.totalorder %s115, %s116
    %p125 = scmp.eq.s32.totalorder %s16, 0
    %p126 = por %p124, %p125
    %p127 = scmp.ne.s32.totalorder %s115, %s116
    %p128 = scmp.eq.s32.totalorder %s17, 1
    %p129 = por %p127, %p128
    %p131 = scmp.ne.s32.totalorder %s116, %s130
    %p132 = scmp.eq.s32.totalorder %s17, 0
    %p133 = por %p131, %p132
    %s134 = ssub.s32 %s11, %s18
    %p135 = scmp.eq.s32.totalorder %s134, 0
    %s137 = sadd.s32 %s136, 1
    %s138 = scalar_select %p135, %s136, %s137
    %p141 = pneg %p135
    %p142 = scmp.eq.s32.totalorder %s11, 1
    %p143 = por %p141, %p142
    %p144 = scmp.ne.s32.totalorder %s136, %s139
    %p145 = scmp.eq.s32.totalorder %s11, 0
    %p146 = por %p144, %p145
    %p147 = scmp.ne.s32.totalorder %s136, %s139
    %p148 = scmp.eq.s32.totalorder %s16, 1
    %p149 = por %p147, %p148
    %p150 = scmp.ne.s32.totalorder %s139, %s140
    %p151 = scmp.eq.s32.totalorder %s16, 0
    %p152 = por %p150, %p151
    %p153 = scmp.ne.s32.totalorder %s139, %s140
    %p154 = scmp.eq.s32.totalorder %s17, 1
    %p155 = por %p153, %p154
    %p157 = scmp.ne.s32.totalorder %s140, %s156
    %p158 = scmp.eq.s32.totalorder %s17, 0
    %p159 = por %p157, %p158
    %p160 = scmp.le.s32.totalorder 1, %s11
    %p161 = scmp.lt.s32.totalorder %s11, 3
    %p162 = pnand %p160, %p161
    %p163 = pneg %p162
    // Predicated region
    $region9: #{eeg_cnn_forward.4} parent=5 // pred_check
      _
    $region10: #{eeg_cnn_forward.4} parent=5 // pred_check_branch
      %165 = sbr.rel (%p162) target = $region12
    $region11: #{eeg_cnn_forward.4} parent=5 // pred_region
      %s166 = ssub.s32 %s11, 1
      // Predicated region
      $region13: #{eeg_cnn_forward.4} parent=11 // pred_check
        %p167 = pneg %p84
      $region14: #{eeg_cnn_forward.4} parent=11 // pred_check_branch
        %169 = sbr.rel (%p167) target = $region16
      $region15: #{eeg_cnn_forward.4} parent=11 // pred_region
        _
      $region16: #{eeg_cnn_forward.4} parent=11 // pred_fallthru
        _
      // Predicated region
      $region17: #{eeg_cnn_forward.4} parent=11 // pred_check
        %p170 = pneg %p105
      $region18: #{eeg_cnn_forward.4} parent=11 // pred_check_branch
        %172 = sbr.rel (%p170) target = $region20
      $region19: #{eeg_cnn_forward.4} parent=11 // pred_region
        _
      $region20: #{eeg_cnn_forward.4} parent=11 // pred_fallthru
        _
      // Predicated region
      $region21: #{eeg_cnn_forward.4} parent=11 // pred_check
        %p173 = pneg %p126
      $region22: #{eeg_cnn_forward.4} parent=11 // pred_check_branch
        %175 = sbr.rel (%p173) target = $region24
      $region23: #{eeg_cnn_forward.4} parent=11 // pred_region
        _
      $region24: #{eeg_cnn_forward.4} parent=11 // pred_fallthru
        _
    $region12: #{eeg_cnn_forward.4} parent=5 // pred_fallthru
      _
    %p176 = scmp.lt.s32.totalorder %s11, 2
    // Predicated region
    $region25: #{eeg_cnn_forward.4} parent=5 // pred_check
      %p177 = pneg %p176
    $region26: #{eeg_cnn_forward.4} parent=5 // pred_check_branch
      %179 = sbr.rel (%p177) target = $region28
    $region27: #{eeg_cnn_forward.4} parent=5 // pred_region
      // Predicated region
      $region29: #{eeg_cnn_forward.4} parent=27 // pred_check
        %p180 = pneg %p31
      $region30: #{eeg_cnn_forward.4} parent=27 // pred_check_branch
        %182 = sbr.rel (%p180) target = $region32
      $region31: #{eeg_cnn_forward.4} parent=27 // pred_region
        %p183 = scmp.lt.s32.totalorder %s11, 1
        %s184 = scalar_select %p183, %s11, 1
        %s185 = smul.addr %s184, 50
        %s186 = smul.addr %s185, 4
        %s187 = scalar_lea.vmem %s0, %s186
      $region32: #{eeg_cnn_forward.4} parent=27 // pred_fallthru
        _
      // Predicated region
      $region33: #{eeg_cnn_forward.4} parent=27 // pred_check
        %p188 = pneg %p57
      $region34: #{eeg_cnn_forward.4} parent=27 // pred_check_branch
        %190 = sbr.rel (%p188) target = $region36
      $region35: #{eeg_cnn_forward.4} parent=27 // pred_region
        %p191 = scmp.lt.s32.totalorder %s11, 1
        %s192 = scalar_select %p191, %s11, 1
        %s193 = smul.addr %s192, 50
        %s194 = smul.addr %s193, 4
        %s195 = scalar_lea.vmem %s1, %s194
      $region36: #{eeg_cnn_forward.4} parent=27 // pred_fallthru
        _
    $region28: #{eeg_cnn_forward.4} parent=5 // pred_fallthru
      _
    %p196 = scmp.le.s32.totalorder 1, %s11
    %p197 = scmp.lt.s32.totalorder %s11, 3
    %p198 = pnand %p196, %p197
    %p199 = pneg %p198
    // Predicated region
    $region37: #{eeg_cnn_forward.4} parent=5 // pred_check
      _
    $region38: #{eeg_cnn_forward.4} parent=5 // pred_check_branch
      %201 = sbr.rel (%p198) target = $region40
    $region39: #{eeg_cnn_forward.4} parent=5 // pred_region
      %s202 = ssub.s32 %s11, 1
      %p203 = scmp.lt.s32.totalorder %s16, 1
      %s204 = scalar_select %p203, %s16, 1
      %s205 = smul.addr %s204, 50
      %s206 = smul.addr %s205, 4
      %s207 = scalar_lea.vmem %s0, %s206
      %p208 = pneg %p37
      %p209 = pneg %p34
      %p210 = scmp.lt.s32.totalorder %s16, 1
      %s211 = scalar_select %p210, %s16, 1
      %s212 = smul.addr %s211, 50
      %s213 = smul.addr %s212, 4
      %s214 = scalar_lea.vmem %s1, %s213
      %p215 = pneg %p63
      %p216 = pneg %p60
      %p217 = pneg %p84
      %p218 = pneg %p81
      %p219 = pneg %p105
      %p220 = pneg %p102
      %p221 = pneg %p126
      %p222 = pneg %p123
      %p223 = pneg %p152
      %p224 = pneg %p149
      %p225 = scmp.lt.s32.totalorder %s16, 1
      %s226 = scalar_select %p225, %s16, 1
      %s227 = smul.addr %s226, 92
      %s228 = smul.addr %s227, 4
      %s229 = scalar_lea.vmem %s5, %s228
      %p230 = scmp.lt.s32.totalorder %s16, 1
      %s231 = scalar_select %p230, %s16, 1
      %s232 = smul.addr %s231, 50
      %s233 = smul.addr %s232, 4
      %s234 = scalar_lea.vmem %s0, %s233
      %p235 = scmp.lt.s32.totalorder %s16, 1
      %s236 = scalar_select %p235, %s16, 1
      %s237 = smul.addr %s236, 50
      %s238 = smul.addr %s237, 4
      %s239 = scalar_lea.vmem %s1, %s238
      %p240 = scmp.lt.s32.totalorder %s16, 1
      %s241 = scalar_select %p240, %s16, 1
      %s242 = smul.addr %s241, 92
      %s243 = smul.addr %s242, 4
      %s244 = scalar_lea.vmem %s5, %s243
      %v246 = vld [vmem:[%s2] sm:$0xf]
      %v247 = vld [vmem:[%s2 + $0x4] sm:$0xf]
      %v248 = vld [vmem:[%s2 + $0x8] sm:$0xf]
      %v249 = vld [vmem:[%s2 + $0xc] sm:$0xf]
      %v250 = vld [vmem:[%s2 + $0x10] sm:$0xf]
      %v251 = vld [vmem:[%s2 + $0x14] sm:$0xf]
      %v252 = vld [vmem:[%s2 + $0x18] sm:$0xf]
      %v253 = vld [vmem:[%s2 + $0x1c] sm:$0xf]
      %v254 = vld [vmem:[%s2 + $0x20] sm:$0xf]
      %v255 = vld [vmem:[%s2 + $0x24] sm:$0xf]
      %v256 = vld [vmem:[%s2 + $0x28] sm:$0xf]
      %v257 = vld [vmem:[%s2 + $0x2c] sm:$0xf]
      %v258 = vld [vmem:[%s2 + $0x30] sm:$0xf]
      %v259 = vld [vmem:[%s2 + $0x34] sm:$0xf]
      %v260 = vld [vmem:[%s2 + $0x38] sm:$0xf]
      %v261 = vld [vmem:[%s2 + $0x3c] sm:$0xf]
      %v262 = vld [vmem:[%s2 + $0x40] sm:$0xf]
      %v263 = vld [vmem:[%s2 + $0x44] sm:$0xf]
      %v264 = vld [vmem:[%s2 + $0x48] sm:$0xf]
      %v265 = vld [vmem:[%s2 + $0x4c] sm:$0xf]
      %v266 = vld [vmem:[%s2 + $0x50] sm:$0xf]
      %v267 = vld [vmem:[%s2 + $0x54] sm:$0xf]
      %v268 = vld [vmem:[%s2 + $0x58] sm:$0xf]
      %v269 = vld [vmem:[%s2 + $0x5c] sm:$0xf]
      %v270 = vld [vmem:[%s2 + $0x60] sm:$0xf]
      %v271 = vld [vmem:[%s2 + $0x64] sm:$0xf]
      %v272 = vld [vmem:[%s2 + $0x68] sm:$0xf]
      %v273 = vld [vmem:[%s2 + $0x6c] sm:$0xf]
      %v274 = vld [vmem:[%s2 + $0x70] sm:$0xf]
      %v275 = vld [vmem:[%s2 + $0x74] sm:$0xf]
      %v276 = vld [vmem:[%s2 + $0x78] sm:$0xf]
      %v277 = vld [vmem:[%s2 + $0x7c] sm:$0xf]
      %v278 = vld [vmem:[%s2 + $0x80] sm:$0xf]
      %v279 = vld [vmem:[%s2 + $0x84] sm:$0xf]
      %v280 = vld [vmem:[%s2 + $0x88] sm:$0xf]
      %v281 = vld [vmem:[%s2 + $0x8c] sm:$0xf]
      %v282 = vld [vmem:[%s2 + $0x90] sm:$0xf]
      %v283 = vld [vmem:[%s2 + $0x94] sm:$0xf]
      %v284 = vld [vmem:[%s2 + $0x98] sm:$0xf]
      %v285 = vld [vmem:[%s2 + $0x9c] sm:$0xf]
      %v286 = vld [vmem:[%s2 + $0xa0] sm:$0xf]
      %v287 = vld [vmem:[%s2 + $0xa4] sm:$0xf]
      %v288 = vld [vmem:[%s2 + $0xa8] sm:$0xf]
      %v289 = vld [vmem:[%s2 + $0xac] sm:$0xf]
      %v290 = vld [vmem:[%s2 + $0xb0] sm:$0xf]
      %v291 = vld [vmem:[%s2 + $0xb4] sm:$0xf]
      %v292 = vld [vmem:[%s2 + $0xb8] sm:$0xf]
      %v293 = vld [vmem:[%s2 + $0xbc] sm:$0xf]
      %v294 = vld [vmem:[%s2 + $0xc0] sm:$0xf]
      %v295 = vld [vmem:[%s2 + $0xc4] sm:$0xf]
      %v296 = vld [vmem:[%s2 + $0xc8] sm:$0xf]
      %v297 = vld [vmem:[%s2 + $0xcc] sm:$0xf]
      %v298 = vld [vmem:[%s2 + $0xd0] sm:$0xf]
      %v299 = vld [vmem:[%s2 + $0xd4] sm:$0xf]
      %v300 = vld [vmem:[%s2 + $0xd8] sm:$0xf]
      %v301 = vld [vmem:[%s2 + $0xdc] sm:$0xf]
      %v302 = vld [vmem:[%s2 + $0xe0] sm:$0xf]
      %v303 = vld [vmem:[%s2 + $0xe4] sm:$0xf]
      %v304 = vld [vmem:[%s2 + $0xe8] sm:$0xf]
      %v305 = vld [vmem:[%s2 + $0xec] sm:$0xf]
      %v306 = vld [vmem:[%s2 + $0xf0] sm:$0xf]
      %v307 = vld [vmem:[%s2 + $0xf4] sm:$0xf]
      %v308 = vld [vmem:[%s2 + $0xf8] sm:$0xf]
      %v309 = vld [vmem:[%s2 + $0xfc] sm:$0xf]
      %v310 = vld [vmem:[%s2 + $0x100] sm:$0xf]
      %v311 = vld [vmem:[%s2 + $0x104] sm:$0xf]
      %v312 = vld [vmem:[%s2 + $0x108] sm:$0xf]
      %v313 = vld [vmem:[%s2 + $0x10c] sm:$0xf]
      %v314 = vld [vmem:[%s2 + $0x110] sm:$0xf]
      %v315 = vld [vmem:[%s2 + $0x114] sm:$0xf]
      %v316 = vld [vmem:[%s2 + $0x118] sm:$0xf]
      %v317 = vld [vmem:[%s2 + $0x11c] sm:$0xf]
      %v318 = vld [vmem:[%s3] sm:$0xf]
      %v319 = vld [vmem:[%s3 + $0x4] sm:$0xf]
      %v320 = vld [vmem:[%s3 + $0x8] sm:$0xf]
      %v321 = vld [vmem:[%s3 + $0xc] sm:$0xf]
      %v322 = vld [vmem:[%s3 + $0x10] sm:$0xf]
      %v323 = vld [vmem:[%s3 + $0x14] sm:$0xf]
      %v324 = vld [vmem:[%s3 + $0x18] sm:$0xf]
      %v325 = vld [vmem:[%s3 + $0x1c] sm:$0xf]
      %v326 = vld [vmem:[%s3 + $0x20] sm:$0xf]
      %v327 = vld [vmem:[%s3 + $0x24] sm:$0xf]
      %v328 = vld [vmem:[%s3 + $0x28] sm:$0xf]
      %v329 = vld [vmem:[%s3 + $0x2c] sm:$0xf]
      %v330 = vld [vmem:[%s3 + $0x30] sm:$0xf]
      %v331 = vld [vmem:[%s3 + $0x34] sm:$0xf]
      %v332 = vld [vmem:[%s3 + $0x38] sm:$0xf]
      %v333 = vld [vmem:[%s3 + $0x3c] sm:$0xf]
      %v334 = vld [vmem:[%s3 + $0x40] sm:$0xf]
      %v335 = vld [vmem:[%s3 + $0x44] sm:$0xf]
      %v336 = vld [vmem:[%s3 + $0x48] sm:$0xf]
      %v337 = vld [vmem:[%s3 + $0x4c] sm:$0xf]
      %v338 = vld [vmem:[%s3 + $0x50] sm:$0xf]
      %v339 = vld [vmem:[%s3 + $0x54] sm:$0xf]
      %v340 = vld [vmem:[%s3 + $0x58] sm:$0xf]
      %v341 = vld [vmem:[%s3 + $0x5c] sm:$0xf]
      %v342 = vld [vmem:[%s3 + $0x60] sm:$0xf]
      %v343 = vld [vmem:[%s3 + $0x64] sm:$0xf]
      %v344 = vld [vmem:[%s3 + $0x68] sm:$0xf]
      %v345 = vld [vmem:[%s3 + $0x6c] sm:$0xf]
      %v346 = vld [vmem:[%s3 + $0x70] sm:$0xf]
      %v347 = vld [vmem:[%s3 + $0x74] sm:$0xf]
      %v348 = vld [vmem:[%s3 + $0x78] sm:$0xf]
      %v349 = vld [vmem:[%s3 + $0x7c] sm:$0xf]
      %v350 = vld [vmem:[%s3 + $0x80] sm:$0xf]
      %v351 = vld [vmem:[%s3 + $0x84] sm:$0xf]
      %v352 = vld [vmem:[%s3 + $0x88] sm:$0xf]
      %v353 = vld [vmem:[%s3 + $0x8c] sm:$0xf]
      %v354 = vld [vmem:[%s3 + $0x90] sm:$0xf]
      %v355 = vld [vmem:[%s3 + $0x94] sm:$0xf]
      %v356 = vld [vmem:[%s3 + $0x98] sm:$0xf]
      %v357 = vld [vmem:[%s3 + $0x9c] sm:$0xf]
      %v358 = vld [vmem:[%s3 + $0xa0] sm:$0xf]
      %v359 = vld [vmem:[%s3 + $0xa4] sm:$0xf]
      %v360 = vld [vmem:[%s3 + $0xa8] sm:$0xf]
      %v361 = vld [vmem:[%s3 + $0xac] sm:$0xf]
      %v362 = vld [vmem:[%s3 + $0xb0] sm:$0xf]
      %v363 = vld [vmem:[%s3 + $0xb4] sm:$0xf]
      %v364 = vld [vmem:[%s3 + $0xb8] sm:$0xf]
      %v365 = vld [vmem:[%s3 + $0xbc] sm:$0xf]
      %v366 = vld [vmem:[%s3 + $0xc0] sm:$0xf]
      %v367 = vld [vmem:[%s3 + $0xc4] sm:$0xf]
      %v368 = vld [vmem:[%s3 + $0xc8] sm:$0xf]
      %v369 = vld [vmem:[%s3 + $0xcc] sm:$0xf]
      %v370 = vld [vmem:[%s3 + $0xd0] sm:$0xf]
      %v371 = vld [vmem:[%s3 + $0xd4] sm:$0xf]
      %v372 = vld [vmem:[%s3 + $0xd8] sm:$0xf]
      %v373 = vld [vmem:[%s3 + $0xdc] sm:$0xf]
      %v374 = vld [vmem:[%s3 + $0xe0] sm:$0xf]
      %v375 = vld [vmem:[%s3 + $0xe4] sm:$0xf]
      %v376 = vld [vmem:[%s3 + $0xe8] sm:$0xf]
      %v377 = vld [vmem:[%s3 + $0xec] sm:$0xf]
      %v378 = vld [vmem:[%s3 + $0xf0] sm:$0xf]
      %v379 = vld [vmem:[%s3 + $0xf4] sm:$0xf]
      %v380 = vld [vmem:[%s3 + $0xf8] sm:$0xf]
      %v381 = vld [vmem:[%s3 + $0xfc] sm:$0xf]
      %v382 = vld [vmem:[%s3 + $0x100] sm:$0xf]
      %v383 = vld [vmem:[%s3 + $0x104] sm:$0xf]
      %v384 = vld [vmem:[%s3 + $0x108] sm:$0xf]
      %v385 = vld [vmem:[%s3 + $0x10c] sm:$0xf]
      %v386 = vld [vmem:[%s3 + $0x110] sm:$0xf]
      %v387 = vld [vmem:[%s3 + $0x114] sm:$0xf]
      %v388 = vld [vmem:[%s3 + $0x118] sm:$0xf]
      %v389 = vld [vmem:[%s3 + $0x11c] sm:$0xf]
      %v390 = vld [vmem:[%s4] sm:$0xff]
      %v391 = vld [vmem:[%s4 + $0x8] sm:$0xff]
      %v392 = vld [vmem:[%s4 + $0x10] sm:$0xff]
      %v393 = vld [vmem:[%s4 + $0x18] sm:$0xff]
      loop: start=0, step=1, limit=23
      $region41: #{eeg_cnn_forward.4} parent=39 // loop_pre_header
        _
      $region42: #{eeg_cnn_forward.4} parent=39 // loop_header
        %s395 = sphi 0, %s399
        %p396 = scmp.ge.s32.totalorder %s395, 23
      $region43: #{eeg_cnn_forward.4} parent=39 // loop_header_branch
        %398 = sbr.rel (%p396) target = $region47
      $region44: #{eeg_cnn_forward.4} parent=39 // loop_body
        %s400 = smul.u32 %s395, 2
        %s401 = smul.addr %s400, 4
        %s402 = scalar_lea.vmem %s234, %s401
        %v403 = vld [vmem:[%s402] sm:$0xf]
        %v404 = vld [vmem:[%s402 + $0x4] sm:$0xf]
        %s405 = smul.addr %s400, 4
        %s406 = scalar_lea.vmem %s239, %s405
        %v407 = vld [vmem:[%s406] sm:$0xf]
        %v408 = vld [vmem:[%s406 + $0x4] sm:$0xf]
        %v417 = vunpack.c.l.b16 %v318
        %v418 = vunpack.c.l.b16 %v319
        %v419 = vunpack.c.l.b16 %v320
        %v420 = vunpack.c.l.b16 %v321
        %v421 = vunpack.c.l.b16 %v322
        %v422 = vunpack.c.l.b16 %v323
        %v423 = vunpack.c.l.b16 %v324
        %v424 = vunpack.c.l.b16 %v325
        %v425 = vpack.c.b16 %v418, %v417
        %v426 = vpack.c.b16 %v420, %v419
        %v427 = vpack.c.b16 %v422, %v421
        %v428 = vpack.c.b16 %v424, %v423
        %v431 = vunpack.c.l.b16 %v407
        %v432 = vunpack.c.l.b16 %v408
        %v433 = vpack.c.b16 %v432, %v431
        %vm435 = vcmask 130048
        %v437 = vsel %vm435, %v425, 0
        %v440 = vsel %vm435, %v426, 0
        %v443 = vsel %vm435, %v427, 0
        %v446 = vsel %vm435, %v428, 0
        %448 = vmatpush.bf16.msra.mxu0 0
        %449 = vmatpush.bf16.msra.mxu0 0
        %450 = vmatpush.bf16.msra.mxu0 0
        %451 = vmatpush.bf16.msra.mxu0 0
        %452 = vmatpush.bf16.msra.mxu0 0
        %453 = vmatpush.bf16.msra.mxu0 0
        %454 = vmatpush.bf16.msra.mxu0 0
        %455 = vmatpush.bf16.msra.mxu0 %v433
        %456 = vmatmul.bf16.gmra.mxu0 %v437
        %v457 = vpop.f32.mrf.mxu0
        %v458 = vadd.f32 0.0, %v457
        %v459 = vpop.f32.mrf.mxu0
        %v460 = vadd.f32 0.0, %v459
        %461 = vmatmul.bf16.gmra.mxu0 %v440
        %v462 = vpop.f32.mrf.mxu0
        %v463 = vadd.f32 0.0, %v462
        %v464 = vpop.f32.mrf.mxu0
        %v465 = vadd.f32 0.0, %v464
        %466 = vmatmul.bf16.gmra.mxu0 %v443
        %v467 = vpop.f32.mrf.mxu0
        %v468 = vadd.f32 0.0, %v467
        %v469 = vpop.f32.mrf.mxu0
        %v470 = vadd.f32 0.0, %v469
        %471 = vmatmul.bf16.gmra.mxu0 %v446
        %v472 = vpop.f32.mrf.mxu0
        %v473 = vadd.f32 0.0, %v472
        %v474 = vpop.f32.mrf.mxu0
        %v475 = vadd.f32 0.0, %v474
        %476 = vdwg.mxu0
        %v485 = vunpack.c.l.b16 %v246
        %v486 = vunpack.c.l.b16 %v247
        %v487 = vunpack.c.l.b16 %v248
        %v488 = vunpack.c.l.b16 %v249
        %v489 = vunpack.c.l.b16 %v250
        %v490 = vunpack.c.l.b16 %v251
        %v491 = vunpack.c.l.b16 %v252
        %v492 = vunpack.c.l.b16 %v253
        %v493 = vpack.c.b16 %v486, %v485
        %v494 = vpack.c.b16 %v488, %v487
        %v495 = vpack.c.b16 %v490, %v489
        %v496 = vpack.c.b16 %v492, %v491
        %v499 = vunpack.c.l.b16 %v403
        %v500 = vunpack.c.l.b16 %v404
        %v501 = vpack.c.b16 %v500, %v499
        %v504 = vsel %vm435, %v493, 0
        %v507 = vsel %vm435, %v494, 0
        %v510 = vsel %vm435, %v495, 0
        %v513 = vsel %vm435, %v496, 0
        %515 = vmatpush.bf16.msra.mxu0 0
        %516 = vmatpush.bf16.msra.mxu0 0
        %517 = vmatpush.bf16.msra.mxu0 0
        %518 = vmatpush.bf16.msra.mxu0 0
        %519 = vmatpush.bf16.msra.mxu0 0
        %520 = vmatpush.bf16.msra.mxu0 0
        %521 = vmatpush.bf16.msra.mxu0 0
        %522 = vmatpush.bf16.msra.mxu0 %v501
        %523 = vmatmul.bf16.gmra.mxu0 %v504
        %v524 = vpop.f32.mrf.mxu0
        %v525 = vadd.f32 %v458, %v524
        %v526 = vpop.f32.mrf.mxu0
        %v527 = vadd.f32 %v460, %v526
        %528 = vmatmul.bf16.gmra.mxu0 %v507
        %v529 = vpop.f32.mrf.mxu0
        %v530 = vadd.f32 %v463, %v529
        %v531 = vpop.f32.mrf.mxu0
        %v532 = vadd.f32 %v465, %v531
        %533 = vmatmul.bf16.gmra.mxu0 %v510
        %v534 = vpop.f32.mrf.mxu0
        %v535 = vadd.f32 %v468, %v534
        %v536 = vpop.f32.mrf.mxu0
        %v537 = vadd.f32 %v470, %v536
        %538 = vmatmul.bf16.gmra.mxu0 %v513
        %v539 = vpop.f32.mrf.mxu0
        %v540 = vadd.f32 %v473, %v539
        %v541 = vpop.f32.mrf.mxu0
        %v542 = vadd.f32 %v475, %v541
        %543 = vdwg.mxu0
        %v552 = vunpack.c.l.b16 %v254
        %v553 = vunpack.c.l.b16 %v255
        %v554 = vunpack.c.l.b16 %v256
        %v555 = vunpack.c.l.b16 %v257
        %v556 = vunpack.c.l.b16 %v258
        %v557 = vunpack.c.l.b16 %v259
        %v558 = vunpack.c.l.b16 %v260
        %v559 = vunpack.c.l.b16 %v261
        %v560 = vpack.c.b16 %v553, %v552
        %v561 = vpack.c.b16 %v555, %v554
        %v562 = vpack.c.b16 %v557, %v556
        %v563 = vpack.c.b16 %v559, %v558
        %564 = vrot.lane.b32.xlu0 %v501, 127
        %v565 = vpop.permute.xlu0 %564
        %v568 = vsel %vm435, %v560, 0
        %v571 = vsel %vm435, %v561, 0
        %v574 = vsel %vm435, %v562, 0
        %v577 = vsel %vm435, %v563, 0
        %579 = vmatpush.bf16.msra.mxu0 0
        %580 = vmatpush.bf16.msra.mxu0 0
        %581 = vmatpush.bf16.msra.mxu0 0
        %582 = vmatpush.bf16.msra.mxu0 0
        %583 = vmatpush.bf16.msra.mxu0 0
        %584 = vmatpush.bf16.msra.mxu0 0
        %585 = vmatpush.bf16.msra.mxu0 0
        %586 = vmatpush.bf16.msra.mxu0 %v565
        %587 = vmatmul.bf16.gmra.mxu0 %v568
        %v588 = vpop.f32.mrf.mxu0
        %v589 = vadd.f32 0.0, %v588
        %v590 = vpop.f32.mrf.mxu0
        %v591 = vadd.f32 0.0, %v590
        %592 = vmatmul.bf16.gmra.mxu0 %v571
        %v593 = vpop.f32.mrf.mxu0
        %v594 = vadd.f32 0.0, %v593
        %v595 = vpop.f32.mrf.mxu0
        %v596 = vadd.f32 0.0, %v595
        %597 = vmatmul.bf16.gmra.mxu0 %v574
        %v598 = vpop.f32.mrf.mxu0
        %v599 = vadd.f32 0.0, %v598
        %v600 = vpop.f32.mrf.mxu0
        %v601 = vadd.f32 0.0, %v600
        %602 = vmatmul.bf16.gmra.mxu0 %v577
        %v603 = vpop.f32.mrf.mxu0
        %v604 = vadd.f32 0.0, %v603
        %v605 = vpop.f32.mrf.mxu0
        %v606 = vadd.f32 0.0, %v605
        %607 = vdwg.mxu0
        %v608 = vadd.f32 %v525, %v589
        %v609 = vadd.f32 %v527, %v591
        %v610 = vadd.f32 %v530, %v594
        %v611 = vadd.f32 %v532, %v596
        %v612 = vadd.f32 %v535, %v599
        %v613 = vadd.f32 %v537, %v601
        %v614 = vadd.f32 %v540, %v604
        %v615 = vadd.f32 %v542, %v606
        %v624 = vunpack.c.l.b16 %v326
        %v625 = vunpack.c.l.b16 %v327
        %v626 = vunpack.c.l.b16 %v328
        %v627 = vunpack.c.l.b16 %v329
        %v628 = vunpack.c.l.b16 %v330
        %v629 = vunpack.c.l.b16 %v331
        %v630 = vunpack.c.l.b16 %v332
        %v631 = vunpack.c.l.b16 %v333
        %v632 = vpack.c.b16 %v625, %v624
        %v633 = vpack.c.b16 %v627, %v626
        %v634 = vpack.c.b16 %v629, %v628
        %v635 = vpack.c.b16 %v631, %v630
        %636 = vrot.lane.b32.xlu0 %v433, 127
        %v637 = vpop.permute.xlu0 %636
        %v640 = vsel %vm435, %v632, 0
        %v643 = vsel %vm435, %v633, 0
        %v646 = vsel %vm435, %v634, 0
        %v649 = vsel %vm435, %v635, 0
        %651 = vmatpush.bf16.msra.mxu0 0
        %652 = vmatpush.bf16.msra.mxu0 0
        %653 = vmatpush.bf16.msra.mxu0 0
        %654 = vmatpush.bf16.msra.mxu0 0
        %655 = vmatpush.bf16.msra.mxu0 0
        %656 = vmatpush.bf16.msra.mxu0 0
        %657 = vmatpush.bf16.msra.mxu0 0
        %658 = vmatpush.bf16.msra.mxu0 %v637
        %659 = vmatmul.bf16.gmra.mxu0 %v640
        %v660 = vpop.f32.mrf.mxu0
        %v661 = vadd.f32 0.0, %v660
        %v662 = vpop.f32.mrf.mxu0
        %v663 = vadd.f32 0.0, %v662
        %664 = vmatmul.bf16.gmra.mxu0 %v643
        %v665 = vpop.f32.mrf.mxu0
        %v666 = vadd.f32 0.0, %v665
        %v667 = vpop.f32.mrf.mxu0
        %v668 = vadd.f32 0.0, %v667
        %669 = vmatmul.bf16.gmra.mxu0 %v646
        %v670 = vpop.f32.mrf.mxu0
        %v671 = vadd.f32 0.0, %v670
        %v672 = vpop.f32.mrf.mxu0
        %v673 = vadd.f32 0.0, %v672
        %674 = vmatmul.bf16.gmra.mxu0 %v649
        %v675 = vpop.f32.mrf.mxu0
        %v676 = vadd.f32 0.0, %v675
        %v677 = vpop.f32.mrf.mxu0
        %v678 = vadd.f32 0.0, %v677
        %679 = vdwg.mxu0
        %v680 = vadd.f32 %v608, %v661
        %v681 = vadd.f32 %v609, %v663
        %v682 = vadd.f32 %v610, %v666
        %v683 = vadd.f32 %v611, %v668
        %v684 = vadd.f32 %v612, %v671
        %v685 = vadd.f32 %v613, %v673
        %v686 = vadd.f32 %v614, %v676
        %v687 = vadd.f32 %v615, %v678
        %v696 = vunpack.c.l.b16 %v262
        %v697 = vunpack.c.l.b16 %v263
        %v698 = vunpack.c.l.b16 %v264
        %v699 = vunpack.c.l.b16 %v265
        %v700 = vunpack.c.l.b16 %v266
        %v701 = vunpack.c.l.b16 %v267
        %v702 = vunpack.c.l.b16 %v268
        %v703 = vunpack.c.l.b16 %v269
        %v704 = vpack.c.b16 %v697, %v696
        %v705 = vpack.c.b16 %v699, %v698
        %v706 = vpack.c.b16 %v701, %v700
        %v707 = vpack.c.b16 %v703, %v702
        %708 = vrot.lane.b32.xlu0 %v501, 126
        %v709 = vpop.permute.xlu0 %708
        %v712 = vsel %vm435, %v704, 0
        %v715 = vsel %vm435, %v705, 0
        %v718 = vsel %vm435, %v706, 0
        %v721 = vsel %vm435, %v707, 0
        %723 = vmatpush.bf16.msra.mxu0 0
        %724 = vmatpush.bf16.msra.mxu0 0
        %725 = vmatpush.bf16.msra.mxu0 0
        %726 = vmatpush.bf16.msra.mxu0 0
        %727 = vmatpush.bf16.msra.mxu0 0
        %728 = vmatpush.bf16.msra.mxu0 0
        %729 = vmatpush.bf16.msra.mxu0 0
        %730 = vmatpush.bf16.msra.mxu0 %v709
        %731 = vmatmul.bf16.gmra.mxu0 %v712
        %v732 = vpop.f32.mrf.mxu0
        %v733 = vadd.f32 0.0, %v732
        %v734 = vpop.f32.mrf.mxu0
        %v735 = vadd.f32 0.0, %v734
        %736 = vmatmul.bf16.gmra.mxu0 %v715
        %v737 = vpop.f32.mrf.mxu0
        %v738 = vadd.f32 0.0, %v737
        %v739 = vpop.f32.mrf.mxu0
        %v740 = vadd.f32 0.0, %v739
        %741 = vmatmul.bf16.gmra.mxu0 %v718
        %v742 = vpop.f32.mrf.mxu0
        %v743 = vadd.f32 0.0, %v742
        %v744 = vpop.f32.mrf.mxu0
        %v745 = vadd.f32 0.0, %v744
        %746 = vmatmul.bf16.gmra.mxu0 %v721
        %v747 = vpop.f32.mrf.mxu0
        %v748 = vadd.f32 0.0, %v747
        %v749 = vpop.f32.mrf.mxu0
        %v750 = vadd.f32 0.0, %v749
        %751 = vdwg.mxu0
        %v752 = vadd.f32 %v680, %v733
        %v753 = vadd.f32 %v681, %v735
        %v754 = vadd.f32 %v682, %v738
        %v755 = vadd.f32 %v683, %v740
        %v756 = vadd.f32 %v684, %v743
        %v757 = vadd.f32 %v685, %v745
        %v758 = vadd.f32 %v686, %v748
        %v759 = vadd.f32 %v687, %v750
        %v768 = vunpack.c.l.b16 %v334
        %v769 = vunpack.c.l.b16 %v335
        %v770 = vunpack.c.l.b16 %v336
        %v771 = vunpack.c.l.b16 %v337
        %v772 = vunpack.c.l.b16 %v338
        %v773 = vunpack.c.l.b16 %v339
        %v774 = vunpack.c.l.b16 %v340
        %v775 = vunpack.c.l.b16 %v341
        %v776 = vpack.c.b16 %v769, %v768
        %v777 = vpack.c.b16 %v771, %v770
        %v778 = vpack.c.b16 %v773, %v772
        %v779 = vpack.c.b16 %v775, %v774
        %780 = vrot.lane.b32.xlu0 %v433, 126
        %v781 = vpop.permute.xlu0 %780
        %v784 = vsel %vm435, %v776, 0
        %v787 = vsel %vm435, %v777, 0
        %v790 = vsel %vm435, %v778, 0
        %v793 = vsel %vm435, %v779, 0
        %795 = vmatpush.bf16.msra.mxu0 0
        %796 = vmatpush.bf16.msra.mxu0 0
        %797 = vmatpush.bf16.msra.mxu0 0
        %798 = vmatpush.bf16.msra.mxu0 0
        %799 = vmatpush.bf16.msra.mxu0 0
        %800 = vmatpush.bf16.msra.mxu0 0
        %801 = vmatpush.bf16.msra.mxu0 0
        %802 = vmatpush.bf16.msra.mxu0 %v781
        %803 = vmatmul.bf16.gmra.mxu0 %v784
        %v804 = vpop.f32.mrf.mxu0
        %v805 = vadd.f32 0.0, %v804
        %v806 = vpop.f32.mrf.mxu0
        %v807 = vadd.f32 0.0, %v806
        %808 = vmatmul.bf16.gmra.mxu0 %v787
        %v809 = vpop.f32.mrf.mxu0
        %v810 = vadd.f32 0.0, %v809
        %v811 = vpop.f32.mrf.mxu0
        %v812 = vadd.f32 0.0, %v811
        %813 = vmatmul.bf16.gmra.mxu0 %v790
        %v814 = vpop.f32.mrf.mxu0
        %v815 = vadd.f32 0.0, %v814
        %v816 = vpop.f32.mrf.mxu0
        %v817 = vadd.f32 0.0, %v816
        %818 = vmatmul.bf16.gmra.mxu0 %v793
        %v819 = vpop.f32.mrf.mxu0
        %v820 = vadd.f32 0.0, %v819
        %v821 = vpop.f32.mrf.mxu0
        %v822 = vadd.f32 0.0, %v821
        %823 = vdwg.mxu0
        %v824 = vadd.f32 %v752, %v805
        %v825 = vadd.f32 %v753, %v807
        %v826 = vadd.f32 %v754, %v810
        %v827 = vadd.f32 %v755, %v812
        %v828 = vadd.f32 %v756, %v815
        %v829 = vadd.f32 %v757, %v817
        %v830 = vadd.f32 %v758, %v820
        %v831 = vadd.f32 %v759, %v822
        %s832 = sadd.s32 %s395, 1
        %s833 = smul.u32 %s832, 2
        %s834 = smul.addr %s833, 4
        %s835 = scalar_lea.vmem %s234, %s834
        %v836 = vld [vmem:[%s835] sm:$0xf]
        %v837 = vld [vmem:[%s835 + $0x4] sm:$0xf]
        %s838 = smul.addr %s833, 4
        %s839 = scalar_lea.vmem %s239, %s838
        %v840 = vld [vmem:[%s839] sm:$0xf]
        %v841 = vld [vmem:[%s839 + $0x4] sm:$0xf]
        %v850 = vunpack.c.l.b16 %v270
        %v851 = vunpack.c.l.b16 %v271
        %v852 = vunpack.c.l.b16 %v272
        %v853 = vunpack.c.l.b16 %v273
        %v854 = vunpack.c.l.b16 %v274
        %v855 = vunpack.c.l.b16 %v275
        %v856 = vunpack.c.l.b16 %v276
        %v857 = vunpack.c.l.b16 %v277
        %v858 = vpack.c.b16 %v851, %v850
        %v859 = vpack.c.b16 %v853, %v852
        %v860 = vpack.c.b16 %v855, %v854
        %v861 = vpack.c.b16 %v857, %v856
        %v864 = vunpack.c.l.b16 %v836
        %v865 = vunpack.c.l.b16 %v837
        %v866 = vpack.c.b16 %v865, %v864
        %v869 = vsel %vm435, %v858, 0
        %v872 = vsel %vm435, %v859, 0
        %v875 = vsel %vm435, %v860, 0
        %v878 = vsel %vm435, %v861, 0
        %880 = vmatpush.bf16.msra.mxu0 0
        %881 = vmatpush.bf16.msra.mxu0 0
        %882 = vmatpush.bf16.msra.mxu0 0
        %883 = vmatpush.bf16.msra.mxu0 0
        %884 = vmatpush.bf16.msra.mxu0 0
        %885 = vmatpush.bf16.msra.mxu0 0
        %886 = vmatpush.bf16.msra.mxu0 0
        %887 = vmatpush.bf16.msra.mxu0 %v866
        %888 = vmatmul.bf16.gmra.mxu0 %v869
        %v889 = vpop.f32.mrf.mxu0
        %v890 = vadd.f32 0.0, %v889
        %v891 = vpop.f32.mrf.mxu0
        %v892 = vadd.f32 0.0, %v891
        %893 = vmatmul.bf16.gmra.mxu0 %v872
        %v894 = vpop.f32.mrf.mxu0
        %v895 = vadd.f32 0.0, %v894
        %v896 = vpop.f32.mrf.mxu0
        %v897 = vadd.f32 0.0, %v896
        %898 = vmatmul.bf16.gmra.mxu0 %v875
        %v899 = vpop.f32.mrf.mxu0
        %v900 = vadd.f32 0.0, %v899
        %v901 = vpop.f32.mrf.mxu0
        %v902 = vadd.f32 0.0, %v901
        %903 = vmatmul.bf16.gmra.mxu0 %v878
        %v904 = vpop.f32.mrf.mxu0
        %v905 = vadd.f32 0.0, %v904
        %v906 = vpop.f32.mrf.mxu0
        %v907 = vadd.f32 0.0, %v906
        %908 = vdwg.mxu0
        %v909 = vadd.f32 %v824, %v890
        %v910 = vadd.f32 %v825, %v892
        %v911 = vadd.f32 %v826, %v895
        %v912 = vadd.f32 %v827, %v897
        %v913 = vadd.f32 %v828, %v900
        %v914 = vadd.f32 %v829, %v902
        %v915 = vadd.f32 %v830, %v905
        %v916 = vadd.f32 %v831, %v907
        %v925 = vunpack.c.l.b16 %v342
        %v926 = vunpack.c.l.b16 %v343
        %v927 = vunpack.c.l.b16 %v344
        %v928 = vunpack.c.l.b16 %v345
        %v929 = vunpack.c.l.b16 %v346
        %v930 = vunpack.c.l.b16 %v347
        %v931 = vunpack.c.l.b16 %v348
        %v932 = vunpack.c.l.b16 %v349
        %v933 = vpack.c.b16 %v926, %v925
        %v934 = vpack.c.b16 %v928, %v927
        %v935 = vpack.c.b16 %v930, %v929
        %v936 = vpack.c.b16 %v932, %v931
        %v939 = vunpack.c.l.b16 %v840
        %v940 = vunpack.c.l.b16 %v841
        %v941 = vpack.c.b16 %v940, %v939
        %v944 = vsel %vm435, %v933, 0
        %v947 = vsel %vm435, %v934, 0
        %v950 = vsel %vm435, %v935, 0
        %v953 = vsel %vm435, %v936, 0
        %955 = vmatpush.bf16.msra.mxu0 0
        %956 = vmatpush.bf16.msra.mxu0 0
        %957 = vmatpush.bf16.msra.mxu0 0
        %958 = vmatpush.bf16.msra.mxu0 0
        %959 = vmatpush.bf16.msra.mxu0 0
        %960 = vmatpush.bf16.msra.mxu0 0
        %961 = vmatpush.bf16.msra.mxu0 0
        %962 = vmatpush.bf16.msra.mxu0 %v941
        %963 = vmatmul.bf16.gmra.mxu0 %v944
        %v964 = vpop.f32.mrf.mxu0
        %v965 = vadd.f32 0.0, %v964
        %v966 = vpop.f32.mrf.mxu0
        %v967 = vadd.f32 0.0, %v966
        %968 = vmatmul.bf16.gmra.mxu0 %v947
        %v969 = vpop.f32.mrf.mxu0
        %v970 = vadd.f32 0.0, %v969
        %v971 = vpop.f32.mrf.mxu0
        %v972 = vadd.f32 0.0, %v971
        %973 = vmatmul.bf16.gmra.mxu0 %v950
        %v974 = vpop.f32.mrf.mxu0
        %v975 = vadd.f32 0.0, %v974
        %v976 = vpop.f32.mrf.mxu0
        %v977 = vadd.f32 0.0, %v976
        %978 = vmatmul.bf16.gmra.mxu0 %v953
        %v979 = vpop.f32.mrf.mxu0
        %v980 = vadd.f32 0.0, %v979
        %v981 = vpop.f32.mrf.mxu0
        %v982 = vadd.f32 0.0, %v981
        %983 = vdwg.mxu0
        %v984 = vadd.f32 %v909, %v965
        %v985 = vadd.f32 %v910, %v967
        %v986 = vadd.f32 %v911, %v970
        %v987 = vadd.f32 %v912, %v972
        %v988 = vadd.f32 %v913, %v975
        %v989 = vadd.f32 %v914, %v977
        %v990 = vadd.f32 %v915, %v980
        %v991 = vadd.f32 %v916, %v982
        %v1000 = vunpack.c.l.b16 %v278
        %v1001 = vunpack.c.l.b16 %v279
        %v1002 = vunpack.c.l.b16 %v280
        %v1003 = vunpack.c.l.b16 %v281
        %v1004 = vunpack.c.l.b16 %v282
        %v1005 = vunpack.c.l.b16 %v283
        %v1006 = vunpack.c.l.b16 %v284
        %v1007 = vunpack.c.l.b16 %v285
        %v1008 = vpack.c.b16 %v1001, %v1000
        %v1009 = vpack.c.b16 %v1003, %v1002
        %v1010 = vpack.c.b16 %v1005, %v1004
        %v1011 = vpack.c.b16 %v1007, %v1006
        %1012 = vrot.lane.b32.xlu0 %v866, 127
        %v1013 = vpop.permute.xlu0 %1012
        %v1016 = vsel %vm435, %v1008, 0
        %v1019 = vsel %vm435, %v1009, 0
        %v1022 = vsel %vm435, %v1010, 0
        %v1025 = vsel %vm435, %v1011, 0
        %1027 = vmatpush.bf16.msra.mxu0 0
        %1028 = vmatpush.bf16.msra.mxu0 0
        %1029 = vmatpush.bf16.msra.mxu0 0
        %1030 = vmatpush.bf16.msra.mxu0 0
        %1031 = vmatpush.bf16.msra.mxu0 0
        %1032 = vmatpush.bf16.msra.mxu0 0
        %1033 = vmatpush.bf16.msra.mxu0 0
        %1034 = vmatpush.bf16.msra.mxu0 %v1013
        %1035 = vmatmul.bf16.gmra.mxu0 %v1016
        %v1036 = vpop.f32.mrf.mxu0
        %v1037 = vadd.f32 0.0, %v1036
        %v1038 = vpop.f32.mrf.mxu0
        %v1039 = vadd.f32 0.0, %v1038
        %1040 = vmatmul.bf16.gmra.mxu0 %v1019
        %v1041 = vpop.f32.mrf.mxu0
        %v1042 = vadd.f32 0.0, %v1041
        %v1043 = vpop.f32.mrf.mxu0
        %v1044 = vadd.f32 0.0, %v1043
        %1045 = vmatmul.bf16.gmra.mxu0 %v1022
        %v1046 = vpop.f32.mrf.mxu0
        %v1047 = vadd.f32 0.0, %v1046
        %v1048 = vpop.f32.mrf.mxu0
        %v1049 = vadd.f32 0.0, %v1048
        %1050 = vmatmul.bf16.gmra.mxu0 %v1025
        %v1051 = vpop.f32.mrf.mxu0
        %v1052 = vadd.f32 0.0, %v1051
        %v1053 = vpop.f32.mrf.mxu0
        %v1054 = vadd.f32 0.0, %v1053
        %1055 = vdwg.mxu0
        %v1056 = vadd.f32 %v984, %v1037
        %v1057 = vadd.f32 %v985, %v1039
        %v1058 = vadd.f32 %v986, %v1042
        %v1059 = vadd.f32 %v987, %v1044
        %v1060 = vadd.f32 %v988, %v1047
        %v1061 = vadd.f32 %v989, %v1049
        %v1062 = vadd.f32 %v990, %v1052
        %v1063 = vadd.f32 %v991, %v1054
        %v1072 = vunpack.c.l.b16 %v350
        %v1073 = vunpack.c.l.b16 %v351
        %v1074 = vunpack.c.l.b16 %v352
        %v1075 = vunpack.c.l.b16 %v353
        %v1076 = vunpack.c.l.b16 %v354
        %v1077 = vunpack.c.l.b16 %v355
        %v1078 = vunpack.c.l.b16 %v356
        %v1079 = vunpack.c.l.b16 %v357
        %v1080 = vpack.c.b16 %v1073, %v1072
        %v1081 = vpack.c.b16 %v1075, %v1074
        %v1082 = vpack.c.b16 %v1077, %v1076
        %v1083 = vpack.c.b16 %v1079, %v1078
        %1084 = vrot.lane.b32.xlu0 %v941, 127
        %v1085 = vpop.permute.xlu0 %1084
        %v1088 = vsel %vm435, %v1080, 0
        %v1091 = vsel %vm435, %v1081, 0
        %v1094 = vsel %vm435, %v1082, 0
        %v1097 = vsel %vm435, %v1083, 0
        %1099 = vmatpush.bf16.msra.mxu0 0
        %1100 = vmatpush.bf16.msra.mxu0 0
        %1101 = vmatpush.bf16.msra.mxu0 0
        %1102 = vmatpush.bf16.msra.mxu0 0
        %1103 = vmatpush.bf16.msra.mxu0 0
        %1104 = vmatpush.bf16.msra.mxu0 0
        %1105 = vmatpush.bf16.msra.mxu0 0
        %1106 = vmatpush.bf16.msra.mxu0 %v1085
        %1107 = vmatmul.bf16.gmra.mxu0 %v1088
        %v1108 = vpop.f32.mrf.mxu0
        %v1109 = vadd.f32 0.0, %v1108
        %v1110 = vpop.f32.mrf.mxu0
        %v1111 = vadd.f32 0.0, %v1110
        %1112 = vmatmul.bf16.gmra.mxu0 %v1091
        %v1113 = vpop.f32.mrf.mxu0
        %v1114 = vadd.f32 0.0, %v1113
        %v1115 = vpop.f32.mrf.mxu0
        %v1116 = vadd.f32 0.0, %v1115
        %1117 = vmatmul.bf16.gmra.mxu0 %v1094
        %v1118 = vpop.f32.mrf.mxu0
        %v1119 = vadd.f32 0.0, %v1118
        %v1120 = vpop.f32.mrf.mxu0
        %v1121 = vadd.f32 0.0, %v1120
        %1122 = vmatmul.bf16.gmra.mxu0 %v1097
        %v1123 = vpop.f32.mrf.mxu0
        %v1124 = vadd.f32 0.0, %v1123
        %v1125 = vpop.f32.mrf.mxu0
        %v1126 = vadd.f32 0.0, %v1125
        %1127 = vdwg.mxu0
        %v1128 = vadd.f32 %v1056, %v1109
        %v1129 = vadd.f32 %v1057, %v1111
        %v1130 = vadd.f32 %v1058, %v1114
        %v1131 = vadd.f32 %v1059, %v1116
        %v1132 = vadd.f32 %v1060, %v1119
        %v1133 = vadd.f32 %v1061, %v1121
        %v1134 = vadd.f32 %v1062, %v1124
        %v1135 = vadd.f32 %v1063, %v1126
        %v1144 = vunpack.c.l.b16 %v286
        %v1145 = vunpack.c.l.b16 %v287
        %v1146 = vunpack.c.l.b16 %v288
        %v1147 = vunpack.c.l.b16 %v289
        %v1148 = vunpack.c.l.b16 %v290
        %v1149 = vunpack.c.l.b16 %v291
        %v1150 = vunpack.c.l.b16 %v292
        %v1151 = vunpack.c.l.b16 %v293
        %v1152 = vpack.c.b16 %v1145, %v1144
        %v1153 = vpack.c.b16 %v1147, %v1146
        %v1154 = vpack.c.b16 %v1149, %v1148
        %v1155 = vpack.c.b16 %v1151, %v1150
        %1156 = vrot.lane.b32.xlu0 %v866, 126
        %v1157 = vpop.permute.xlu0 %1156
        %v1160 = vsel %vm435, %v1152, 0
        %v1163 = vsel %vm435, %v1153, 0
        %v1166 = vsel %vm435, %v1154, 0
        %v1169 = vsel %vm435, %v1155, 0
        %1171 = vmatpush.bf16.msra.mxu0 0
        %1172 = vmatpush.bf16.msra.mxu0 0
        %1173 = vmatpush.bf16.msra.mxu0 0
        %1174 = vmatpush.bf16.msra.mxu0 0
        %1175 = vmatpush.bf16.msra.mxu0 0
        %1176 = vmatpush.bf16.msra.mxu0 0
        %1177 = vmatpush.bf16.msra.mxu0 0
        %1178 = vmatpush.bf16.msra.mxu0 %v1157
        %1179 = vmatmul.bf16.gmra.mxu0 %v1160
        %v1180 = vpop.f32.mrf.mxu0
        %v1181 = vadd.f32 0.0, %v1180
        %v1182 = vpop.f32.mrf.mxu0
        %v1183 = vadd.f32 0.0, %v1182
        %1184 = vmatmul.bf16.gmra.mxu0 %v1163
        %v1185 = vpop.f32.mrf.mxu0
        %v1186 = vadd.f32 0.0, %v1185
        %v1187 = vpop.f32.mrf.mxu0
        %v1188 = vadd.f32 0.0, %v1187
        %1189 = vmatmul.bf16.gmra.mxu0 %v1166
        %v1190 = vpop.f32.mrf.mxu0
        %v1191 = vadd.f32 0.0, %v1190
        %v1192 = vpop.f32.mrf.mxu0
        %v1193 = vadd.f32 0.0, %v1192
        %1194 = vmatmul.bf16.gmra.mxu0 %v1169
        %v1195 = vpop.f32.mrf.mxu0
        %v1196 = vadd.f32 0.0, %v1195
        %v1197 = vpop.f32.mrf.mxu0
        %v1198 = vadd.f32 0.0, %v1197
        %1199 = vdwg.mxu0
        %v1200 = vadd.f32 %v1128, %v1181
        %v1201 = vadd.f32 %v1129, %v1183
        %v1202 = vadd.f32 %v1130, %v1186
        %v1203 = vadd.f32 %v1131, %v1188
        %v1204 = vadd.f32 %v1132, %v1191
        %v1205 = vadd.f32 %v1133, %v1193
        %v1206 = vadd.f32 %v1134, %v1196
        %v1207 = vadd.f32 %v1135, %v1198
        %v1216 = vunpack.c.l.b16 %v358
        %v1217 = vunpack.c.l.b16 %v359
        %v1218 = vunpack.c.l.b16 %v360
        %v1219 = vunpack.c.l.b16 %v361
        %v1220 = vunpack.c.l.b16 %v362
        %v1221 = vunpack.c.l.b16 %v363
        %v1222 = vunpack.c.l.b16 %v364
        %v1223 = vunpack.c.l.b16 %v365
        %v1224 = vpack.c.b16 %v1217, %v1216
        %v1225 = vpack.c.b16 %v1219, %v1218
        %v1226 = vpack.c.b16 %v1221, %v1220
        %v1227 = vpack.c.b16 %v1223, %v1222
        %1228 = vrot.lane.b32.xlu0 %v941, 126
        %v1229 = vpop.permute.xlu0 %1228
        %v1232 = vsel %vm435, %v1224, 0
        %v1235 = vsel %vm435, %v1225, 0
        %v1238 = vsel %vm435, %v1226, 0
        %v1241 = vsel %vm435, %v1227, 0
        %1243 = vmatpush.bf16.msra.mxu0 0
        %1244 = vmatpush.bf16.msra.mxu0 0
        %1245 = vmatpush.bf16.msra.mxu0 0
        %1246 = vmatpush.bf16.msra.mxu0 0
        %1247 = vmatpush.bf16.msra.mxu0 0
        %1248 = vmatpush.bf16.msra.mxu0 0
        %1249 = vmatpush.bf16.msra.mxu0 0
        %1250 = vmatpush.bf16.msra.mxu0 %v1229
        %1251 = vmatmul.bf16.gmra.mxu0 %v1232
        %v1252 = vpop.f32.mrf.mxu0
        %v1253 = vadd.f32 0.0, %v1252
        %v1254 = vpop.f32.mrf.mxu0
        %v1255 = vadd.f32 0.0, %v1254
        %1256 = vmatmul.bf16.gmra.mxu0 %v1235
        %v1257 = vpop.f32.mrf.mxu0
        %v1258 = vadd.f32 0.0, %v1257
        %v1259 = vpop.f32.mrf.mxu0
        %v1260 = vadd.f32 0.0, %v1259
        %1261 = vmatmul.bf16.gmra.mxu0 %v1238
        %v1262 = vpop.f32.mrf.mxu0
        %v1263 = vadd.f32 0.0, %v1262
        %v1264 = vpop.f32.mrf.mxu0
        %v1265 = vadd.f32 0.0, %v1264
        %1266 = vmatmul.bf16.gmra.mxu0 %v1241
        %v1267 = vpop.f32.mrf.mxu0
        %v1268 = vadd.f32 0.0, %v1267
        %v1269 = vpop.f32.mrf.mxu0
        %v1270 = vadd.f32 0.0, %v1269
        %1271 = vdwg.mxu0
        %v1272 = vadd.f32 %v1200, %v1253
        %v1273 = vadd.f32 %v1201, %v1255
        %v1274 = vadd.f32 %v1202, %v1258
        %v1275 = vadd.f32 %v1203, %v1260
        %v1276 = vadd.f32 %v1204, %v1263
        %v1277 = vadd.f32 %v1205, %v1265
        %v1278 = vadd.f32 %v1206, %v1268
        %v1279 = vadd.f32 %v1207, %v1270
        %s1280 = sadd.s32 %s395, 2
        %s1281 = smul.u32 %s1280, 2
        %s1282 = smul.addr %s1281, 4
        %s1283 = scalar_lea.vmem %s234, %s1282
        %v1284 = vld [vmem:[%s1283] sm:$0xf]
        %v1285 = vld [vmem:[%s1283 + $0x4] sm:$0xf]
        %s1286 = smul.addr %s1281, 4
        %s1287 = scalar_lea.vmem %s239, %s1286
        %v1288 = vld [vmem:[%s1287] sm:$0xf]
        %v1289 = vld [vmem:[%s1287 + $0x4] sm:$0xf]
        %v1298 = vunpack.c.l.b16 %v294
        %v1299 = vunpack.c.l.b16 %v295
        %v1300 = vunpack.c.l.b16 %v296
        %v1301 = vunpack.c.l.b16 %v297
        %v1302 = vunpack.c.l.b16 %v298
        %v1303 = vunpack.c.l.b16 %v299
        %v1304 = vunpack.c.l.b16 %v300
        %v1305 = vunpack.c.l.b16 %v301
        %v1306 = vpack.c.b16 %v1299, %v1298
        %v1307 = vpack.c.b16 %v1301, %v1300
        %v1308 = vpack.c.b16 %v1303, %v1302
        %v1309 = vpack.c.b16 %v1305, %v1304
        %v1312 = vunpack.c.l.b16 %v1284
        %v1313 = vunpack.c.l.b16 %v1285
        %v1314 = vpack.c.b16 %v1313, %v1312
        %v1317 = vsel %vm435, %v1306, 0
        %v1320 = vsel %vm435, %v1307, 0
        %v1323 = vsel %vm435, %v1308, 0
        %v1326 = vsel %vm435, %v1309, 0
        %1328 = vmatpush.bf16.msra.mxu0 0
        %1329 = vmatpush.bf16.msra.mxu0 0
        %1330 = vmatpush.bf16.msra.mxu0 0
        %1331 = vmatpush.bf16.msra.mxu0 0
        %1332 = vmatpush.bf16.msra.mxu0 0
        %1333 = vmatpush.bf16.msra.mxu0 0
        %1334 = vmatpush.bf16.msra.mxu0 0
        %1335 = vmatpush.bf16.msra.mxu0 %v1314
        %1336 = vmatmul.bf16.gmra.mxu0 %v1317
        %v1337 = vpop.f32.mrf.mxu0
        %v1338 = vadd.f32 0.0, %v1337
        %v1339 = vpop.f32.mrf.mxu0
        %v1340 = vadd.f32 0.0, %v1339
        %1341 = vmatmul.bf16.gmra.mxu0 %v1320
        %v1342 = vpop.f32.mrf.mxu0
        %v1343 = vadd.f32 0.0, %v1342
        %v1344 = vpop.f32.mrf.mxu0
        %v1345 = vadd.f32 0.0, %v1344
        %1346 = vmatmul.bf16.gmra.mxu0 %v1323
        %v1347 = vpop.f32.mrf.mxu0
        %v1348 = vadd.f32 0.0, %v1347
        %v1349 = vpop.f32.mrf.mxu0
        %v1350 = vadd.f32 0.0, %v1349
        %1351 = vmatmul.bf16.gmra.mxu0 %v1326
        %v1352 = vpop.f32.mrf.mxu0
        %v1353 = vadd.f32 0.0, %v1352
        %v1354 = vpop.f32.mrf.mxu0
        %v1355 = vadd.f32 0.0, %v1354
        %1356 = vdwg.mxu0
        %v1357 = vadd.f32 %v1272, %v1338
        %v1358 = vadd.f32 %v1273, %v1340
        %v1359 = vadd.f32 %v1274, %v1343
        %v1360 = vadd.f32 %v1275, %v1345
        %v1361 = vadd.f32 %v1276, %v1348
        %v1362 = vadd.f32 %v1277, %v1350
        %v1363 = vadd.f32 %v1278, %v1353
        %v1364 = vadd.f32 %v1279, %v1355
        %v1373 = vunpack.c.l.b16 %v366
        %v1374 = vunpack.c.l.b16 %v367
        %v1375 = vunpack.c.l.b16 %v368
        %v1376 = vunpack.c.l.b16 %v369
        %v1377 = vunpack.c.l.b16 %v370
        %v1378 = vunpack.c.l.b16 %v371
        %v1379 = vunpack.c.l.b16 %v372
        %v1380 = vunpack.c.l.b16 %v373
        %v1381 = vpack.c.b16 %v1374, %v1373
        %v1382 = vpack.c.b16 %v1376, %v1375
        %v1383 = vpack.c.b16 %v1378, %v1377
        %v1384 = vpack.c.b16 %v1380, %v1379
        %v1387 = vunpack.c.l.b16 %v1288
        %v1388 = vunpack.c.l.b16 %v1289
        %v1389 = vpack.c.b16 %v1388, %v1387
        %v1392 = vsel %vm435, %v1381, 0
        %v1395 = vsel %vm435, %v1382, 0
        %v1398 = vsel %vm435, %v1383, 0
        %v1401 = vsel %vm435, %v1384, 0
        %1403 = vmatpush.bf16.msra.mxu0 0
        %1404 = vmatpush.bf16.msra.mxu0 0
        %1405 = vmatpush.bf16.msra.mxu0 0
        %1406 = vmatpush.bf16.msra.mxu0 0
        %1407 = vmatpush.bf16.msra.mxu0 0
        %1408 = vmatpush.bf16.msra.mxu0 0
        %1409 = vmatpush.bf16.msra.mxu0 0
        %1410 = vmatpush.bf16.msra.mxu0 %v1389
        %1411 = vmatmul.bf16.gmra.mxu0 %v1392
        %v1412 = vpop.f32.mrf.mxu0
        %v1413 = vadd.f32 0.0, %v1412
        %v1414 = vpop.f32.mrf.mxu0
        %v1415 = vadd.f32 0.0, %v1414
        %1416 = vmatmul.bf16.gmra.mxu0 %v1395
        %v1417 = vpop.f32.mrf.mxu0
        %v1418 = vadd.f32 0.0, %v1417
        %v1419 = vpop.f32.mrf.mxu0
        %v1420 = vadd.f32 0.0, %v1419
        %1421 = vmatmul.bf16.gmra.mxu0 %v1398
        %v1422 = vpop.f32.mrf.mxu0
        %v1423 = vadd.f32 0.0, %v1422
        %v1424 = vpop.f32.mrf.mxu0
        %v1425 = vadd.f32 0.0, %v1424
        %1426 = vmatmul.bf16.gmra.mxu0 %v1401
        %v1427 = vpop.f32.mrf.mxu0
        %v1428 = vadd.f32 0.0, %v1427
        %v1429 = vpop.f32.mrf.mxu0
        %v1430 = vadd.f32 0.0, %v1429
        %1431 = vdwg.mxu0
        %v1432 = vadd.f32 %v1357, %v1413
        %v1433 = vadd.f32 %v1358, %v1415
        %v1434 = vadd.f32 %v1359, %v1418
        %v1435 = vadd.f32 %v1360, %v1420
        %v1436 = vadd.f32 %v1361, %v1423
        %v1437 = vadd.f32 %v1362, %v1425
        %v1438 = vadd.f32 %v1363, %v1428
        %v1439 = vadd.f32 %v1364, %v1430
        %v1448 = vunpack.c.l.b16 %v302
        %v1449 = vunpack.c.l.b16 %v303
        %v1450 = vunpack.c.l.b16 %v304
        %v1451 = vunpack.c.l.b16 %v305
        %v1452 = vunpack.c.l.b16 %v306
        %v1453 = vunpack.c.l.b16 %v307
        %v1454 = vunpack.c.l.b16 %v308
        %v1455 = vunpack.c.l.b16 %v309
        %v1456 = vpack.c.b16 %v1449, %v1448
        %v1457 = vpack.c.b16 %v1451, %v1450
        %v1458 = vpack.c.b16 %v1453, %v1452
        %v1459 = vpack.c.b16 %v1455, %v1454
        %1460 = vrot.lane.b32.xlu0 %v1314, 127
        %v1461 = vpop.permute.xlu0 %1460
        %v1464 = vsel %vm435, %v1456, 0
        %v1467 = vsel %vm435, %v1457, 0
        %v1470 = vsel %vm435, %v1458, 0
        %v1473 = vsel %vm435, %v1459, 0
        %1475 = vmatpush.bf16.msra.mxu0 0
        %1476 = vmatpush.bf16.msra.mxu0 0
        %1477 = vmatpush.bf16.msra.mxu0 0
        %1478 = vmatpush.bf16.msra.mxu0 0
        %1479 = vmatpush.bf16.msra.mxu0 0
        %1480 = vmatpush.bf16.msra.mxu0 0
        %1481 = vmatpush.bf16.msra.mxu0 0
        %1482 = vmatpush.bf16.msra.mxu0 %v1461
        %1483 = vmatmul.bf16.gmra.mxu0 %v1464
        %v1484 = vpop.f32.mrf.mxu0
        %v1485 = vadd.f32 0.0, %v1484
        %v1486 = vpop.f32.mrf.mxu0
        %v1487 = vadd.f32 0.0, %v1486
        %1488 = vmatmul.bf16.gmra.mxu0 %v1467
        %v1489 = vpop.f32.mrf.mxu0
        %v1490 = vadd.f32 0.0, %v1489
        %v1491 = vpop.f32.mrf.mxu0
        %v1492 = vadd.f32 0.0, %v1491
        %1493 = vmatmul.bf16.gmra.mxu0 %v1470
        %v1494 = vpop.f32.mrf.mxu0
        %v1495 = vadd.f32 0.0, %v1494
        %v1496 = vpop.f32.mrf.mxu0
        %v1497 = vadd.f32 0.0, %v1496
        %1498 = vmatmul.bf16.gmra.mxu0 %v1473
        %v1499 = vpop.f32.mrf.mxu0
        %v1500 = vadd.f32 0.0, %v1499
        %v1501 = vpop.f32.mrf.mxu0
        %v1502 = vadd.f32 0.0, %v1501
        %1503 = vdwg.mxu0
        %v1504 = vadd.f32 %v1432, %v1485
        %v1505 = vadd.f32 %v1433, %v1487
        %v1506 = vadd.f32 %v1434, %v1490
        %v1507 = vadd.f32 %v1435, %v1492
        %v1508 = vadd.f32 %v1436, %v1495
        %v1509 = vadd.f32 %v1437, %v1497
        %v1510 = vadd.f32 %v1438, %v1500
        %v1511 = vadd.f32 %v1439, %v1502
        %v1520 = vunpack.c.l.b16 %v374
        %v1521 = vunpack.c.l.b16 %v375
        %v1522 = vunpack.c.l.b16 %v376
        %v1523 = vunpack.c.l.b16 %v377
        %v1524 = vunpack.c.l.b16 %v378
        %v1525 = vunpack.c.l.b16 %v379
        %v1526 = vunpack.c.l.b16 %v380
        %v1527 = vunpack.c.l.b16 %v381
        %v1528 = vpack.c.b16 %v1521, %v1520
        %v1529 = vpack.c.b16 %v1523, %v1522
        %v1530 = vpack.c.b16 %v1525, %v1524
        %v1531 = vpack.c.b16 %v1527, %v1526
        %1532 = vrot.lane.b32.xlu0 %v1389, 127
        %v1533 = vpop.permute.xlu0 %1532
        %v1536 = vsel %vm435, %v1528, 0
        %v1539 = vsel %vm435, %v1529, 0
        %v1542 = vsel %vm435, %v1530, 0
        %v1545 = vsel %vm435, %v1531, 0
        %1547 = vmatpush.bf16.msra.mxu0 0
        %1548 = vmatpush.bf16.msra.mxu0 0
        %1549 = vmatpush.bf16.msra.mxu0 0
        %1550 = vmatpush.bf16.msra.mxu0 0
        %1551 = vmatpush.bf16.msra.mxu0 0
        %1552 = vmatpush.bf16.msra.mxu0 0
        %1553 = vmatpush.bf16.msra.mxu0 0
        %1554 = vmatpush.bf16.msra.mxu0 %v1533
        %1555 = vmatmul.bf16.gmra.mxu0 %v1536
        %v1556 = vpop.f32.mrf.mxu0
        %v1557 = vadd.f32 0.0, %v1556
        %v1558 = vpop.f32.mrf.mxu0
        %v1559 = vadd.f32 0.0, %v1558
        %1560 = vmatmul.bf16.gmra.mxu0 %v1539
        %v1561 = vpop.f32.mrf.mxu0
        %v1562 = vadd.f32 0.0, %v1561
        %v1563 = vpop.f32.mrf.mxu0
        %v1564 = vadd.f32 0.0, %v1563
        %1565 = vmatmul.bf16.gmra.mxu0 %v1542
        %v1566 = vpop.f32.mrf.mxu0
        %v1567 = vadd.f32 0.0, %v1566
        %v1568 = vpop.f32.mrf.mxu0
        %v1569 = vadd.f32 0.0, %v1568
        %1570 = vmatmul.bf16.gmra.mxu0 %v1545
        %v1571 = vpop.f32.mrf.mxu0
        %v1572 = vadd.f32 0.0, %v1571
        %v1573 = vpop.f32.mrf.mxu0
        %v1574 = vadd.f32 0.0, %v1573
        %1575 = vdwg.mxu0
        %v1576 = vadd.f32 %v1504, %v1557
        %v1577 = vadd.f32 %v1505, %v1559
        %v1578 = vadd.f32 %v1506, %v1562
        %v1579 = vadd.f32 %v1507, %v1564
        %v1580 = vadd.f32 %v1508, %v1567
        %v1581 = vadd.f32 %v1509, %v1569
        %v1582 = vadd.f32 %v1510, %v1572
        %v1583 = vadd.f32 %v1511, %v1574
        %v1592 = vunpack.c.l.b16 %v310
        %v1593 = vunpack.c.l.b16 %v311
        %v1594 = vunpack.c.l.b16 %v312
        %v1595 = vunpack.c.l.b16 %v313
        %v1596 = vunpack.c.l.b16 %v314
        %v1597 = vunpack.c.l.b16 %v315
        %v1598 = vunpack.c.l.b16 %v316
        %v1599 = vunpack.c.l.b16 %v317
        %v1600 = vpack.c.b16 %v1593, %v1592
        %v1601 = vpack.c.b16 %v1595, %v1594
        %v1602 = vpack.c.b16 %v1597, %v1596
        %v1603 = vpack.c.b16 %v1599, %v1598
        %1604 = vrot.lane.b32.xlu0 %v1314, 126
        %v1605 = vpop.permute.xlu0 %1604
        %v1608 = vsel %vm435, %v1600, 0
        %v1611 = vsel %vm435, %v1601, 0
        %v1614 = vsel %vm435, %v1602, 0
        %v1617 = vsel %vm435, %v1603, 0
        %1619 = vmatpush.bf16.msra.mxu0 0
        %1620 = vmatpush.bf16.msra.mxu0 0
        %1621 = vmatpush.bf16.msra.mxu0 0
        %1622 = vmatpush.bf16.msra.mxu0 0
        %1623 = vmatpush.bf16.msra.mxu0 0
        %1624 = vmatpush.bf16.msra.mxu0 0
        %1625 = vmatpush.bf16.msra.mxu0 0
        %1626 = vmatpush.bf16.msra.mxu0 %v1605
        %1627 = vmatmul.bf16.gmra.mxu0 %v1608
        %v1628 = vpop.f32.mrf.mxu0
        %v1629 = vadd.f32 0.0, %v1628
        %v1630 = vpop.f32.mrf.mxu0
        %v1631 = vadd.f32 0.0, %v1630
        %1632 = vmatmul.bf16.gmra.mxu0 %v1611
        %v1633 = vpop.f32.mrf.mxu0
        %v1634 = vadd.f32 0.0, %v1633
        %v1635 = vpop.f32.mrf.mxu0
        %v1636 = vadd.f32 0.0, %v1635
        %1637 = vmatmul.bf16.gmra.mxu0 %v1614
        %v1638 = vpop.f32.mrf.mxu0
        %v1639 = vadd.f32 0.0, %v1638
        %v1640 = vpop.f32.mrf.mxu0
        %v1641 = vadd.f32 0.0, %v1640
        %1642 = vmatmul.bf16.gmra.mxu0 %v1617
        %v1643 = vpop.f32.mrf.mxu0
        %v1644 = vadd.f32 0.0, %v1643
        %v1645 = vpop.f32.mrf.mxu0
        %v1646 = vadd.f32 0.0, %v1645
        %1647 = vdwg.mxu0
        %v1648 = vadd.f32 %v1576, %v1629
        %v1649 = vadd.f32 %v1577, %v1631
        %v1650 = vadd.f32 %v1578, %v1634
        %v1651 = vadd.f32 %v1579, %v1636
        %v1652 = vadd.f32 %v1580, %v1639
        %v1653 = vadd.f32 %v1581, %v1641
        %v1654 = vadd.f32 %v1582, %v1644
        %v1655 = vadd.f32 %v1583, %v1646
        %v1664 = vunpack.c.l.b16 %v382
        %v1665 = vunpack.c.l.b16 %v383
        %v1666 = vunpack.c.l.b16 %v384
        %v1667 = vunpack.c.l.b16 %v385
        %v1668 = vunpack.c.l.b16 %v386
        %v1669 = vunpack.c.l.b16 %v387
        %v1670 = vunpack.c.l.b16 %v388
        %v1671 = vunpack.c.l.b16 %v389
        %v1672 = vpack.c.b16 %v1665, %v1664
        %v1673 = vpack.c.b16 %v1667, %v1666
        %v1674 = vpack.c.b16 %v1669, %v1668
        %v1675 = vpack.c.b16 %v1671, %v1670
        %1676 = vrot.lane.b32.xlu0 %v1389, 126
        %v1677 = vpop.permute.xlu0 %1676
        %v1680 = vsel %vm435, %v1672, 0
        %v1683 = vsel %vm435, %v1673, 0
        %v1686 = vsel %vm435, %v1674, 0
        %v1689 = vsel %vm435, %v1675, 0
        %1691 = vmatpush.bf16.msra.mxu0 0
        %1692 = vmatpush.bf16.msra.mxu0 0
        %1693 = vmatpush.bf16.msra.mxu0 0
        %1694 = vmatpush.bf16.msra.mxu0 0
        %1695 = vmatpush.bf16.msra.mxu0 0
        %1696 = vmatpush.bf16.msra.mxu0 0
        %1697 = vmatpush.bf16.msra.mxu0 0
        %1698 = vmatpush.bf16.msra.mxu0 %v1677
        %1699 = vmatmul.bf16.gmra.mxu0 %v1680
        %v1700 = vpop.f32.mrf.mxu0
        %v1701 = vadd.f32 0.0, %v1700
        %v1702 = vpop.f32.mrf.mxu0
        %v1703 = vadd.f32 0.0, %v1702
        %1704 = vmatmul.bf16.gmra.mxu0 %v1683
        %v1705 = vpop.f32.mrf.mxu0
        %v1706 = vadd.f32 0.0, %v1705
        %v1707 = vpop.f32.mrf.mxu0
        %v1708 = vadd.f32 0.0, %v1707
        %1709 = vmatmul.bf16.gmra.mxu0 %v1686
        %v1710 = vpop.f32.mrf.mxu0
        %v1711 = vadd.f32 0.0, %v1710
        %v1712 = vpop.f32.mrf.mxu0
        %v1713 = vadd.f32 0.0, %v1712
        %1714 = vmatmul.bf16.gmra.mxu0 %v1689
        %v1715 = vpop.f32.mrf.mxu0
        %v1716 = vadd.f32 0.0, %v1715
        %v1717 = vpop.f32.mrf.mxu0
        %v1718 = vadd.f32 0.0, %v1717
        %1719 = vdwg.mxu0
        %v1720 = vadd.f32 %v1648, %v1701
        %v1721 = vadd.f32 %v1649, %v1703
        %v1722 = vadd.f32 %v1650, %v1706
        %v1723 = vadd.f32 %v1651, %v1708
        %v1724 = vadd.f32 %v1652, %v1711
        %v1725 = vadd.f32 %v1653, %v1713
        %v1726 = vadd.f32 %v1654, %v1716
        %v1727 = vadd.f32 %v1655, %v1718
        %v1728 = vmax.f32 %v1720, %v1724
        %v1729 = vmax.f32 %v1721, %v1725
        %v1730 = vmax.f32 %v1722, %v1726
        %v1731 = vmax.f32 %v1723, %v1727
        %1733 = vset.pattern.permute.xlu0 0
        %1734 = vperm.xlu0 %1733, %v390
        %v1735 = vpop.permute.xlu0 %1734
        %1738 = vset.pattern.permute.xlu0 0
        %1739 = vperm.xlu0 %1738, %v391
        %v1740 = vpop.permute.xlu0 %1739
        %1743 = vset.pattern.permute.xlu0 0
        %1744 = vperm.xlu0 %1743, %v392
        %v1745 = vpop.permute.xlu0 %1744
        %1748 = vset.pattern.permute.xlu0 0
        %1749 = vperm.xlu0 %1748, %v393
        %v1750 = vpop.permute.xlu0 %1749
        %v1752 = vadd.f32 %v1728, %v1735
        %v1753 = vadd.f32 %v1729, %v1740
        %v1754 = vadd.f32 %v1730, %v1745
        %v1755 = vadd.f32 %v1731, %v1750
        %v1756 = vmax.f32 %v1752, 0.0
        %v1757 = vmax.f32 %v1753, 0.0
        %v1758 = vmax.f32 %v1754, 0.0
        %v1759 = vmax.f32 %v1755, 0.0
        %v1760 = vpack.c.bf16 %v1756, %v1756
        %v1761 = vpack.c.bf16 %v1757, %v1757
        %v1762 = vpack.c.bf16 %v1758, %v1758
        %v1763 = vpack.c.bf16 %v1759, %v1759
        %s1764 = smul.u32 %s395, 4
        %s1765 = smul.addr %s1764, 4
        %s1766 = scalar_lea.vmem %s244, %s1765
        %vm1767 = vcmask 125952
        %1768 = vst.msk [vmem:[%s1766] sm:$0xf] %vm1767, %v1760
        %1769 = vst.msk [vmem:[%s1766 + $0x4] sm:$0xf] %vm1767, %v1761
        %1770 = vst.msk [vmem:[%s1766 + $0x8] sm:$0xf] %vm1767, %v1762
        %1771 = vst.msk [vmem:[%s1766 + $0xc] sm:$0xf] %vm1767, %v1763
      $region45: #{eeg_cnn_forward.4} parent=39 // loop_footer
        %s399 = sadd.s32 1, %s395
      $region46: #{eeg_cnn_forward.4} parent=39 // loop_footer_branch
        %394 = sbr.rel target = $region42
      $region47: #{eeg_cnn_forward.4} parent=39 // loop_exit
        _
      %p1772 = scmp.lt.s32.totalorder %s16, 1
      %s1773 = scalar_select %p1772, %s16, 1
      %s1774 = smul.addr %s1773, 92
      %s1775 = smul.addr %s1774, 4
      %s1776 = scalar_lea.vmem %s5, %s1775
      // Predicated region
      $region48: #{eeg_cnn_forward.4} parent=39 // pred_check
        %p1777 = pneg %p149
      $region49: #{eeg_cnn_forward.4} parent=39 // pred_check_branch
        %1779 = sbr.rel (%p1777) target = $region51
      $region50: #{eeg_cnn_forward.4} parent=39 // pred_region
        _
      $region51: #{eeg_cnn_forward.4} parent=39 // pred_fallthru
        _
    $region40: #{eeg_cnn_forward.4} parent=5 // pred_fallthru
      _
    %p1780 = scmp.le.s32.totalorder 2, %s11
    // Predicated region
    $region52: #{eeg_cnn_forward.4} parent=5 // pred_check
      %p1781 = pneg %p1780
    $region53: #{eeg_cnn_forward.4} parent=5 // pred_check_branch
      %1783 = sbr.rel (%p1781) target = $region55
    $region54: #{eeg_cnn_forward.4} parent=5 // pred_region
      %s1784 = ssub.s32 %s11, 2
      // Predicated region
      $region56: #{eeg_cnn_forward.4} parent=54 // pred_check
        %p1785 = pneg %p155
      $region57: #{eeg_cnn_forward.4} parent=54 // pred_check_branch
        %1787 = sbr.rel (%p1785) target = $region59
      $region58: #{eeg_cnn_forward.4} parent=54 // pred_region
        %p1788 = scmp.lt.s32.totalorder %s17, 1
        %s1789 = scalar_select %p1788, %s17, 1
        %s1790 = smul.addr %s1789, 92
        %s1791 = smul.addr %s1790, 4
        %s1792 = scalar_lea.vmem %s5, %s1791
      $region59: #{eeg_cnn_forward.4} parent=54 // pred_fallthru
        _
    $region55: #{eeg_cnn_forward.4} parent=5 // pred_fallthru
      _
  $region6: #{eeg_cnn_forward.4} parent=0 // loop_footer
    %s15 = sadd.s32 1, %s11
  $region7: #{eeg_cnn_forward.4} parent=0 // loop_footer_branch
    %10 = sbr.rel target = $region3
  $region8: #{eeg_cnn_forward.4} parent=0 // loop_exit
    _

// kernel: eeg_cnn_forward.5
$region0: #{eeg_cnn_forward.5}
  #allocation0 [shape = 'u32[]', space=smem, size = 0x4, offset = 0x4, fixed_abs, tag = 'smem constant byte address 0x4 - core index']
  #allocation1 [shape = 'u32[72,128]{1,0:T(1,128)}', space=vmem, size = 0x9000, scoped, tag = 'internal scratch']
  #allocation2 [shape = 'f32[2,64]{1,0:T(2,128)}', space=vmem, size = 0x400, scoped, tag = 'scratch operand']
  %s0 = inlined_call_operand.vmem [shape: bf16[2,11776], index: 0, kind: input, shape index: {}]
  %s1 = inlined_call_operand.vmem [shape: bf16[11776,64], index: 1, kind: input, shape index: {}]
  %s2 = inlined_call_operand.vmem [shape: f32[1,64], index: 2, kind: input, shape index: {}]
  %s3 = inlined_call_operand.vmem [shape: f32[64,2], index: 3, kind: input, shape index: {}]
  %s4 = inlined_call_operand.vmem [shape: f32[1,2], index: 4, kind: input, shape index: {}]
  %s5 = inlined_call_operand.hbm [shape: f32[2,2], index: 5, kind: output, shape index: {}]
  %s6 = sld [smem:[#allocation0]]
  $region61: #{eeg_cnn_forward.5} parent=0
    _
  %s8 = ssub.s32 1, %s6
  %s9 = scalar_select 0, %s8, %s6
  $region1: #{eeg_cnn_forward.5} parent=0
    #allocation3 [shape = 'u8[1024]{0}', space=vmem, size = 0x400, scoped, tag = 'output window, operand 0, single buffered']
    #allocation4 [shape = 's32[2]{0}', space=sflag, size = 0x8, scoped, tag = 'scoped memory for eeg_cnn_forward.5']
    %10 = vsyncpa [#allocation4], 0
    loop: start=0, step=1, limit=25
    $region2: #{eeg_cnn_forward.5} parent=1 // loop_pre_header
      _
    $region3: #{eeg_cnn_forward.5} parent=1 // loop_header
      %s12 = sphi 0, %s16
      %p13 = scmp.ge.s32.totalorder %s12, 25
      %s22 = sphi 0, %s24
      %s25 = sphi 0, %s22
      %s26 = sphi 0, %s25
      %s42 = sphi 0, %s26
      %s48 = sphi 0, %s50
      %s51 = sphi 0, %s48
      %s52 = sphi 0, %s51
      %s68 = sphi 0, %s52
      %s72 = sphi 0, %s72
      %s74 = sphi 0, %s72
      %s75 = sphi 0, %s74
      %s89 = sphi 0, %s75
      %s93 = sphi 0, %s93
      %s95 = sphi 0, %s93
      %s96 = sphi 0, %s95
      %s110 = sphi 0, %s96
      %s114 = sphi 0, %s114
      %s116 = sphi 0, %s114
      %s117 = sphi 0, %s116
      %s131 = sphi 0, %s117
      %s135 = sphi 0, %s135
      %s137 = sphi 0, %s135
      %s138 = sphi 0, %s137
      %s152 = sphi 0, %s138
    $region4: #{eeg_cnn_forward.5} parent=1 // loop_header_branch
      %15 = sbr.rel (%p13) target = $region8
    $region5: #{eeg_cnn_forward.5} parent=1 // loop_body
      %s17 = ssub.s32 %s12, 1
      %s18 = ssub.s32 %s12, 2
      %s19 = sadd.s32 %s12, 1
      %s20 = ssub.s32 %s12, %s19
      %p21 = scmp.eq.s32.totalorder %s20, 0
      %s23 = sadd.s32 %s22, 1
      %s24 = scalar_select %p21, %s22, %s23
      %p27 = pneg %p21
      %p28 = scmp.eq.s32.totalorder %s12, 22
      %p29 = por %p27, %p28
      %p30 = scmp.ne.s32.totalorder %s22, %s25
      %p31 = scmp.eq.s32.totalorder %s12, 0
      %p32 = por %p30, %p31
      %p33 = scmp.ne.s32.totalorder %s22, %s25
      %p34 = scmp.eq.s32.totalorder %s17, 22
      %p35 = por %p33, %p34
      %p36 = scmp.ne.s32.totalorder %s25, %s26
      %p37 = scmp.eq.s32.totalorder %s17, 0
      %p38 = por %p36, %p37
      %p39 = scmp.ne.s32.totalorder %s25, %s26
      %p40 = scmp.eq.s32.totalorder %s18, 22
      %p41 = por %p39, %p40
      %p43 = scmp.ne.s32.totalorder %s26, %s42
      %p44 = scmp.eq.s32.totalorder %s18, 0
      %p45 = por %p43, %p44
      %s46 = ssub.s32 %s12, %s19
      %p47 = scmp.eq.s32.totalorder %s46, 0
      %s49 = sadd.s32 %s48, 1
      %s50 = scalar_select %p47, %s48, %s49
      %p53 = pneg %p47
      %p54 = scmp.eq.s32.totalorder %s12, 22
      %p55 = por %p53, %p54
      %p56 = scmp.ne.s32.totalorder %s48, %s51
      %p57 = scmp.eq.s32.totalorder %s12, 0
      %p58 = por %p56, %p57
      %p59 = scmp.ne.s32.totalorder %s48, %s51
      %p60 = scmp.eq.s32.totalorder %s17, 22
      %p61 = por %p59, %p60
      %p62 = scmp.ne.s32.totalorder %s51, %s52
      %p63 = scmp.eq.s32.totalorder %s17, 0
      %p64 = por %p62, %p63
      %p65 = scmp.ne.s32.totalorder %s51, %s52
      %p66 = scmp.eq.s32.totalorder %s18, 22
      %p67 = por %p65, %p66
      %p69 = scmp.ne.s32.totalorder %s52, %s68
      %p70 = scmp.eq.s32.totalorder %s18, 0
      %p71 = por %p69, %p70
      %s73 = sadd.s32 %s72, 1
      %p76 = scmp.eq.s32.totalorder %s12, 22
      %p77 = scmp.ne.s32.totalorder %s72, %s74
      %p78 = scmp.eq.s32.totalorder %s12, 0
      %p79 = por %p77, %p78
      %p80 = scmp.ne.s32.totalorder %s72, %s74
      %p81 = scmp.eq.s32.totalorder %s17, 22
      %p82 = por %p80, %p81
      %p83 = scmp.ne.s32.totalorder %s74, %s75
      %p84 = scmp.eq.s32.totalorder %s17, 0
      %p85 = por %p83, %p84
      %p86 = scmp.ne.s32.totalorder %s74, %s75
      %p87 = scmp.eq.s32.totalorder %s18, 22
      %p88 = por %p86, %p87
      %p90 = scmp.ne.s32.totalorder %s75, %s89
      %p91 = scmp.eq.s32.totalorder %s18, 0
      %p92 = por %p90, %p91
      %s94 = sadd.s32 %s93, 1
      %p97 = scmp.eq.s32.totalorder %s12, 22
      %p98 = scmp.ne.s32.totalorder %s93, %s95
      %p99 = scmp.eq.s32.totalorder %s12, 0
      %p100 = por %p98, %p99
      %p101 = scmp.ne.s32.totalorder %s93, %s95
      %p102 = scmp.eq.s32.totalorder %s17, 22
      %p103 = por %p101, %p102
      %p104 = scmp.ne.s32.totalorder %s95, %s96
      %p105 = scmp.eq.s32.totalorder %s17, 0
      %p106 = por %p104, %p105
      %p107 = scmp.ne.s32.totalorder %s95, %s96
      %p108 = scmp.eq.s32.totalorder %s18, 22
      %p109 = por %p107, %p108
      %p111 = scmp.ne.s32.totalorder %s96, %s110
      %p112 = scmp.eq.s32.totalorder %s18, 0
      %p113 = por %p111, %p112
      %s115 = sadd.s32 %s114, 1
      %p118 = scmp.eq.s32.totalorder %s12, 22
      %p119 = scmp.ne.s32.totalorder %s114, %s116
      %p120 = scmp.eq.s32.totalorder %s12, 0
      %p121 = por %p119, %p120
      %p122 = scmp.ne.s32.totalorder %s114, %s116
      %p123 = scmp.eq.s32.totalorder %s17, 22
      %p124 = por %p122, %p123
      %p125 = scmp.ne.s32.totalorder %s116, %s117
      %p126 = scmp.eq.s32.totalorder %s17, 0
      %p127 = por %p125, %p126
      %p128 = scmp.ne.s32.totalorder %s116, %s117
      %p129 = scmp.eq.s32.totalorder %s18, 22
      %p130 = por %p128, %p129
      %p132 = scmp.ne.s32.totalorder %s117, %s131
      %p133 = scmp.eq.s32.totalorder %s18, 0
      %p134 = por %p132, %p133
      %s136 = sadd.s32 %s135, 1
      %p139 = scmp.eq.s32.totalorder %s12, 22
      %p140 = scmp.ne.s32.totalorder %s135, %s137
      %p141 = scmp.eq.s32.totalorder %s12, 0
      %p142 = por %p140, %p141
      %p143 = scmp.ne.s32.totalorder %s135, %s137
      %p144 = scmp.eq.s32.totalorder %s17, 22
      %p145 = por %p143, %p144
      %p146 = scmp.ne.s32.totalorder %s137, %s138
      %p147 = scmp.eq.s32.totalorder %s17, 0
      %p148 = por %p146, %p147
      %p149 = scmp.ne.s32.totalorder %s137, %s138
      %p150 = scmp.eq.s32.totalorder %s18, 22
      %p151 = por %p149, %p150
      %p153 = scmp.ne.s32.totalorder %s138, %s152
      %p154 = scmp.eq.s32.totalorder %s18, 0
      %p155 = por %p153, %p154
      %p156 = scmp.le.s32.totalorder 1, %s12
      %p157 = scmp.lt.s32.totalorder %s12, 24
      %p158 = pnand %p156, %p157
      %p159 = pneg %p158
      // Predicated region
      $region9: #{eeg_cnn_forward.5} parent=5 // pred_check
        _
      $region10: #{eeg_cnn_forward.5} parent=5 // pred_check_branch
        %161 = sbr.rel (%p158) target = $region12
      $region11: #{eeg_cnn_forward.5} parent=5 // pred_region
        %s162 = ssub.s32 %s12, 1
        // Predicated region
        $region13: #{eeg_cnn_forward.5} parent=11 // pred_check
          %p163 = pneg %p85
        $region14: #{eeg_cnn_forward.5} parent=11 // pred_check_branch
          %165 = sbr.rel (%p163) target = $region16
        $region15: #{eeg_cnn_forward.5} parent=11 // pred_region
          _
        $region16: #{eeg_cnn_forward.5} parent=11 // pred_fallthru
          _
        // Predicated region
        $region17: #{eeg_cnn_forward.5} parent=11 // pred_check
          %p166 = pneg %p106
        $region18: #{eeg_cnn_forward.5} parent=11 // pred_check_branch
          %168 = sbr.rel (%p166) target = $region20
        $region19: #{eeg_cnn_forward.5} parent=11 // pred_region
          _
        $region20: #{eeg_cnn_forward.5} parent=11 // pred_fallthru
          _
        // Predicated region
        $region21: #{eeg_cnn_forward.5} parent=11 // pred_check
          %p169 = pneg %p127
        $region22: #{eeg_cnn_forward.5} parent=11 // pred_check_branch
          %171 = sbr.rel (%p169) target = $region24
        $region23: #{eeg_cnn_forward.5} parent=11 // pred_region
          _
        $region24: #{eeg_cnn_forward.5} parent=11 // pred_fallthru
          _
      $region12: #{eeg_cnn_forward.5} parent=5 // pred_fallthru
        _
      %p172 = scmp.lt.s32.totalorder %s12, 23
      // Predicated region
      $region25: #{eeg_cnn_forward.5} parent=5 // pred_check
        %p173 = pneg %p172
      $region26: #{eeg_cnn_forward.5} parent=5 // pred_check_branch
        %175 = sbr.rel (%p173) target = $region28
      $region27: #{eeg_cnn_forward.5} parent=5 // pred_region
        // Predicated region
        $region29: #{eeg_cnn_forward.5} parent=27 // pred_check
          %p176 = pneg %p32
        $region30: #{eeg_cnn_forward.5} parent=27 // pred_check_branch
          %178 = sbr.rel (%p176) target = $region32
        $region31: #{eeg_cnn_forward.5} parent=27 // pred_region
          %s179 = smul.u32 4, %s12
          %p180 = scmp.lt.s32.totalorder %s179, 91
          %s181 = scalar_select %p180, %s179, 91
          %s182 = scalar_lea.vmem %s0, %s181
          %s183 = smul.u32 4, %s12
        $region32: #{eeg_cnn_forward.5} parent=27 // pred_fallthru
          _
        // Predicated region
        $region33: #{eeg_cnn_forward.5} parent=27 // pred_check
          %p184 = pneg %p58
        $region34: #{eeg_cnn_forward.5} parent=27 // pred_check_branch
          %186 = sbr.rel (%p184) target = $region36
        $region35: #{eeg_cnn_forward.5} parent=27 // pred_region
          %s187 = smul.u32 64, %s12
          %p188 = scmp.lt.s32.totalorder %s187, 1471
          %s189 = scalar_select %p188, %s187, 1471
          %s190 = smul.addr %s189, 4
          %s191 = scalar_lea.vmem %s1, %s190
          %s192 = smul.u32 64, %s12
        $region36: #{eeg_cnn_forward.5} parent=27 // pred_fallthru
          _
      $region28: #{eeg_cnn_forward.5} parent=5 // pred_fallthru
        _
      %p193 = scmp.le.s32.totalorder 1, %s12
      %p194 = scmp.lt.s32.totalorder %s12, 24
      %p195 = pnand %p193, %p194
      %p196 = pneg %p195
      // Predicated region
      $region37: #{eeg_cnn_forward.5} parent=5 // pred_check
        _
      $region38: #{eeg_cnn_forward.5} parent=5 // pred_check_branch
        %198 = sbr.rel (%p195) target = $region40
      $region39: #{eeg_cnn_forward.5} parent=5 // pred_region
        %s199 = ssub.s32 %s12, 1
        %s200 = smul.u32 4, %s17
        %p201 = scmp.lt.s32.totalorder %s200, 91
        %s202 = scalar_select %p201, %s200, 91
        %s203 = scalar_lea.vmem %s0, %s202
        %p204 = pneg %p38
        %p205 = pneg %p35
        %s206 = smul.u32 64, %s17
        %p207 = scmp.lt.s32.totalorder %s206, 1471
        %s208 = scalar_select %p207, %s206, 1471
        %s209 = smul.addr %s208, 4
        %s210 = scalar_lea.vmem %s1, %s209
        %p211 = pneg %p64
        %p212 = pneg %p61
        %p213 = pneg %p85
        %p214 = pneg %p82
        %p215 = pneg %p106
        %p216 = pneg %p103
        %p217 = pneg %p127
        %p218 = pneg %p124
        %p219 = pneg %p148
        %p220 = pneg %p145
        %s221 = smul.u32 4, %s17
        %p222 = scmp.lt.s32.totalorder %s221, 91
        %s223 = scalar_select %p222, %s221, 91
        %s224 = scalar_lea.vmem %s0, %s223
        %s225 = smul.u32 4, %s17
        %s226 = smul.u32 64, %s17
        %p227 = scmp.lt.s32.totalorder %s226, 1471
        %s228 = scalar_select %p227, %s226, 1471
        %s229 = smul.addr %s228, 4
        %s230 = scalar_lea.vmem %s1, %s229
        %s231 = smul.u32 64, %s17
        %p232 = scmp.eq.s32.totalorder %s17, 0
        // Predicated region
        $region41: #{eeg_cnn_forward.5} parent=39 // pred_check
          %p233 = pneg %p232
        $region42: #{eeg_cnn_forward.5} parent=39 // pred_check_branch
          %235 = sbr.rel (%p233) target = $region44
        $region43: #{eeg_cnn_forward.5} parent=39 // pred_region
          %vm236 = vcmask 517120
          %237 = vst.msk [vmem:[#allocation2] sm:$0x3] %vm236, 0.0
        $region44: #{eeg_cnn_forward.5} parent=39 // pred_fallthru
          _
        %v238 = vld [vmem:[#allocation2] sm:$0x3]
        %v239 = vld [vmem:[%s224] sm:$0xf]
        %v240 = vld [vmem:[%s230] sm:$0xf]
        %v241 = vld [vmem:[%s230 + $0x4] sm:$0xf]
        %v242 = vld [vmem:[%s230 + $0x8] sm:$0xf]
        %v243 = vld [vmem:[%s230 + $0xc] sm:$0xf]
        %v244 = vld [vmem:[%s230 + $0x10] sm:$0xf]
        %v245 = vld [vmem:[%s230 + $0x14] sm:$0xf]
        %v246 = vld [vmem:[%s230 + $0x18] sm:$0xf]
        %v247 = vld [vmem:[%s230 + $0x1c] sm:$0xf]
        %v248 = vld [vmem:[%s230 + $0x20] sm:$0xf]
        %v249 = vld [vmem:[%s230 + $0x24] sm:$0xf]
        %v250 = vld [vmem:[%s230 + $0x28] sm:$0xf]
        %v251 = vld [vmem:[%s230 + $0x2c] sm:$0xf]
        %v252 = vld [vmem:[%s230 + $0x30] sm:$0xf]
        %v253 = vld [vmem:[%s230 + $0x34] sm:$0xf]
        %v254 = vld [vmem:[%s230 + $0x38] sm:$0xf]
        %v255 = vld [vmem:[%s230 + $0x3c] sm:$0xf]
        %v256 = vld [vmem:[%s230 + $0x40] sm:$0xf]
        %v257 = vld [vmem:[%s230 + $0x44] sm:$0xf]
        %v258 = vld [vmem:[%s230 + $0x48] sm:$0xf]
        %v259 = vld [vmem:[%s230 + $0x4c] sm:$0xf]
        %v260 = vld [vmem:[%s230 + $0x50] sm:$0xf]
        %v261 = vld [vmem:[%s230 + $0x54] sm:$0xf]
        %v262 = vld [vmem:[%s230 + $0x58] sm:$0xf]
        %v263 = vld [vmem:[%s230 + $0x5c] sm:$0xf]
        %v264 = vld [vmem:[%s230 + $0x60] sm:$0xf]
        %v265 = vld [vmem:[%s230 + $0x64] sm:$0xf]
        %v266 = vld [vmem:[%s230 + $0x68] sm:$0xf]
        %v267 = vld [vmem:[%s230 + $0x6c] sm:$0xf]
        %v268 = vld [vmem:[%s230 + $0x70] sm:$0xf]
        %v269 = vld [vmem:[%s230 + $0x74] sm:$0xf]
        %v270 = vld [vmem:[%s230 + $0x78] sm:$0xf]
        %v271 = vld [vmem:[%s230 + $0x7c] sm:$0xf]
        %v272 = vld [vmem:[%s230 + $0x80] sm:$0xf]
        %v273 = vld [vmem:[%s230 + $0x84] sm:$0xf]
        %v274 = vld [vmem:[%s230 + $0x88] sm:$0xf]
        %v275 = vld [vmem:[%s230 + $0x8c] sm:$0xf]
        %v276 = vld [vmem:[%s230 + $0x90] sm:$0xf]
        %v277 = vld [vmem:[%s230 + $0x94] sm:$0xf]
        %v278 = vld [vmem:[%s230 + $0x98] sm:$0xf]
        %v279 = vld [vmem:[%s230 + $0x9c] sm:$0xf]
        %v280 = vld [vmem:[%s230 + $0xa0] sm:$0xf]
        %v281 = vld [vmem:[%s230 + $0xa4] sm:$0xf]
        %v282 = vld [vmem:[%s230 + $0xa8] sm:$0xf]
        %v283 = vld [vmem:[%s230 + $0xac] sm:$0xf]
        %v284 = vld [vmem:[%s230 + $0xb0] sm:$0xf]
        %v285 = vld [vmem:[%s230 + $0xb4] sm:$0xf]
        %v286 = vld [vmem:[%s230 + $0xb8] sm:$0xf]
        %v287 = vld [vmem:[%s230 + $0xbc] sm:$0xf]
        %v288 = vld [vmem:[%s230 + $0xc0] sm:$0xf]
        %v289 = vld [vmem:[%s230 + $0xc4] sm:$0xf]
        %v290 = vld [vmem:[%s230 + $0xc8] sm:$0xf]
        %v291 = vld [vmem:[%s230 + $0xcc] sm:$0xf]
        %v292 = vld [vmem:[%s230 + $0xd0] sm:$0xf]
        %v293 = vld [vmem:[%s230 + $0xd4] sm:$0xf]
        %v294 = vld [vmem:[%s230 + $0xd8] sm:$0xf]
        %v295 = vld [vmem:[%s230 + $0xdc] sm:$0xf]
        %v296 = vld [vmem:[%s230 + $0xe0] sm:$0xf]
        %v297 = vld [vmem:[%s230 + $0xe4] sm:$0xf]
        %v298 = vld [vmem:[%s230 + $0xe8] sm:$0xf]
        %v299 = vld [vmem:[%s230 + $0xec] sm:$0xf]
        %v300 = vld [vmem:[%s230 + $0xf0] sm:$0xf]
        %v301 = vld [vmem:[%s230 + $0xf4] sm:$0xf]
        %v302 = vld [vmem:[%s230 + $0xf8] sm:$0xf]
        %v303 = vld [vmem:[%s230 + $0xfc] sm:$0xf]
        %305 = vst [vmem:[#allocation1] ss:$9 sm:$0xff] %v239
        %v306 = vld [vmem:[#allocation1] sm:$0xff]
        %v307 = vld [vmem:[#allocation1 + $0x9] sm:$0xff]
        %v308 = vld [vmem:[#allocation1 + $0x12] sm:$0xff]
        %v309 = vld [vmem:[#allocation1 + $0x1b] sm:$0xff]
        %v378 = vunpack.c.l.b16 %v240
        %v379 = vunpack.c.l.b16 %v241
        %v380 = vunpack.c.l.b16 %v242
        %v381 = vunpack.c.l.b16 %v243
        %v382 = vunpack.c.l.b16 %v244
        %v383 = vunpack.c.l.b16 %v245
        %v384 = vunpack.c.l.b16 %v246
        %v385 = vunpack.c.l.b16 %v247
        %v386 = vunpack.c.l.b16 %v248
        %v387 = vunpack.c.l.b16 %v249
        %v388 = vunpack.c.l.b16 %v250
        %v389 = vunpack.c.l.b16 %v251
        %v390 = vunpack.c.l.b16 %v252
        %v391 = vunpack.c.l.b16 %v253
        %v392 = vunpack.c.l.b16 %v254
        %v393 = vunpack.c.l.b16 %v255
        %v394 = vunpack.c.l.b16 %v256
        %v395 = vunpack.c.l.b16 %v257
        %v396 = vunpack.c.l.b16 %v258
        %v397 = vunpack.c.l.b16 %v259
        %v398 = vunpack.c.l.b16 %v260
        %v399 = vunpack.c.l.b16 %v261
        %v400 = vunpack.c.l.b16 %v262
        %v401 = vunpack.c.l.b16 %v263
        %v402 = vunpack.c.l.b16 %v264
        %v403 = vunpack.c.l.b16 %v265
        %v404 = vunpack.c.l.b16 %v266
        %v405 = vunpack.c.l.b16 %v267
        %v406 = vunpack.c.l.b16 %v268
        %v407 = vunpack.c.l.b16 %v269
        %v408 = vunpack.c.l.b16 %v270
        %v409 = vunpack.c.l.b16 %v271
        %v410 = vunpack.c.l.b16 %v272
        %v411 = vunpack.c.l.b16 %v273
        %v412 = vunpack.c.l.b16 %v274
        %v413 = vunpack.c.l.b16 %v275
        %v414 = vunpack.c.l.b16 %v276
        %v415 = vunpack.c.l.b16 %v277
        %v416 = vunpack.c.l.b16 %v278
        %v417 = vunpack.c.l.b16 %v279
        %v418 = vunpack.c.l.b16 %v280
        %v419 = vunpack.c.l.b16 %v281
        %v420 = vunpack.c.l.b16 %v282
        %v421 = vunpack.c.l.b16 %v283
        %v422 = vunpack.c.l.b16 %v284
        %v423 = vunpack.c.l.b16 %v285
        %v424 = vunpack.c.l.b16 %v286
        %v425 = vunpack.c.l.b16 %v287
        %v426 = vunpack.c.l.b16 %v288
        %v427 = vunpack.c.l.b16 %v289
        %v428 = vunpack.c.l.b16 %v290
        %v429 = vunpack.c.l.b16 %v291
        %v430 = vunpack.c.l.b16 %v292
        %v431 = vunpack.c.l.b16 %v293
        %v432 = vunpack.c.l.b16 %v294
        %v433 = vunpack.c.l.b16 %v295
        %v434 = vunpack.c.l.b16 %v296
        %v435 = vunpack.c.l.b16 %v297
        %v436 = vunpack.c.l.b16 %v298
        %v437 = vunpack.c.l.b16 %v299
        %v438 = vunpack.c.l.b16 %v300
        %v439 = vunpack.c.l.b16 %v301
        %v440 = vunpack.c.l.b16 %v302
        %v441 = vunpack.c.l.b16 %v303
        %v442 = vpack.c.b16 %v379, %v378
        %v443 = vpack.c.b16 %v381, %v380
        %v444 = vpack.c.b16 %v383, %v382
        %v445 = vpack.c.b16 %v385, %v384
        %v446 = vpack.c.b16 %v387, %v386
        %v447 = vpack.c.b16 %v389, %v388
        %v448 = vpack.c.b16 %v391, %v390
        %v449 = vpack.c.b16 %v393, %v392
        %v450 = vpack.c.b16 %v395, %v394
        %v451 = vpack.c.b16 %v397, %v396
        %v452 = vpack.c.b16 %v399, %v398
        %v453 = vpack.c.b16 %v401, %v400
        %v454 = vpack.c.b16 %v403, %v402
        %v455 = vpack.c.b16 %v405, %v404
        %v456 = vpack.c.b16 %v407, %v406
        %v457 = vpack.c.b16 %v409, %v408
        %v458 = vpack.c.b16 %v411, %v410
        %v459 = vpack.c.b16 %v413, %v412
        %v460 = vpack.c.b16 %v415, %v414
        %v461 = vpack.c.b16 %v417, %v416
        %v462 = vpack.c.b16 %v419, %v418
        %v463 = vpack.c.b16 %v421, %v420
        %v464 = vpack.c.b16 %v423, %v422
        %v465 = vpack.c.b16 %v425, %v424
        %v466 = vpack.c.b16 %v427, %v426
        %v467 = vpack.c.b16 %v429, %v428
        %v468 = vpack.c.b16 %v431, %v430
        %v469 = vpack.c.b16 %v433, %v432
        %v470 = vpack.c.b16 %v435, %v434
        %v471 = vpack.c.b16 %v437, %v436
        %v472 = vpack.c.b16 %v439, %v438
        %v473 = vpack.c.b16 %v441, %v440
        %506 = vmatpush.bf16.msra.mxu0 %v449
        %507 = vmatpush.bf16.msra.mxu0 %v448
        %508 = vmatpush.bf16.msra.mxu0 %v447
        %509 = vmatpush.bf16.msra.mxu0 %v446
        %510 = vmatpush.bf16.msra.mxu0 %v445
        %511 = vmatpush.bf16.msra.mxu0 %v444
        %512 = vmatpush.bf16.msra.mxu0 %v443
        %513 = vmatpush.bf16.msra.mxu0 %v442
        %514 = vmatmul.bf16.gmra.mxu0 %v306
        %v515 = vpop.f32.mrf.mxu0
        %v516 = vadd.f32 0.0, %v515
        %v517 = vpop.f32.mrf.mxu0
        %518 = vdwg.mxu0
        %519 = vmatpush.bf16.msra.mxu0 %v457
        %520 = vmatpush.bf16.msra.mxu0 %v456
        %521 = vmatpush.bf16.msra.mxu0 %v455
        %522 = vmatpush.bf16.msra.mxu0 %v454
        %523 = vmatpush.bf16.msra.mxu0 %v453
        %524 = vmatpush.bf16.msra.mxu0 %v452
        %525 = vmatpush.bf16.msra.mxu0 %v451
        %526 = vmatpush.bf16.msra.mxu0 %v450
        %527 = vmatmul.bf16.gmra.mxu0 %v307
        %v528 = vpop.f32.mrf.mxu0
        %v529 = vadd.f32 %v516, %v528
        %v530 = vpop.f32.mrf.mxu0
        %531 = vdwg.mxu0
        %532 = vmatpush.bf16.msra.mxu0 %v465
        %533 = vmatpush.bf16.msra.mxu0 %v464
        %534 = vmatpush.bf16.msra.mxu0 %v463
        %535 = vmatpush.bf16.msra.mxu0 %v462
        %536 = vmatpush.bf16.msra.mxu0 %v461
        %537 = vmatpush.bf16.msra.mxu0 %v460
        %538 = vmatpush.bf16.msra.mxu0 %v459
        %539 = vmatpush.bf16.msra.mxu0 %v458
        %540 = vmatmul.bf16.gmra.mxu0 %v308
        %v541 = vpop.f32.mrf.mxu0
        %v542 = vadd.f32 %v529, %v541
        %v543 = vpop.f32.mrf.mxu0
        %544 = vdwg.mxu0
        %545 = vmatpush.bf16.msra.mxu0 %v473
        %546 = vmatpush.bf16.msra.mxu0 %v472
        %547 = vmatpush.bf16.msra.mxu0 %v471
        %548 = vmatpush.bf16.msra.mxu0 %v470
        %549 = vmatpush.bf16.msra.mxu0 %v469
        %550 = vmatpush.bf16.msra.mxu0 %v468
        %551 = vmatpush.bf16.msra.mxu0 %v467
        %552 = vmatpush.bf16.msra.mxu0 %v466
        %553 = vmatmul.bf16.gmra.mxu0 %v309
        %v554 = vpop.f32.mrf.mxu0
        %v555 = vadd.f32 %v542, %v554
        %v556 = vpop.f32.mrf.mxu0
        %557 = vdwg.mxu0
        %v558 = vadd.f32 %v238, %v555
        %vm559 = vcmask 517120
        %560 = vst.msk [vmem:[#allocation2] sm:$0x3] %vm559, %v558
        %p561 = scmp.eq.s32.totalorder %s17, 22
        // Predicated region
        $region45: #{eeg_cnn_forward.5} parent=39 // pred_check
          %p562 = pneg %p561
        $region46: #{eeg_cnn_forward.5} parent=39 // pred_check_branch
          %564 = sbr.rel (%p562) target = $region48
        $region47: #{eeg_cnn_forward.5} parent=39 // pred_region
          %v565 = vld [vmem:[#allocation2] sm:$0x3]
          %v566 = vld [vmem:[%s2] sm:$0x1]
          %v568 = vperm.slane %v566, 0
          %v570 = vadd.f32 %v565, %v568
          %v571 = vmax.f32 %v570, 0.0
          %v572 = vld [vmem:[%s3] sm:$0xff]
          %v573 = vld [vmem:[%s3 + $0x8] sm:$0xff]
          %v574 = vld [vmem:[%s3 + $0x10] sm:$0xff]
          %v575 = vld [vmem:[%s3 + $0x18] sm:$0xff]
          %v576 = vld [vmem:[%s3 + $0x20] sm:$0xff]
          %v577 = vld [vmem:[%s3 + $0x28] sm:$0xff]
          %v578 = vld [vmem:[%s3 + $0x30] sm:$0xff]
          %v579 = vld [vmem:[%s3 + $0x38] sm:$0xff]
          %v580 = vld [vmem:[%s4] sm:$0x1]
          %v582 = vperm.slane %v580, 0
          %vm584 = vcmask 523264
          %v586 = vsel %vm584, %v571, 0
          %588 = vmatpush.msra.mxu0 0.0
          %589 = vmatpush.msra.mxu0 0.0
          %590 = vmatpush.msra.mxu0 0.0
          %591 = vmatpush.msra.mxu0 0.0
          %592 = vmatpush.msra.mxu0 0.0
          %593 = vmatpush.msra.mxu0 0.0
          %594 = vmatpush.msra.mxu0 0.0
          %595 = vmatpush.msra.mxu0 0.0
          %596 = vmatpush.msra.mxu0 %v579
          %597 = vmatpush.msra.mxu0 %v578
          %598 = vmatpush.msra.mxu0 %v577
          %599 = vmatpush.msra.mxu0 %v576
          %600 = vmatpush.msra.mxu0 %v575
          %601 = vmatpush.msra.mxu0 %v574
          %602 = vmatpush.msra.mxu0 %v573
          %603 = vmatpush.msra.mxu0 %v572
          %604 = vmatmul.f32.gmra.mxu0 %v586
          %v605 = vpop.f32.mrf.mxu0
          %v606 = vadd.f32 %v582, %v605
          %607 = vdwg.mxu0
          %vm608 = vcmask 9216
          %609 = vst.msk [vmem:[#allocation3] sm:$0x3] %vm608, %v606
        $region48: #{eeg_cnn_forward.5} parent=39 // pred_fallthru
          _
        // Predicated region
        $region49: #{eeg_cnn_forward.5} parent=39 // pred_check
          %p610 = pneg %p145
        $region50: #{eeg_cnn_forward.5} parent=39 // pred_check_branch
          %612 = sbr.rel (%p610) target = $region52
        $region51: #{eeg_cnn_forward.5} parent=39 // pred_region
          %614 = vsyncadd [#allocation4], 0
          %s616 = sshll.u32 [#allocation3], 4
          %s617 = int_to_ptr.vmem [resolvable:$true] %s616
          %s618 = sshll.u32 %s5, 4
          %s619 = int_to_ptr.hbm [resolvable:$true] %s618
          %621 = dma.vmem_to_hbm [thread:$0]  %s617, 32, %s619, [#allocation4]
        $region52: #{eeg_cnn_forward.5} parent=39 // pred_fallthru
          _
        // Predicated region
        $region53: #{eeg_cnn_forward.5} parent=39 // pred_check
          %p622 = pneg %p145
        $region54: #{eeg_cnn_forward.5} parent=39 // pred_check_branch
          %624 = sbr.rel (%p622) target = $region56
        $region55: #{eeg_cnn_forward.5} parent=39 // pred_region
          %626 = dma.done [#allocation4], 32
        $region56: #{eeg_cnn_forward.5} parent=39 // pred_fallthru
          _
      $region40: #{eeg_cnn_forward.5} parent=5 // pred_fallthru
        _
      %p627 = scmp.le.s32.totalorder 2, %s12
      // Predicated region
      $region57: #{eeg_cnn_forward.5} parent=5 // pred_check
        %p628 = pneg %p627
      $region58: #{eeg_cnn_forward.5} parent=5 // pred_check_branch
        %630 = sbr.rel (%p628) target = $region60
      $region59: #{eeg_cnn_forward.5} parent=5 // pred_region
        %s631 = ssub.s32 %s12, 2
      $region60: #{eeg_cnn_forward.5} parent=5 // pred_fallthru
        _
    $region6: #{eeg_cnn_forward.5} parent=1 // loop_footer
      %s16 = sadd.s32 1, %s12
    $region7: #{eeg_cnn_forward.5} parent=1 // loop_footer_branch
      %11 = sbr.rel target = $region3
    $region8: #{eeg_cnn_forward.5} parent=1 // loop_exit
      _
    %632 = vsyncpa [#allocation4], 1
    %s633 = scalar_lea.sflag [#allocation4], 1
    %634 = vsyncpa %s633, 1

</llo_original>
